<compile_context>
chip_gen: v7x
topology: tpu7x:2x2x1
jax: 0.10.0
libtpu: 0.0.40
codegen_flags: <defaults>
</compile_context>

<pallas_src>
import jax
import jax.numpy as jnp
from jax import lax
from jax.experimental import pallas as pl
from jax.experimental.pallas import tpu as pltpu

EPS = 1e-5                      # nn.BatchNorm2d default eps
LANE = 128
TM_MAX = 1024                   # max GEMM rows per tile (f32 out tile @128 lanes = 512 KiB)
VMEM_LIMIT = 32 * 1024 * 1024   # safe on v5e/v6e (128 MiB) and v7x (64 MiB physical)


# ---------------------------------------------------------------------------
# small helpers
# ---------------------------------------------------------------------------
def _round_up(x, m):
    return ((x + m - 1) // m) * m


def _choose_tile(M, tmax=TM_MAX):
    """Largest multiple-of-8 divisor of M <= tmax, preferring >=2 tiles (v7x megacore)."""
    best_any = 0
    best_two = 0
    t = 8
    lim = min(tmax, M)
    while t <= lim:
        if M % t == 0:
            best_any = t
            if M // t >= 2:
                best_two = t
        t += 8
    if best_two:
        return best_two
    if best_any:
        return best_any
    # TODO(synk): pad M to a tile multiple (masked tail) for pathological row counts
    # with no multiple-of-8 divisor <= TM_MAX instead of emitting a full-M block.
    return M


def _choose_row_groups(R, Wo, tmax=TM_MAX):
    """Divisor tg of R with tg*Wo <= ~tmax, preferring >=2 groups (v7x megacore)."""
    cap = max(1, tmax // max(Wo, 1))
    best_any = 1
    best_two = 0
    for t in range(1, min(R, cap) + 1):
        if R % t == 0:
            best_any = t
            if R // t >= 2:
                best_two = t
    return best_two if best_two else best_any


def _cparams(*sem):
    return pltpu.CompilerParams(dimension_semantics=sem, vmem_limit_bytes=VMEM_LIMIT)


def _col_stats(z):
    """[sum(z); sum(z*z)] over rows as a (2, C) block, via ones-row matmuls (MXU)."""
    ones = jnp.ones((1, z.shape[0]), jnp.float32)
    s1 = jnp.dot(ones, z, preferred_element_type=jnp.float32)
    s2 = jnp.dot(ones, z * z, preferred_element_type=jnp.float32)
    return jnp.concatenate([s1, s2], axis=0)


# ---------------------------------------------------------------------------
# Pallas kernels
# ---------------------------------------------------------------------------
def _gemm_stats_kernel(x_ref, w_ref, z_ref, st_ref):
    # im2col conv as a single K-concatenated GEMM + per-tile BN statistics.
    z = jnp.dot(x_ref[...], w_ref[...], preferred_element_type=jnp.float32)
    z_ref[...] = z
    st_ref[...] = _col_stats(z)


def _norm_relu_gemm_stats_kernel(z_ref, s_ref, b_ref, w_ref, a_ref, z2_ref, st_ref):
    # BN(scale,bias)+ReLU of the previous conv (bf16 activation out), fused with the
    # next 1x1 conv GEMM + stats.
    a = jnp.maximum(z_ref[...] * s_ref[...] + b_ref[...], 0.0)
    a_bf = a.astype(jnp.bfloat16)
    a_ref[...] = a_bf
    z2 = jnp.dot(a_bf, w_ref[...], preferred_element_type=jnp.float32)
    z2_ref[...] = z2
    st_ref[...] = _col_stats(z2)


def _norm_relu_kernel(z_ref, s_ref, b_ref, o_ref):
    o_ref[...] = jnp.maximum(z_ref[...] * s_ref[...] + b_ref[...], 0.0).astype(o_ref.dtype)


def _pool_stem3_kernel(pool_ref, z2b_ref, s_ref, b_ref, w_ref, z3_ref, st_ref):
    # pool_ref: (tg, 2, W1, C1p) bf16 view of stem1's activation:
    #   axis1 = row-within-vertical-pair, axis2 = original column (pairs interleaved).
    p = pool_ref[...]
    tg, _, w1, c1p = p.shape
    wo = w1 // 2
    rowmax = jnp.maximum(p[:, 0], p[:, 1]).astype(jnp.float32)       # (tg, W1, C1p)
    q = rowmax.reshape(tg * wo, 2, c1p)                              # adjacent column pairs
    pooled = jnp.maximum(q[:, 0, :], q[:, 1, :])                     # (tg*Wo, C1p) branch1

    # stem2b BN+ReLU (branch2), never written to HBM.
    zb = z2b_ref[...]
    c2p = zb.shape[-1]
    branch2 = jnp.maximum(zb.reshape(tg * wo, c2p) * s_ref[...] + b_ref[...], 0.0)

    # stem3 1x1 conv over concat([branch1, branch2]) as ONE K = C1p+C2p GEMM
    # (fills the 256-deep MXU on v6e/v7x; concat tensor never hits HBM).
    lhs = jnp.concatenate(
        [pooled.astype(jnp.bfloat16), branch2.astype(jnp.bfloat16)], axis=-1)
    z3 = jnp.dot(lhs, w_ref[...], preferred_element_type=jnp.float32)
    z3_ref[...] = z3.reshape(tg, wo, z3.shape[-1])
    st_ref[...] = _col_stats(z3)


# ---------------------------------------------------------------------------
# pallas_call wrappers
# ---------------------------------------------------------------------------
def gemm_stats(x, w):
    """x [M, Kp] bf16, w [Kp, Cp] bf16 -> z [M, Cp] f32, stats [G, 2, Cp] f32."""
    M, Kp = x.shape
    Cp = w.shape[-1]
    tm = _choose_tile(M)
    G = M // tm
    return pl.pallas_call(
        _gemm_stats_kernel,
        out_shape=(jax.ShapeDtypeStruct((M, Cp), jnp.float32),
                   jax.ShapeDtypeStruct((G, 2, Cp), jnp.float32)),
        grid=(G,),
        in_specs=[
            pl.BlockSpec((tm, Kp), lambda m: (m, 0)),
            pl.BlockSpec((Kp, Cp), lambda m: (0, 0)),      # weight resident in VMEM
        ],
        out_specs=(
            pl.BlockSpec((tm, Cp), lambda m: (m, 0)),
            pl.BlockSpec((None, 2, Cp), lambda m: (m, 0, 0)),
        ),
        compiler_params=_cparams("parallel"),
    )(x, w)


def norm_relu_gemm_stats(z, scale, bias, w):
    """relu(z*scale+bias) (bf16 out) and its 1x1-conv GEMM + stats, in one call."""
    M, Cp = z.shape
    Cp2 = w.shape[-1]
    tm = _choose_tile(M)
    G = M // tm
    return pl.pallas_call(
        _norm_relu_gemm_stats_kernel,
        out_shape=(jax.ShapeDtypeStruct((M, Cp), jnp.bfloat16),   # out1 in bf16
                   jax.ShapeDtypeStruct((M, Cp2), jnp.float32),
                   jax.ShapeDtypeStruct((G, 2, Cp2), jnp.float32)),
        grid=(G,),
        in_specs=[
            pl.BlockSpec((tm, Cp), lambda m: (m, 0)),
            pl.BlockSpec((1, Cp), lambda m: (0, 0)),
            pl.BlockSpec((1, Cp), lambda m: (0, 0)),
            pl.BlockSpec((Cp, Cp2), lambda m: (0, 0)),
        ],
        out_specs=(
            pl.BlockSpec((tm, Cp), lambda m: (m, 0)),
            pl.BlockSpec((tm, Cp2), lambda m: (m, 0)),
            pl.BlockSpec((None, 2, Cp2), lambda m: (m, 0, 0)),
        ),
        compiler_params=_cparams("parallel"),
    )(z, scale, bias, w)


def norm_relu(z, scale, bias, out_dtype):
    M, Cp = z.shape
    tm = _choose_tile(M)
    return pl.pallas_call(
        _norm_relu_kernel,
        out_shape=jax.ShapeDtypeStruct((M, Cp), out_dtype),
        grid=(M // tm,),
        in_specs=[
            pl.BlockSpec((tm, Cp), lambda m: (m, 0)),
            pl.BlockSpec((1, Cp), lambda m: (0, 0)),
            pl.BlockSpec((1, Cp), lambda m: (0, 0)),
        ],
        out_specs=pl.BlockSpec((tm, Cp), lambda m: (m, 0)),
        compiler_params=_cparams("parallel"),
    )(z, scale, bias)


def pool_stem3_gemm_stats(out1_bf16, N, H1, W1, z2b, s2b, b2b, w3k):
    """maxpool(out1) + BN/ReLU(z2b) + K=256 stem3 GEMM + stats, fused in one kernel."""
    C1p = out1_bf16.shape[-1]
    C2p = z2b.shape[-1]
    C3p = w3k.shape[-1]
    Ho, Wo = -(-H1 // 2), -(-W1 // 2)
    img = out1_bf16.reshape(N, H1, W1, C1p)
    if (H1 % 2) or (W1 % 2):  # ceil-mode: pad with -inf (not hit for even spatial dims)
        img = jnp.pad(img, ((0, 0), (0, 2 * Ho - H1), (0, 2 * Wo - W1), (0, 0)),
                      constant_values=-jnp.inf)
    pool_src = img.reshape(N * Ho, 2, 2 * Wo, C1p)    # pure reshape; dense last two dims
    z2b_v = z2b.reshape(N * Ho, Wo, C2p)              # pure reshape
    R = N * Ho
    tg = _choose_row_groups(R, Wo)
    G = R // tg
    z3, st = pl.pallas_call(
        _pool_stem3_kernel,
        out_shape=(jax.ShapeDtypeStruct((R, Wo, C3p), jnp.float32),
                   jax.ShapeDtypeStruct((G, 2, C3p), jnp.float32)),
        grid=(G,),
        in_specs=[
            pl.BlockSpec((tg, 2, 2 * Wo, C1p), lambda g: (g, 0, 0, 0)),
            pl.BlockSpec((tg, Wo, C2p), lambda g: (g, 0, 0)),
            pl.BlockSpec((1, C2p), lambda g: (0, 0)),
            pl.BlockSpec((1, C2p), lambda g: (0, 0)),
            pl.BlockSpec((C1p + C2p, C3p), lambda g: (0, 0)),
        ],
        out_specs=(
            pl.BlockSpec((tg, Wo, C3p), lambda g: (g, 0, 0)),
            pl.BlockSpec((None, 2, C3p), lambda g: (g, 0, 0)),
        ),
        compiler_params=_cparams("parallel"),
    )(pool_src, z2b_v, s2b, b2b, w3k)
    return z3.reshape(R * Wo, C3p), st, Ho, Wo


# ---------------------------------------------------------------------------
# JAX glue: im2col, weight packing, BN-stat folding
# ---------------------------------------------------------------------------
def im2col_bf16(x_nhwc, c_true, ksize, stride, padding, k_pad):
    """Concatenate the kh*kw taps along K: [M = N*Ho*Wo, k_pad] bf16 (K zero-padded)."""
    x = x_nhwc[..., :c_true].astype(jnp.bfloat16)
    N, H, W, _ = x.shape
    Ho = (H + 2 * padding - ksize) // stride + 1
    Wo = (W + 2 * padding - ksize) // stride + 1
    xp = jnp.pad(x, ((0, 0), (padding, padding), (padding, padding), (0, 0)))
    cols = []
    for kh in range(ksize):
        for kw in range(ksize):
            cols.append(xp[:, kh:kh + stride * Ho:stride, kw:kw + stride * Wo:stride, :])
    taps = jnp.concatenate(cols, axis=-1).reshape(N * Ho * Wo, ksize * ksize * c_true)
    taps = jnp.pad(taps, ((0, 0), (0, k_pad - ksize * ksize * c_true)))
    return taps, Ho, Wo


def _pack_conv_im2col(w_oihw, k_pad, cout_pad):
    """[Cout, Cin, kh, kw] -> [k_pad, cout_pad] bf16 with K order = ((kh,kw) outer, cin)."""
    Cout, Cin, KH, KW = w_oihw.shape
    w = jnp.transpose(w_oihw, (2, 3, 1, 0)).reshape(KH * KW * Cin, Cout)
    w = jnp.pad(w, ((0, k_pad - KH * KW * Cin), (0, cout_pad - Cout)))
    return w.astype(jnp.bfloat16)


def _pack_mat(w_cin_cout, cin_pad, cout_pad):
    Cin, Cout = w_cin_cout.shape
    return jnp.pad(w_cin_cout, ((0, cin_pad - Cin), (0, cout_pad - Cout))).astype(jnp.bfloat16)


def _pad_vec(v, cpad):
    return jnp.pad(v, (0, cpad - v.shape[0]))


def fold_bn(stats, count, gamma_pad, beta_pad):
    """Per-tile [sum, sumsq] -> folded per-channel (scale, bias) for y = relu(z*s + b)."""
    s1 = jnp.sum(stats[:, 0, :], axis=0)
    s2 = jnp.sum(stats[:, 1, :], axis=0)
    mean = s1 / count
    var = jnp.maximum(s2 / count - mean * mean, 0.0)   # biased var (training-mode BN)
    scale = gamma_pad * lax.rsqrt(var + EPS)
    bias = beta_pad - mean * scale
    Cp = scale.shape[0]
    return scale.reshape(1, Cp), bias.reshape(1, Cp)


# ---------------------------------------------------------------------------
# _StemBlock forward (NCHW in / NCHW out, matching the PyTorch module)
# ---------------------------------------------------------------------------
def stem_block_forward(x_nchw, p):
    N, Cin, H, W = x_nchw.shape
    x = jnp.transpose(x_nchw, (0, 2, 3, 1))            # NCHW -> NHWC

    c_init = p["stem1_w"].shape[0]                     # num_init_features
    c_stem = p["stem2a_w"].shape[0]                    # num_stem_features
    C1p = _round_up(c_init, LANE)
    Csp = _round_up(c_stem, LANE)
    C2p = _round_up(c_init, LANE)
    C3p = _round_up(c_init, LANE)
    K1p = _round_up(9 * Cin, LANE)
    K2p = _round_up(9 * c_stem, LANE)

    # --- stem1: 3x3/s2 conv as one im2col GEMM + stats (kernel 1) -----------
    taps1, H1, W1 = im2col_bf16(x, Cin, 3, 2, 1, K1p)
    w1 = _pack_conv_im2col(p["stem1_w"], K1p, C1p)
    z1, st1 = gemm_stats(taps1, w1)
    s1, b1 = fold_bn(st1, N * H1 * W1,
                     _pad_vec(p["stem1_g"], C1p), _pad_vec(p["stem1_b"], C1p))

    # --- stem1 BN+ReLU (bf16 out1) fused with stem2a 1x1 GEMM + stats (kernel 2)
    w2a = _pack_mat(p["stem2a_w"][:, :, 0, 0].T, C1p, Csp)
    out1, z2a, st2a = norm_relu_gemm_stats(z1, s1, b1, w2a)
    s2a, b2a = fold_bn(st2a, N * H1 * W1,
                       _pad_vec(p["stem2a_g"], Csp), _pad_vec(p["stem2a_b"], Csp))

    # --- stem2a BN+ReLU -> branch2a in bf16 (kernel 3) -----------------------
    branch2a = norm_relu(z2a, s2a, b2a, jnp.bfloat16)

    # --- stem2b: 3x3/s2 conv over the true c_stem channels only (kernel 4) ---
    taps2b, H2, W2 = im2col_bf16(branch2a.reshape(N, H1, W1, Csp), c_stem, 3, 2, 1, K2p)
    w2b = _pack_conv_im2col(p["stem2b_w"], K2p, C2p)
    z2b, st2b = gemm_stats(taps2b, w2b)
    s2b, b2b = fold_bn(st2b, N * H2 * W2,
                       _pad_vec(p["stem2b_g"], C2p), _pad_vec(p["stem2b_b"], C2p))

    # --- pool(out1) + stem2b BN/ReLU + concat-free stem3 K=256 GEMM + stats (kernel 5)
    w3 = p["stem3_w"][:, :, 0, 0]                      # [c_init, 2*c_init]
    w3a = _pack_mat(w3[:, :c_init].T, C1p, C3p)        # branch1 (pooled) half
    w3b = _pack_mat(w3[:, c_init:].T, C2p, C3p)        # branch2 half
    w3k = jnp.concatenate([w3a, w3b], axis=0)          # [C1p + C2p, C3p]
    z3, st3, Ho, Wo = pool_stem3_gemm_stats(out1, N, H1, W1, z2b, s2b, b2b, w3k)
    s3, b3 = fold_bn(st3, N * Ho * Wo,
                     _pad_vec(p["stem3_g"], C3p), _pad_vec(p["stem3_b"], C3p))

    # --- stem3 BN+ReLU (kernel 6) --------------------------------------------
    y3 = norm_relu(z3, s3, b3, jnp.float32)
    y = y3[:, :c_init].reshape(N, Ho, Wo, c_init)
    return jnp.transpose(y, (0, 3, 1, 2))              # NHWC -> NCHW


# ---------------------------------------------------------------------------
# parameter init (deterministic)
# ---------------------------------------------------------------------------
def init_params(key, num_input_channels, num_init_features):
    num_stem = num_init_features // 2
    ks = jax.random.split(key, 12)

    def conv_w(k, cout, cin, ksz):
        fan_in = cin * ksz * ksz
        return jax.random.normal(k, (cout, cin, ksz, ksz), jnp.float32) * (2.0 / fan_in) ** 0.5

    def bn(kg, kb, c):
        g = 1.0 + 0.1 * jax.random.normal(kg, (c,), jnp.float32)
        b = 0.1 * jax.random.normal(kb, (c,), jnp.float32)
        return g, b

    p = {}
    p["stem1_w"] = conv_w(ks[0], num_init_features, num_input_channels, 3)
    p["stem1_g"], p["stem1_b"] = bn(ks[1], ks[2], num_init_features)
    p["stem2a_w"] = conv_w(ks[3], num_stem, num_init_features, 1)
    p["stem2a_g"], p["stem2a_b"] = bn(ks[4], ks[5], num_stem)
    p["stem2b_w"] = conv_w(ks[6], num_init_features, num_stem, 3)
    p["stem2b_g"], p["stem2b_b"] = bn(ks[7], ks[8], num_init_features)
    p["stem3_w"] = conv_w(ks[9], num_init_features, 2 * num_init_features, 1)
    p["stem3_g"], p["stem3_b"] = bn(ks[10], ks[11], num_init_features)
    return p


if __name__ == "__main__":
    key = jax.random.PRNGKey(0)
    k_x, k_p = jax.random.split(key)

    num_input_channels = 4
    num_init_features = 32

    x = jax.random.normal(k_x, (2, num_input_channels, 16, 16), jnp.float32)
    params = init_params(k_p, num_input_channels, num_init_features)

    fwd = jax.jit(stem_block_forward)
    out = jax.block_until_ready(fwd(x, params))

    assert out.shape == (2, num_init_features, 4, 4), out.shape
    assert bool(jnp.all(jnp.isfinite(out)))
    print("KERNEL_OK")
</pallas_src>

<mosaic_0001>
module attributes {stable_mosaic.version = 11 : i64} {
  func.func @_gemm_stats_kernel(%arg0: i32, %arg1: memref<64x128xbf16, #tpu.memory_space<vmem>>, %arg2: memref<128x128xbf16, #tpu.memory_space<vmem>>, %arg3: memref<64x128xf32, #tpu.memory_space<vmem>>, %arg4: memref<1x2x128xf32, #tpu.memory_space<vmem>>) attributes {dimension_semantics = [#tpu.dimension_semantics<parallel>], iteration_bounds = array<i64: 2>, scalar_prefetch = 0 : i64, scratch_operands = 0 : i64, tpu.core_type = #tpu.core_type<tc>, window_params = [{transform_indices = @transform_0, window_bounds = array<i64: 64, 128>}, {pipeline_mode = #tpu.pipeline_mode<synchronous>, transform_indices = @transform_1, window_bounds = array<i64: 128, 128>}, {transform_indices = @transform_2, window_bounds = array<i64: 64, 128>}, {transform_indices = @transform_3, window_bounds = array<i64: 1, 2, 128>}]} {
    %c0 = arith.constant 0 : index
    %c0_0 = arith.constant 0 : index
    %0 = vector.load %arg1[%c0, %c0_0] : memref<64x128xbf16, #tpu.memory_space<vmem>>, vector<64x128xbf16>
    %c0_1 = arith.constant 0 : index
    %c0_2 = arith.constant 0 : index
    %1 = vector.load %arg2[%c0_1, %c0_2] : memref<128x128xbf16, #tpu.memory_space<vmem>>, vector<128x128xbf16>
    %cst = arith.constant dense<0.000000e+00> : vector<64x128xf32>
    %2 = tpu.matmul %0, %1, %cst {dimension_numbers = #tpu.dot_dimension_numbers<[1], [0], [0], [1], [0, 0, 1, 1], [], []>} : vector<64x128xbf16>, vector<128x128xbf16>, vector<64x128xf32> -> vector<64x128xf32>
    %c0_3 = arith.constant 0 : index
    %c0_4 = arith.constant 0 : index
    %3 = vector.load %arg3[%c0_3, %c0_4] : memref<64x128xf32, #tpu.memory_space<vmem>>, vector<64x128xf32>
    tpu.vector_store %arg3[%c0_3, %c0_4], %2 {strides = array<i32>} : memref<64x128xf32, #tpu.memory_space<vmem>>, vector<64x128xf32>,
    %cst_5 = arith.constant 1.000000e+00 : f32
    %4 = vector.broadcast %cst_5 : f32 to vector<1x64xf32>
    %cst_6 = arith.constant dense<0.000000e+00> : vector<1x128xf32>
    %5 = tpu.matmul %4, %2, %cst_6 {dimension_numbers = #tpu.dot_dimension_numbers<[1], [0], [0], [1], [0, 0, 1, 1], [], []>} : vector<1x64xf32>, vector<64x128xf32>, vector<1x128xf32> -> vector<1x128xf32>
    %6 = arith.mulf %2, %2 : vector<64x128xf32>
    %cst_7 = arith.constant dense<0.000000e+00> : vector<1x128xf32>
    %7 = tpu.matmul %4, %6, %cst_7 {dimension_numbers = #tpu.dot_dimension_numbers<[1], [0], [0], [1], [0, 0, 1, 1], [], []>} : vector<1x64xf32>, vector<64x128xf32>, vector<1x128xf32> -> vector<1x128xf32>
    %8 = tpu.concatenate %5, %7 in 0 : vector<1x128xf32>, vector<1x128xf32> -> vector<2x128xf32>
    %c0_8 = arith.constant 0 : index
    %c0_9 = arith.constant 0 : index
    %c0_10 = arith.constant 0 : index
    %9 = vector.load %arg4[%c0_8, %c0_9, %c0_10] : memref<1x2x128xf32, #tpu.memory_space<vmem>>, vector<1x2x128xf32>
    %10 = vector.shape_cast %9 : vector<1x2x128xf32> to vector<2x128xf32>
    %11 = vector.shape_cast %8 : vector<2x128xf32> to vector<1x2x128xf32>
    tpu.vector_store %arg4[%c0_8, %c0_9, %c0_10], %11 {strides = array<i32>} : memref<1x2x128xf32, #tpu.memory_space<vmem>>, vector<1x2x128xf32>,
    return
  }
  func.func @transform_0(%arg0: i32) -> (i32, i32) {
    %c0_i32 = arith.constant 0 : i32
    %c0_i32_0 = arith.constant 0 : i32
    return %arg0, %c0_i32 : i32, i32
  }
  func.func @transform_1(%arg0: i32) -> (i32, i32) {
    %c0_i32 = arith.constant 0 : i32
    %c0_i32_0 = arith.constant 0 : i32
    %c0_i32_1 = arith.constant 0 : i32
    return %c0_i32, %c0_i32_0 : i32, i32
  }
  func.func @transform_2(%arg0: i32) -> (i32, i32) {
    %c0_i32 = arith.constant 0 : i32
    %c0_i32_0 = arith.constant 0 : i32
    return %arg0, %c0_i32 : i32, i32
  }
  func.func @transform_3(%arg0: i32) -> (i32, i32, i32) {
    %c0_i32 = arith.constant 0 : i32
    %c0_i32_0 = arith.constant 0 : i32
    %c0_i32_1 = arith.constant 0 : i32
    return %arg0, %c0_i32, %c0_i32_0 : i32, i32, i32
  }
}

module attributes {stable_mosaic.version = 11 : i64} {
  func.func @_norm_relu_gemm_stats_kernel(%arg0: i32, %arg1: memref<64x128xf32, #tpu.memory_space<vmem>>, %arg2: memref<1x128xf32, #tpu.memory_space<vmem>>, %arg3: memref<1x128xf32, #tpu.memory_space<vmem>>, %arg4: memref<128x128xbf16, #tpu.memory_space<vmem>>, %arg5: memref<64x128xbf16, #tpu.memory_space<vmem>>, %arg6: memref<64x128xf32, #tpu.memory_space<vmem>>, %arg7: memref<1x2x128xf32, #tpu.memory_space<vmem>>) attributes {dimension_semantics = [#tpu.dimension_semantics<parallel>], iteration_bounds = array<i64: 2>, scalar_prefetch = 0 : i64, scratch_operands = 0 : i64, tpu.core_type = #tpu.core_type<tc>, window_params = [{transform_indices = @transform_0, window_bounds = array<i64: 64, 128>}, {pipeline_mode = #tpu.pipeline_mode<synchronous>, transform_indices = @transform_1, window_bounds = array<i64: 1, 128>}, {pipeline_mode = #tpu.pipeline_mode<synchronous>, transform_indices = @transform_2, window_bounds = array<i64: 1, 128>}, {pipeline_mode = #tpu.pipeline_mode<synchronous>, transform_indices = @transform_3, window_bounds = array<i64: 128, 128>}, {transform_indices = @transform_4, window_bounds = array<i64: 64, 128>}, {transform_indices = @transform_5, window_bounds = array<i64: 64, 128>}, {transform_indices = @transform_6, window_bounds = array<i64: 1, 2, 128>}]} {
    %c0 = arith.constant 0 : index
    %c0_0 = arith.constant 0 : index
    %0 = vector.load %arg1[%c0, %c0_0] : memref<64x128xf32, #tpu.memory_space<vmem>>, vector<64x128xf32>
    %c0_1 = arith.constant 0 : index
    %c0_2 = arith.constant 0 : index
    %1 = vector.load %arg2[%c0_1, %c0_2] : memref<1x128xf32, #tpu.memory_space<vmem>>, vector<1x128xf32>
    %2 = vector.broadcast %1 : vector<1x128xf32> to vector<64x128xf32>
    %3 = arith.mulf %0, %2 : vector<64x128xf32>
    %c0_3 = arith.constant 0 : index
    %c0_4 = arith.constant 0 : index
    %4 = vector.load %arg3[%c0_3, %c0_4] : memref<1x128xf32, #tpu.memory_space<vmem>>, vector<1x128xf32>
    %5 = vector.broadcast %4 : vector<1x128xf32> to vector<64x128xf32>
    %6 = arith.addf %3, %5 : vector<64x128xf32>
    %cst = arith.constant 0.000000e+00 : f32
    %7 = vector.broadcast %cst : f32 to vector<64x128xf32>
    %8 = arith.maximumf %6, %7 : vector<64x128xf32>
    %9 = arith.truncf %8 : vector<64x128xf32> to vector<64x128xbf16>
    %c0_5 = arith.constant 0 : index
    %c0_6 = arith.constant 0 : index
    %10 = vector.load %arg5[%c0_5, %c0_6] : memref<64x128xbf16, #tpu.memory_space<vmem>>, vector<64x128xbf16>
    tpu.vector_store %arg5[%c0_5, %c0_6], %9 {strides = array<i32>} : memref<64x128xbf16, #tpu.memory_space<vmem>>, vector<64x128xbf16>,
    %c0_7 = arith.constant 0 : index
    %c0_8 = arith.constant 0 : index
    %11 = vector.load %arg4[%c0_7, %c0_8] : memref<128x128xbf16, #tpu.memory_space<vmem>>, vector<128x128xbf16>
    %cst_9 = arith.constant dense<0.000000e+00> : vector<64x128xf32>
    %12 = tpu.matmul %9, %11, %cst_9 {dimension_numbers = #tpu.dot_dimension_numbers<[1], [0], [0], [1], [0, 0, 1, 1], [], []>} : vector<64x128xbf16>, vector<128x128xbf16>, vector<64x128xf32> -> vector<64x128xf32>
    %c0_10 = arith.constant 0 : index
    %c0_11 = arith.constant 0 : index
    %13 = vector.load %arg6[%c0_10, %c0_11] : memref<64x128xf32, #tpu.memory_space<vmem>>, vector<64x128xf32>
    tpu.vector_store %arg6[%c0_10, %c0_11], %12 {strides = array<i32>} : memref<64x128xf32, #tpu.memory_space<vmem>>, vector<64x128xf32>,
    %cst_12 = arith.constant 1.000000e+00 : f32
    %14 = vector.broadcast %cst_12 : f32 to vector<1x64xf32>
    %cst_13 = arith.constant dense<0.000000e+00> : vector<1x128xf32>
    %15 = tpu.matmul %14, %12, %cst_13 {dimension_numbers = #tpu.dot_dimension_numbers<[1], [0], [0], [1], [0, 0, 1, 1], [], []>} : vector<1x64xf32>, vector<64x128xf32>, vector<1x128xf32> -> vector<1x128xf32>
    %16 = arith.mulf %12, %12 : vector<64x128xf32>
    %cst_14 = arith.constant dense<0.000000e+00> : vector<1x128xf32>
    %17 = tpu.matmul %14, %16, %cst_14 {dimension_numbers = #tpu.dot_dimension_numbers<[1], [0], [0], [1], [0, 0, 1, 1], [], []>} : vector<1x64xf32>, vector<64x128xf32>, vector<1x128xf32> -> vector<1x128xf32>
    %18 = tpu.concatenate %15, %17 in 0 : vector<1x128xf32>, vector<1x128xf32> -> vector<2x128xf32>
    %c0_15 = arith.constant 0 : index
    %c0_16 = arith.constant 0 : index
    %c0_17 = arith.constant 0 : index
    %19 = vector.load %arg7[%c0_15, %c0_16, %c0_17] : memref<1x2x128xf32, #tpu.memory_space<vmem>>, vector<1x2x128xf32>
    %20 = vector.shape_cast %19 : vector<1x2x128xf32> to vector<2x128xf32>
    %21 = vector.shape_cast %18 : vector<2x128xf32> to vector<1x2x128xf32>
    tpu.vector_store %arg7[%c0_15, %c0_16, %c0_17], %21 {strides = array<i32>} : memref<1x2x128xf32, #tpu.memory_space<vmem>>, vector<1x2x128xf32>,
    return
  }
  func.func @transform_0(%arg0: i32) -> (i32, i32) {
    %c0_i32 = arith.constant 0 : i32
    %c0_i32_0 = arith.constant 0 : i32
    return %arg0, %c0_i32 : i32, i32
  }
  func.func @transform_1(%arg0: i32) -> (i32, i32) {
    %c0_i32 = arith.constant 0 : i32
    %c0_i32_0 = arith.constant 0 : i32
    %c0_i32_1 = arith.constant 0 : i32
    return %c0_i32, %c0_i32_0 : i32, i32
  }
  func.func @transform_2(%arg0: i32) -> (i32, i32) {
    %c0_i32 = arith.constant 0 : i32
    %c0_i32_0 = arith.constant 0 : i32
    %c0_i32_1 = arith.constant 0 : i32
    return %c0_i32, %c0_i32_0 : i32, i32
  }
  func.func @transform_3(%arg0: i32) -> (i32, i32) {
    %c0_i32 = arith.constant 0 : i32
    %c0_i32_0 = arith.constant 0 : i32
    %c0_i32_1 = arith.constant 0 : i32
    return %c0_i32, %c0_i32_0 : i32, i32
  }
  func.func @transform_4(%arg0: i32) -> (i32, i32) {
    %c0_i32 = arith.constant 0 : i32
    %c0_i32_0 = arith.constant 0 : i32
    return %arg0, %c0_i32 : i32, i32
  }
  func.func @transform_5(%arg0: i32) -> (i32, i32) {
    %c0_i32 = arith.constant 0 : i32
    %c0_i32_0 = arith.constant 0 : i32
    return %arg0, %c0_i32 : i32, i32
  }
  func.func @transform_6(%arg0: i32) -> (i32, i32, i32) {
    %c0_i32 = arith.constant 0 : i32
    %c0_i32_0 = arith.constant 0 : i32
    %c0_i32_1 = arith.constant 0 : i32
    return %arg0, %c0_i32, %c0_i32_0 : i32, i32, i32
  }
}

module attributes {stable_mosaic.version = 11 : i64} {
  func.func @_norm_relu_kernel(%arg0: i32, %arg1: memref<64x128xf32, #tpu.memory_space<vmem>>, %arg2: memref<1x128xf32, #tpu.memory_space<vmem>>, %arg3: memref<1x128xf32, #tpu.memory_space<vmem>>, %arg4: memref<64x128xbf16, #tpu.memory_space<vmem>>) attributes {dimension_semantics = [#tpu.dimension_semantics<parallel>], iteration_bounds = array<i64: 2>, scalar_prefetch = 0 : i64, scratch_operands = 0 : i64, tpu.core_type = #tpu.core_type<tc>, window_params = [{transform_indices = @transform_0, window_bounds = array<i64: 64, 128>}, {pipeline_mode = #tpu.pipeline_mode<synchronous>, transform_indices = @transform_1, window_bounds = array<i64: 1, 128>}, {pipeline_mode = #tpu.pipeline_mode<synchronous>, transform_indices = @transform_2, window_bounds = array<i64: 1, 128>}, {transform_indices = @transform_3, window_bounds = array<i64: 64, 128>}]} {
    %c0 = arith.constant 0 : index
    %c0_0 = arith.constant 0 : index
    %0 = vector.load %arg1[%c0, %c0_0] : memref<64x128xf32, #tpu.memory_space<vmem>>, vector<64x128xf32>
    %c0_1 = arith.constant 0 : index
    %c0_2 = arith.constant 0 : index
    %1 = vector.load %arg2[%c0_1, %c0_2] : memref<1x128xf32, #tpu.memory_space<vmem>>, vector<1x128xf32>
    %2 = vector.broadcast %1 : vector<1x128xf32> to vector<64x128xf32>
    %3 = arith.mulf %0, %2 : vector<64x128xf32>
    %c0_3 = arith.constant 0 : index
    %c0_4 = arith.constant 0 : index
    %4 = vector.load %arg3[%c0_3, %c0_4] : memref<1x128xf32, #tpu.memory_space<vmem>>, vector<1x128xf32>
    %5 = vector.broadcast %4 : vector<1x128xf32> to vector<64x128xf32>
    %6 = arith.addf %3, %5 : vector<64x128xf32>
    %cst = arith.constant 0.000000e+00 : f32
    %7 = vector.broadcast %cst : f32 to vector<64x128xf32>
    %8 = arith.maximumf %6, %7 : vector<64x128xf32>
    %9 = arith.truncf %8 : vector<64x128xf32> to vector<64x128xbf16>
    %c0_5 = arith.constant 0 : index
    %c0_6 = arith.constant 0 : index
    %10 = vector.load %arg4[%c0_5, %c0_6] : memref<64x128xbf16, #tpu.memory_space<vmem>>, vector<64x128xbf16>
    tpu.vector_store %arg4[%c0_5, %c0_6], %9 {strides = array<i32>} : memref<64x128xbf16, #tpu.memory_space<vmem>>, vector<64x128xbf16>,
    return
  }
  func.func @transform_0(%arg0: i32) -> (i32, i32) {
    %c0_i32 = arith.constant 0 : i32
    %c0_i32_0 = arith.constant 0 : i32
    return %arg0, %c0_i32 : i32, i32
  }
  func.func @transform_1(%arg0: i32) -> (i32, i32) {
    %c0_i32 = arith.constant 0 : i32
    %c0_i32_0 = arith.constant 0 : i32
    %c0_i32_1 = arith.constant 0 : i32
    return %c0_i32, %c0_i32_0 : i32, i32
  }
  func.func @transform_2(%arg0: i32) -> (i32, i32) {
    %c0_i32 = arith.constant 0 : i32
    %c0_i32_0 = arith.constant 0 : i32
    %c0_i32_1 = arith.constant 0 : i32
    return %c0_i32, %c0_i32_0 : i32, i32
  }
  func.func @transform_3(%arg0: i32) -> (i32, i32) {
    %c0_i32 = arith.constant 0 : i32
    %c0_i32_0 = arith.constant 0 : i32
    return %arg0, %c0_i32 : i32, i32
  }
}

module attributes {stable_mosaic.version = 11 : i64} {
  func.func @_gemm_stats_kernel(%arg0: i32, %arg1: memref<16x256xbf16, #tpu.memory_space<vmem>>, %arg2: memref<256x128xbf16, #tpu.memory_space<vmem>>, %arg3: memref<16x128xf32, #tpu.memory_space<vmem>>, %arg4: memref<1x2x128xf32, #tpu.memory_space<vmem>>) attributes {dimension_semantics = [#tpu.dimension_semantics<parallel>], iteration_bounds = array<i64: 2>, scalar_prefetch = 0 : i64, scratch_operands = 0 : i64, tpu.core_type = #tpu.core_type<tc>, window_params = [{transform_indices = @transform_0, window_bounds = array<i64: 16, 256>}, {pipeline_mode = #tpu.pipeline_mode<synchronous>, transform_indices = @transform_1, window_bounds = array<i64: 256, 128>}, {transform_indices = @transform_2, window_bounds = array<i64: 16, 128>}, {transform_indices = @transform_3, window_bounds = array<i64: 1, 2, 128>}]} {
    %c0 = arith.constant 0 : index
    %c0_0 = arith.constant 0 : index
    %0 = vector.load %arg1[%c0, %c0_0] : memref<16x256xbf16, #tpu.memory_space<vmem>>, vector<16x256xbf16>
    %c0_1 = arith.constant 0 : index
    %c0_2 = arith.constant 0 : index
    %1 = vector.load %arg2[%c0_1, %c0_2] : memref<256x128xbf16, #tpu.memory_space<vmem>>, vector<256x128xbf16>
    %cst = arith.constant dense<0.000000e+00> : vector<16x128xf32>
    %2 = tpu.matmul %0, %1, %cst {dimension_numbers = #tpu.dot_dimension_numbers<[1], [0], [0], [1], [0, 0, 1, 1], [], []>} : vector<16x256xbf16>, vector<256x128xbf16>, vector<16x128xf32> -> vector<16x128xf32>
    %c0_3 = arith.constant 0 : index
    %c0_4 = arith.constant 0 : index
    %3 = vector.load %arg3[%c0_3, %c0_4] : memref<16x128xf32, #tpu.memory_space<vmem>>, vector<16x128xf32>
    tpu.vector_store %arg3[%c0_3, %c0_4], %2 {strides = array<i32>} : memref<16x128xf32, #tpu.memory_space<vmem>>, vector<16x128xf32>,
    %cst_5 = arith.constant 1.000000e+00 : f32
    %4 = vector.broadcast %cst_5 : f32 to vector<1x16xf32>
    %cst_6 = arith.constant dense<0.000000e+00> : vector<1x128xf32>
    %5 = tpu.matmul %4, %2, %cst_6 {dimension_numbers = #tpu.dot_dimension_numbers<[1], [0], [0], [1], [0, 0, 1, 1], [], []>} : vector<1x16xf32>, vector<16x128xf32>, vector<1x128xf32> -> vector<1x128xf32>
    %6 = arith.mulf %2, %2 : vector<16x128xf32>
    %cst_7 = arith.constant dense<0.000000e+00> : vector<1x128xf32>
    %7 = tpu.matmul %4, %6, %cst_7 {dimension_numbers = #tpu.dot_dimension_numbers<[1], [0], [0], [1], [0, 0, 1, 1], [], []>} : vector<1x16xf32>, vector<16x128xf32>, vector<1x128xf32> -> vector<1x128xf32>
    %8 = tpu.concatenate %5, %7 in 0 : vector<1x128xf32>, vector<1x128xf32> -> vector<2x128xf32>
    %c0_8 = arith.constant 0 : index
    %c0_9 = arith.constant 0 : index
    %c0_10 = arith.constant 0 : index
    %9 = vector.load %arg4[%c0_8, %c0_9, %c0_10] : memref<1x2x128xf32, #tpu.memory_space<vmem>>, vector<1x2x128xf32>
    %10 = vector.shape_cast %9 : vector<1x2x128xf32> to vector<2x128xf32>
    %11 = vector.shape_cast %8 : vector<2x128xf32> to vector<1x2x128xf32>
    tpu.vector_store %arg4[%c0_8, %c0_9, %c0_10], %11 {strides = array<i32>} : memref<1x2x128xf32, #tpu.memory_space<vmem>>, vector<1x2x128xf32>,
    return
  }
  func.func @transform_0(%arg0: i32) -> (i32, i32) {
    %c0_i32 = arith.constant 0 : i32
    %c0_i32_0 = arith.constant 0 : i32
    return %arg0, %c0_i32 : i32, i32
  }
  func.func @transform_1(%arg0: i32) -> (i32, i32) {
    %c0_i32 = arith.constant 0 : i32
    %c0_i32_0 = arith.constant 0 : i32
    %c0_i32_1 = arith.constant 0 : i32
    return %c0_i32, %c0_i32_0 : i32, i32
  }
  func.func @transform_2(%arg0: i32) -> (i32, i32) {
    %c0_i32 = arith.constant 0 : i32
    %c0_i32_0 = arith.constant 0 : i32
    return %arg0, %c0_i32 : i32, i32
  }
  func.func @transform_3(%arg0: i32) -> (i32, i32, i32) {
    %c0_i32 = arith.constant 0 : i32
    %c0_i32_0 = arith.constant 0 : i32
    %c0_i32_1 = arith.constant 0 : i32
    return %arg0, %c0_i32, %c0_i32_0 : i32, i32, i32
  }
}

module attributes {stable_mosaic.version = 11 : i64} {
  func.func @_pool_stem3_kernel(%arg0: i32, %arg1: memref<4x2x8x128xbf16, #tpu.memory_space<vmem>>, %arg2: memref<4x4x128xf32, #tpu.memory_space<vmem>>, %arg3: memref<1x128xf32, #tpu.memory_space<vmem>>, %arg4: memref<1x128xf32, #tpu.memory_space<vmem>>, %arg5: memref<256x128xbf16, #tpu.memory_space<vmem>>, %arg6: memref<4x4x128xf32, #tpu.memory_space<vmem>>, %arg7: memref<1x2x128xf32, #tpu.memory_space<vmem>>) attributes {dimension_semantics = [#tpu.dimension_semantics<parallel>], iteration_bounds = array<i64: 2>, scalar_prefetch = 0 : i64, scratch_operands = 0 : i64, tpu.core_type = #tpu.core_type<tc>, window_params = [{transform_indices = @transform_0, window_bounds = array<i64: 4, 2, 8, 128>}, {transform_indices = @transform_1, window_bounds = array<i64: 4, 4, 128>}, {pipeline_mode = #tpu.pipeline_mode<synchronous>, transform_indices = @transform_2, window_bounds = array<i64: 1, 128>}, {pipeline_mode = #tpu.pipeline_mode<synchronous>, transform_indices = @transform_3, window_bounds = array<i64: 1, 128>}, {pipeline_mode = #tpu.pipeline_mode<synchronous>, transform_indices = @transform_4, window_bounds = array<i64: 256, 128>}, {transform_indices = @transform_5, window_bounds = array<i64: 4, 4, 128>}, {transform_indices = @transform_6, window_bounds = array<i64: 1, 2, 128>}]} {
    %c0 = arith.constant 0 : index
    %c0_0 = arith.constant 0 : index
    %c0_1 = arith.constant 0 : index
    %c0_2 = arith.constant 0 : index
    %0 = vector.load %arg1[%c0, %c0_0, %c0_1, %c0_2] : memref<4x2x8x128xbf16, #tpu.memory_space<vmem>>, vector<4x2x8x128xbf16>
    %1 = vector.extract_strided_slice %0 {offsets = [0, 0, 0, 0], sizes = [4, 1, 8, 128], strides = [1, 1, 1, 1]} : vector<4x2x8x128xbf16> to vector<4x1x8x128xbf16>
    %2 = vector.shape_cast %1 : vector<4x1x8x128xbf16> to vector<4x8x128xbf16>
    %3 = vector.extract_strided_slice %0 {offsets = [0, 1, 0, 0], sizes = [4, 1, 8, 128], strides = [1, 1, 1, 1]} : vector<4x2x8x128xbf16> to vector<4x1x8x128xbf16>
    %4 = vector.shape_cast %3 : vector<4x1x8x128xbf16> to vector<4x8x128xbf16>
    %5 = arith.maximumf %2, %4 : vector<4x8x128xbf16>
    %6 = arith.extf %5 : vector<4x8x128xbf16> to vector<4x8x128xf32>
    %7 = vector.shape_cast %6 : vector<4x8x128xf32> to vector<16x2x128xf32>
    %8 = vector.extract_strided_slice %7 {offsets = [0, 0, 0], sizes = [16, 1, 128], strides = [1, 1, 1]} : vector<16x2x128xf32> to vector<16x1x128xf32>
    %9 = vector.shape_cast %8 : vector<16x1x128xf32> to vector<16x128xf32>
    %10 = vector.extract_strided_slice %7 {offsets = [0, 1, 0], sizes = [16, 1, 128], strides = [1, 1, 1]} : vector<16x2x128xf32> to vector<16x1x128xf32>
    %11 = vector.shape_cast %10 : vector<16x1x128xf32> to vector<16x128xf32>
    %12 = arith.maximumf %9, %11 : vector<16x128xf32>
    %c0_3 = arith.constant 0 : index
    %c0_4 = arith.constant 0 : index
    %c0_5 = arith.constant 0 : index
    %13 = vector.load %arg2[%c0_3, %c0_4, %c0_5] : memref<4x4x128xf32, #tpu.memory_space<vmem>>, vector<4x4x128xf32>
    %14 = vector.shape_cast %13 : vector<4x4x128xf32> to vector<16x128xf32>
    %c0_6 = arith.constant 0 : index
    %c0_7 = arith.constant 0 : index
    %15 = vector.load %arg3[%c0_6, %c0_7] : memref<1x128xf32, #tpu.memory_space<vmem>>, vector<1x128xf32>
    %16 = vector.broadcast %15 : vector<1x128xf32> to vector<16x128xf32>
    %17 = arith.mulf %14, %16 : vector<16x128xf32>
    %c0_8 = arith.constant 0 : index
    %c0_9 = arith.constant 0 : index
    %18 = vector.load %arg4[%c0_8, %c0_9] : memref<1x128xf32, #tpu.memory_space<vmem>>, vector<1x128xf32>
    %19 = vector.broadcast %18 : vector<1x128xf32> to vector<16x128xf32>
    %20 = arith.addf %17, %19 : vector<16x128xf32>
    %cst = arith.constant 0.000000e+00 : f32
    %21 = vector.broadcast %cst : f32 to vector<16x128xf32>
    %22 = arith.maximumf %20, %21 : vector<16x128xf32>
    %23 = arith.truncf %12 : vector<16x128xf32> to vector<16x128xbf16>
    %24 = arith.truncf %22 : vector<16x128xf32> to vector<16x128xbf16>
    %25 = tpu.concatenate %23, %24 in 1 : vector<16x128xbf16>, vector<16x128xbf16> -> vector<16x256xbf16>
    %c0_10 = arith.constant 0 : index
    %c0_11 = arith.constant 0 : index
    %26 = vector.load %arg5[%c0_10, %c0_11] : memref<256x128xbf16, #tpu.memory_space<vmem>>, vector<256x128xbf16>
    %cst_12 = arith.constant dense<0.000000e+00> : vector<16x128xf32>
    %27 = tpu.matmul %25, %26, %cst_12 {dimension_numbers = #tpu.dot_dimension_numbers<[1], [0], [0], [1], [0, 0, 1, 1], [], []>} : vector<16x256xbf16>, vector<256x128xbf16>, vector<16x128xf32> -> vector<16x128xf32>
    %28 = vector.shape_cast %27 : vector<16x128xf32> to vector<4x4x128xf32>
    %c0_13 = arith.constant 0 : index
    %c0_14 = arith.constant 0 : index
    %c0_15 = arith.constant 0 : index
    %29 = vector.load %arg6[%c0_13, %c0_14, %c0_15] : memref<4x4x128xf32, #tpu.memory_space<vmem>>, vector<4x4x128xf32>
    tpu.vector_store %arg6[%c0_13, %c0_14, %c0_15], %28 {strides = array<i32>} : memref<4x4x128xf32, #tpu.memory_space<vmem>>, vector<4x4x128xf32>,
    %cst_16 = arith.constant 1.000000e+00 : f32
    %30 = vector.broadcast %cst_16 : f32 to vector<1x16xf32>
    %cst_17 = arith.constant dense<0.000000e+00> : vector<1x128xf32>
    %31 = tpu.matmul %30, %27, %cst_17 {dimension_numbers = #tpu.dot_dimension_numbers<[1], [0], [0], [1], [0, 0, 1, 1], [], []>} : vector<1x16xf32>, vector<16x128xf32>, vector<1x128xf32> -> vector<1x128xf32>
    %32 = arith.mulf %27, %27 : vector<16x128xf32>
    %cst_18 = arith.constant dense<0.000000e+00> : vector<1x128xf32>
    %33 = tpu.matmul %30, %32, %cst_18 {dimension_numbers = #tpu.dot_dimension_numbers<[1], [0], [0], [1], [0, 0, 1, 1], [], []>} : vector<1x16xf32>, vector<16x128xf32>, vector<1x128xf32> -> vector<1x128xf32>
    %34 = tpu.concatenate %31, %33 in 0 : vector<1x128xf32>, vector<1x128xf32> -> vector<2x128xf32>
    %c0_19 = arith.constant 0 : index
    %c0_20 = arith.constant 0 : index
    %c0_21 = arith.constant 0 : index
    %35 = vector.load %arg7[%c0_19, %c0_20, %c0_21] : memref<1x2x128xf32, #tpu.memory_space<vmem>>, vector<1x2x128xf32>
    %36 = vector.shape_cast %35 : vector<1x2x128xf32> to vector<2x128xf32>
    %37 = vector.shape_cast %34 : vector<2x128xf32> to vector<1x2x128xf32>
    tpu.vector_store %arg7[%c0_19, %c0_20, %c0_21], %37 {strides = array<i32>} : memref<1x2x128xf32, #tpu.memory_space<vmem>>, vector<1x2x128xf32>,
    return
  }
  func.func @transform_0(%arg0: i32) -> (i32, i32, i32, i32) {
    %c0_i32 = arith.constant 0 : i32
    %c0_i32_0 = arith.constant 0 : i32
    %c0_i32_1 = arith.constant 0 : i32
    %c0_i32_2 = arith.constant 0 : i32
    return %arg0, %c0_i32, %c0_i32_0, %c0_i32_1 : i32, i32, i32, i32
  }
  func.func @transform_1(%arg0: i32) -> (i32, i32, i32) {
    %c0_i32 = arith.constant 0 : i32
    %c0_i32_0 = arith.constant 0 : i32
    %c0_i32_1 = arith.constant 0 : i32
    return %arg0, %c0_i32, %c0_i32_0 : i32, i32, i32
  }
  func.func @transform_2(%arg0: i32) -> (i32, i32) {
    %c0_i32 = arith.constant 0 : i32
    %c0_i32_0 = arith.constant 0 : i32
    %c0_i32_1 = arith.constant 0 : i32
    return %c0_i32, %c0_i32_0 : i32, i32
  }
  func.func @transform_3(%arg0: i32) -> (i32, i32) {
    %c0_i32 = arith.constant 0 : i32
    %c0_i32_0 = arith.constant 0 : i32
    %c0_i32_1 = arith.constant 0 : i32
    return %c0_i32, %c0_i32_0 : i32, i32
  }
  func.func @transform_4(%arg0: i32) -> (i32, i32) {
    %c0_i32 = arith.constant 0 : i32
    %c0_i32_0 = arith.constant 0 : i32
    %c0_i32_1 = arith.constant 0 : i32
    return %c0_i32, %c0_i32_0 : i32, i32
  }
  func.func @transform_5(%arg0: i32) -> (i32, i32, i32) {
    %c0_i32 = arith.constant 0 : i32
    %c0_i32_0 = arith.constant 0 : i32
    %c0_i32_1 = arith.constant 0 : i32
    return %arg0, %c0_i32, %c0_i32_0 : i32, i32, i32
  }
  func.func @transform_6(%arg0: i32) -> (i32, i32, i32) {
    %c0_i32 = arith.constant 0 : i32
    %c0_i32_0 = arith.constant 0 : i32
    %c0_i32_1 = arith.constant 0 : i32
    return %arg0, %c0_i32, %c0_i32_0 : i32, i32, i32
  }
}

module attributes {stable_mosaic.version = 11 : i64} {
  func.func @_norm_relu_kernel(%arg0: i32, %arg1: memref<16x128xf32, #tpu.memory_space<vmem>>, %arg2: memref<1x128xf32, #tpu.memory_space<vmem>>, %arg3: memref<1x128xf32, #tpu.memory_space<vmem>>, %arg4: memref<16x128xf32, #tpu.memory_space<vmem>>) attributes {dimension_semantics = [#tpu.dimension_semantics<parallel>], iteration_bounds = array<i64: 2>, scalar_prefetch = 0 : i64, scratch_operands = 0 : i64, tpu.core_type = #tpu.core_type<tc>, window_params = [{transform_indices = @transform_0, window_bounds = array<i64: 16, 128>}, {pipeline_mode = #tpu.pipeline_mode<synchronous>, transform_indices = @transform_1, window_bounds = array<i64: 1, 128>}, {pipeline_mode = #tpu.pipeline_mode<synchronous>, transform_indices = @transform_2, window_bounds = array<i64: 1, 128>}, {transform_indices = @transform_3, window_bounds = array<i64: 16, 128>}]} {
    %c0 = arith.constant 0 : index
    %c0_0 = arith.constant 0 : index
    %0 = vector.load %arg1[%c0, %c0_0] : memref<16x128xf32, #tpu.memory_space<vmem>>, vector<16x128xf32>
    %c0_1 = arith.constant 0 : index
    %c0_2 = arith.constant 0 : index
    %1 = vector.load %arg2[%c0_1, %c0_2] : memref<1x128xf32, #tpu.memory_space<vmem>>, vector<1x128xf32>
    %2 = vector.broadcast %1 : vector<1x128xf32> to vector<16x128xf32>
    %3 = arith.mulf %0, %2 : vector<16x128xf32>
    %c0_3 = arith.constant 0 : index
    %c0_4 = arith.constant 0 : index
    %4 = vector.load %arg3[%c0_3, %c0_4] : memref<1x128xf32, #tpu.memory_space<vmem>>, vector<1x128xf32>
    %5 = vector.broadcast %4 : vector<1x128xf32> to vector<16x128xf32>
    %6 = arith.addf %3, %5 : vector<16x128xf32>
    %cst = arith.constant 0.000000e+00 : f32
    %7 = vector.broadcast %cst : f32 to vector<16x128xf32>
    %8 = arith.maximumf %6, %7 : vector<16x128xf32>
    %c0_5 = arith.constant 0 : index
    %c0_6 = arith.constant 0 : index
    %9 = vector.load %arg4[%c0_5, %c0_6] : memref<16x128xf32, #tpu.memory_space<vmem>>, vector<16x128xf32>
    tpu.vector_store %arg4[%c0_5, %c0_6], %8 {strides = array<i32>} : memref<16x128xf32, #tpu.memory_space<vmem>>, vector<16x128xf32>,
    return
  }
  func.func @transform_0(%arg0: i32) -> (i32, i32) {
    %c0_i32 = arith.constant 0 : i32
    %c0_i32_0 = arith.constant 0 : i32
    return %arg0, %c0_i32 : i32, i32
  }
  func.func @transform_1(%arg0: i32) -> (i32, i32) {
    %c0_i32 = arith.constant 0 : i32
    %c0_i32_0 = arith.constant 0 : i32
    %c0_i32_1 = arith.constant 0 : i32
    return %c0_i32, %c0_i32_0 : i32, i32
  }
  func.func @transform_2(%arg0: i32) -> (i32, i32) {
    %c0_i32 = arith.constant 0 : i32
    %c0_i32_0 = arith.constant 0 : i32
    %c0_i32_1 = arith.constant 0 : i32
    return %c0_i32, %c0_i32_0 : i32, i32
  }
  func.func @transform_3(%arg0: i32) -> (i32, i32) {
    %c0_i32 = arith.constant 0 : i32
    %c0_i32_0 = arith.constant 0 : i32
    return %arg0, %c0_i32 : i32, i32
  }
}

</mosaic_0001>

<llo_original>
// kernel: stem_block_forward.8
$region0: #{stem_block_forward.8}
  #allocation0 [shape = 'u32[]', space=smem, size = 0x4, offset = 0x4, fixed_abs, tag = 'smem constant byte address 0x4 - core index']
  #allocation1 [shape = 'u32[144,128]{1,0:T(1,128)}', space=vmem, size = 0x12000, scoped, tag = 'internal scratch']
  %s0 = inlined_call_operand.vmem [shape: f32[128,128], index: 0, kind: input, shape index: {}]
  %s1 = inlined_call_operand.vmem [shape: f32[1,128], index: 1, kind: input, shape index: {}]
  %s2 = inlined_call_operand.vmem [shape: f32[1,128], index: 2, kind: input, shape index: {}]
  %s3 = inlined_call_operand.vmem [shape: bf16[128,128], index: 3, kind: output, shape index: {}]
  %s4 = sld [smem:[#allocation0]]
  $region45: #{stem_block_forward.8} parent=0
    _
  %s6 = ssub.s32 1, %s4
  %s7 = scalar_select 0, %s6, %s4
  loop: start=0, step=1, limit=4
  $region2: #{stem_block_forward.8} parent=0 // loop_pre_header
    _
  $region3: #{stem_block_forward.8} parent=0 // loop_header
    %s9 = sphi 0, %s13
    %p10 = scmp.ge.s32.totalorder %s9, 4
    %s19 = sphi 0, %s21
    %s22 = sphi 0, %s19
    %s23 = sphi 0, %s22
    %s39 = sphi 0, %s23
    %s43 = sphi 0, %s43
    %s45 = sphi 0, %s43
    %s46 = sphi 0, %s45
    %s60 = sphi 0, %s46
    %s64 = sphi 0, %s64
    %s66 = sphi 0, %s64
    %s67 = sphi 0, %s66
    %s81 = sphi 0, %s67
    %s87 = sphi 0, %s89
    %s90 = sphi 0, %s87
    %s91 = sphi 0, %s90
    %s107 = sphi 0, %s91
  $region4: #{stem_block_forward.8} parent=0 // loop_header_branch
    %12 = sbr.rel (%p10) target = $region8
  $region5: #{stem_block_forward.8} parent=0 // loop_body
    %s14 = ssub.s32 %s9, 1
    %s15 = ssub.s32 %s9, 2
    %s16 = sadd.s32 %s9, 1
    %s17 = ssub.s32 %s9, %s16
    %p18 = scmp.eq.s32.totalorder %s17, 0
    %s20 = sadd.s32 %s19, 1
    %s21 = scalar_select %p18, %s19, %s20
    %p24 = pneg %p18
    %p25 = scmp.eq.s32.totalorder %s9, 1
    %p26 = por %p24, %p25
    %p27 = scmp.ne.s32.totalorder %s19, %s22
    %p28 = scmp.eq.s32.totalorder %s9, 0
    %p29 = por %p27, %p28
    %p30 = scmp.ne.s32.totalorder %s19, %s22
    %p31 = scmp.eq.s32.totalorder %s14, 1
    %p32 = por %p30, %p31
    %p33 = scmp.ne.s32.totalorder %s22, %s23
    %p34 = scmp.eq.s32.totalorder %s14, 0
    %p35 = por %p33, %p34
    %p36 = scmp.ne.s32.totalorder %s22, %s23
    %p37 = scmp.eq.s32.totalorder %s15, 1
    %p38 = por %p36, %p37
    %p40 = scmp.ne.s32.totalorder %s23, %s39
    %p41 = scmp.eq.s32.totalorder %s15, 0
    %p42 = por %p40, %p41
    %s44 = sadd.s32 %s43, 1
    %p47 = scmp.eq.s32.totalorder %s9, 1
    %p48 = scmp.ne.s32.totalorder %s43, %s45
    %p49 = scmp.eq.s32.totalorder %s9, 0
    %p50 = por %p48, %p49
    %p51 = scmp.ne.s32.totalorder %s43, %s45
    %p52 = scmp.eq.s32.totalorder %s14, 1
    %p53 = por %p51, %p52
    %p54 = scmp.ne.s32.totalorder %s45, %s46
    %p55 = scmp.eq.s32.totalorder %s14, 0
    %p56 = por %p54, %p55
    %p57 = scmp.ne.s32.totalorder %s45, %s46
    %p58 = scmp.eq.s32.totalorder %s15, 1
    %p59 = por %p57, %p58
    %p61 = scmp.ne.s32.totalorder %s46, %s60
    %p62 = scmp.eq.s32.totalorder %s15, 0
    %p63 = por %p61, %p62
    %s65 = sadd.s32 %s64, 1
    %p68 = scmp.eq.s32.totalorder %s9, 1
    %p69 = scmp.ne.s32.totalorder %s64, %s66
    %p70 = scmp.eq.s32.totalorder %s9, 0
    %p71 = por %p69, %p70
    %p72 = scmp.ne.s32.totalorder %s64, %s66
    %p73 = scmp.eq.s32.totalorder %s14, 1
    %p74 = por %p72, %p73
    %p75 = scmp.ne.s32.totalorder %s66, %s67
    %p76 = scmp.eq.s32.totalorder %s14, 0
    %p77 = por %p75, %p76
    %p78 = scmp.ne.s32.totalorder %s66, %s67
    %p79 = scmp.eq.s32.totalorder %s15, 1
    %p80 = por %p78, %p79
    %p82 = scmp.ne.s32.totalorder %s67, %s81
    %p83 = scmp.eq.s32.totalorder %s15, 0
    %p84 = por %p82, %p83
    %s85 = ssub.s32 %s9, %s16
    %p86 = scmp.eq.s32.totalorder %s85, 0
    %s88 = sadd.s32 %s87, 1
    %s89 = scalar_select %p86, %s87, %s88
    %p92 = pneg %p86
    %p93 = scmp.eq.s32.totalorder %s9, 1
    %p94 = por %p92, %p93
    %p95 = scmp.ne.s32.totalorder %s87, %s90
    %p96 = scmp.eq.s32.totalorder %s9, 0
    %p97 = por %p95, %p96
    %p98 = scmp.ne.s32.totalorder %s87, %s90
    %p99 = scmp.eq.s32.totalorder %s14, 1
    %p100 = por %p98, %p99
    %p101 = scmp.ne.s32.totalorder %s90, %s91
    %p102 = scmp.eq.s32.totalorder %s14, 0
    %p103 = por %p101, %p102
    %p104 = scmp.ne.s32.totalorder %s90, %s91
    %p105 = scmp.eq.s32.totalorder %s15, 1
    %p106 = por %p104, %p105
    %p108 = scmp.ne.s32.totalorder %s91, %s107
    %p109 = scmp.eq.s32.totalorder %s15, 0
    %p110 = por %p108, %p109
    %p111 = scmp.le.s32.totalorder 1, %s9
    %p112 = scmp.lt.s32.totalorder %s9, 3
    %p113 = pnand %p111, %p112
    %p114 = pneg %p113
    // Predicated region
    $region9: #{stem_block_forward.8} parent=5 // pred_check
      _
    $region10: #{stem_block_forward.8} parent=5 // pred_check_branch
      %116 = sbr.rel (%p113) target = $region12
    $region11: #{stem_block_forward.8} parent=5 // pred_region
      %s117 = ssub.s32 %s9, 1
      // Predicated region
      $region13: #{stem_block_forward.8} parent=11 // pred_check
        %p118 = pneg %p56
      $region14: #{stem_block_forward.8} parent=11 // pred_check_branch
        %120 = sbr.rel (%p118) target = $region16
      $region15: #{stem_block_forward.8} parent=11 // pred_region
        _
      $region16: #{stem_block_forward.8} parent=11 // pred_fallthru
        _
      // Predicated region
      $region17: #{stem_block_forward.8} parent=11 // pred_check
        %p121 = pneg %p77
      $region18: #{stem_block_forward.8} parent=11 // pred_check_branch
        %123 = sbr.rel (%p121) target = $region20
      $region19: #{stem_block_forward.8} parent=11 // pred_region
        _
      $region20: #{stem_block_forward.8} parent=11 // pred_fallthru
        _
    $region12: #{stem_block_forward.8} parent=5 // pred_fallthru
      _
    %p124 = scmp.lt.s32.totalorder %s9, 2
    // Predicated region
    $region21: #{stem_block_forward.8} parent=5 // pred_check
      %p125 = pneg %p124
    $region22: #{stem_block_forward.8} parent=5 // pred_check_branch
      %127 = sbr.rel (%p125) target = $region24
    $region23: #{stem_block_forward.8} parent=5 // pred_region
      // Predicated region
      $region25: #{stem_block_forward.8} parent=23 // pred_check
        %p128 = pneg %p29
      $region26: #{stem_block_forward.8} parent=23 // pred_check_branch
        %130 = sbr.rel (%p128) target = $region28
      $region27: #{stem_block_forward.8} parent=23 // pred_region
        %s131 = smul.u32 8, %s9
        %p132 = scmp.lt.s32.totalorder %s131, 15
        %s133 = scalar_select %p132, %s131, 15
        %s134 = smul.addr %s133, 8
        %s135 = scalar_lea.vmem %s0, %s134
        %s136 = smul.u32 8, %s9
      $region28: #{stem_block_forward.8} parent=23 // pred_fallthru
        _
    $region24: #{stem_block_forward.8} parent=5 // pred_fallthru
      _
    %p137 = scmp.le.s32.totalorder 1, %s9
    %p138 = scmp.lt.s32.totalorder %s9, 3
    %p139 = pnand %p137, %p138
    %p140 = pneg %p139
    // Predicated region
    $region29: #{stem_block_forward.8} parent=5 // pred_check
      _
    $region30: #{stem_block_forward.8} parent=5 // pred_check_branch
      %142 = sbr.rel (%p139) target = $region32
    $region31: #{stem_block_forward.8} parent=5 // pred_region
      %s143 = ssub.s32 %s9, 1
      %s144 = smul.u32 8, %s14
      %p145 = scmp.lt.s32.totalorder %s144, 15
      %s146 = scalar_select %p145, %s144, 15
      %s147 = smul.addr %s146, 8
      %s148 = scalar_lea.vmem %s0, %s147
      %p149 = pneg %p35
      %p150 = pneg %p32
      %p151 = pneg %p56
      %p152 = pneg %p53
      %p153 = pneg %p77
      %p154 = pneg %p74
      %p155 = pneg %p103
      %p156 = pneg %p100
      %s157 = smul.u32 8, %s14
      %p158 = scmp.lt.s32.totalorder %s157, 15
      %s159 = scalar_select %p158, %s157, 15
      %s160 = smul.addr %s159, 4
      %s161 = scalar_lea.vmem %s3, %s160
      %s162 = smul.u32 8, %s14
      %p163 = scmp.lt.s32.totalorder %s162, 15
      %s164 = scalar_select %p163, %s162, 15
      %s165 = smul.addr %s164, 8
      %s166 = scalar_lea.vmem %s0, %s165
      %s167 = smul.u32 8, %s14
      %s168 = smul.u32 8, %s14
      %p169 = scmp.lt.s32.totalorder %s168, 15
      %s170 = scalar_select %p169, %s168, 15
      %s171 = smul.addr %s170, 4
      %s172 = scalar_lea.vmem %s3, %s171
      %s173 = smul.u32 8, %s14
      %v174 = vld [vmem:[%s166] sm:$0xff]
      %v175 = vld [vmem:[%s166 + $0x8] sm:$0xff]
      %v176 = vld [vmem:[%s166 + $0x10] sm:$0xff]
      %v177 = vld [vmem:[%s166 + $0x18] sm:$0xff]
      %v178 = vld [vmem:[%s166 + $0x20] sm:$0xff]
      %v179 = vld [vmem:[%s166 + $0x28] sm:$0xff]
      %v180 = vld [vmem:[%s166 + $0x30] sm:$0xff]
      %v181 = vld [vmem:[%s166 + $0x38] sm:$0xff]
      %v182 = vld [vmem:[%s1] sm:$0x1]
      %v184 = vlaneseq
      %v185 = vshrl.u32 %v184, 7
      %v186 = vsub.s32 0, %v185
      %v187 = vrot.slane %v182, %v186
      %v189 = vmul.f32 %v174, %v187
      %v190 = vmul.f32 %v175, %v187
      %v191 = vmul.f32 %v176, %v187
      %v192 = vmul.f32 %v177, %v187
      %v193 = vmul.f32 %v178, %v187
      %v194 = vmul.f32 %v179, %v187
      %v195 = vmul.f32 %v180, %v187
      %v196 = vmul.f32 %v181, %v187
      %v197 = vld [vmem:[%s2] sm:$0x1]
      %v199 = vlaneseq
      %v200 = vshrl.u32 %v199, 7
      %v201 = vsub.s32 0, %v200
      %v202 = vrot.slane %v197, %v201
      %v204 = vadd.f32 %v189, %v202
      %v205 = vadd.f32 %v190, %v202
      %v206 = vadd.f32 %v191, %v202
      %v207 = vadd.f32 %v192, %v202
      %v208 = vadd.f32 %v193, %v202
      %v209 = vadd.f32 %v194, %v202
      %v210 = vadd.f32 %v195, %v202
      %v211 = vadd.f32 %v196, %v202
      %v212 = vmax.f32 %v204, 0.0
      %v213 = vmax.f32 %v205, 0.0
      %v214 = vmax.f32 %v206, 0.0
      %v215 = vmax.f32 %v207, 0.0
      %v216 = vmax.f32 %v208, 0.0
      %v217 = vmax.f32 %v209, 0.0
      %v218 = vmax.f32 %v210, 0.0
      %v219 = vmax.f32 %v211, 0.0
      %v220 = vpack.c.bf16 %v213, %v212
      %v221 = vpack.c.bf16 %v215, %v214
      %v222 = vpack.c.bf16 %v217, %v216
      %v223 = vpack.c.bf16 %v219, %v218
      %v228 = vunpack.c.l.b16 %v220
      %v229 = vunpack.c.h.b16 %v220
      %v230 = vunpack.c.l.b16 %v221
      %v231 = vunpack.c.h.b16 %v221
      %v232 = vunpack.c.l.b16 %v222
      %v233 = vunpack.c.h.b16 %v222
      %v234 = vunpack.c.l.b16 %v223
      %v235 = vunpack.c.h.b16 %v223
      %v236 = vpack.c.b16 %v228, %v228
      %v237 = vpack.c.b16 %v229, %v229
      %v238 = vpack.c.b16 %v230, %v230
      %v239 = vpack.c.b16 %v231, %v231
      %v240 = vpack.c.b16 %v232, %v232
      %v241 = vpack.c.b16 %v233, %v233
      %v242 = vpack.c.b16 %v234, %v234
      %v243 = vpack.c.b16 %v235, %v235
      %252 = vst [vmem:[%s172] sm:$0xf] %v236
      %253 = vst [vmem:[%s172 + $0x4] sm:$0xf] %v237
      %254 = vst [vmem:[%s172 + $0x8] sm:$0xf] %v238
      %255 = vst [vmem:[%s172 + $0xc] sm:$0xf] %v239
      %256 = vst [vmem:[%s172 + $0x10] sm:$0xf] %v240
      %257 = vst [vmem:[%s172 + $0x14] sm:$0xf] %v241
      %258 = vst [vmem:[%s172 + $0x18] sm:$0xf] %v242
      %259 = vst [vmem:[%s172 + $0x1c] sm:$0xf] %v243
      %s260 = smul.u32 8, %s14
      %p261 = scmp.lt.s32.totalorder %s260, 15
      %s262 = scalar_select %p261, %s260, 15
      %s263 = smul.addr %s262, 4
      %s264 = scalar_lea.vmem %s3, %s263
      // Predicated region
      $region33: #{stem_block_forward.8} parent=31 // pred_check
        %p265 = pneg %p100
      $region34: #{stem_block_forward.8} parent=31 // pred_check_branch
        %267 = sbr.rel (%p265) target = $region36
      $region35: #{stem_block_forward.8} parent=31 // pred_region
        %s268 = smul.u32 8, %s14
      $region36: #{stem_block_forward.8} parent=31 // pred_fallthru
        _
    $region32: #{stem_block_forward.8} parent=5 // pred_fallthru
      _
    %p269 = scmp.le.s32.totalorder 2, %s9
    // Predicated region
    $region37: #{stem_block_forward.8} parent=5 // pred_check
      %p270 = pneg %p269
    $region38: #{stem_block_forward.8} parent=5 // pred_check_branch
      %272 = sbr.rel (%p270) target = $region40
    $region39: #{stem_block_forward.8} parent=5 // pred_region
      %s273 = ssub.s32 %s9, 2
      // Predicated region
      $region41: #{stem_block_forward.8} parent=39 // pred_check
        %p274 = pneg %p106
      $region42: #{stem_block_forward.8} parent=39 // pred_check_branch
        %276 = sbr.rel (%p274) target = $region44
      $region43: #{stem_block_forward.8} parent=39 // pred_region
        %s277 = smul.u32 8, %s15
        %p278 = scmp.lt.s32.totalorder %s277, 15
        %s279 = scalar_select %p278, %s277, 15
        %s280 = smul.addr %s279, 4
        %s281 = scalar_lea.vmem %s3, %s280
      $region44: #{stem_block_forward.8} parent=39 // pred_fallthru
        _
    $region40: #{stem_block_forward.8} parent=5 // pred_fallthru
      _
  $region6: #{stem_block_forward.8} parent=0 // loop_footer
    %s13 = sadd.s32 1, %s9
  $region7: #{stem_block_forward.8} parent=0 // loop_footer_branch
    %8 = sbr.rel target = $region3
  $region8: #{stem_block_forward.8} parent=0 // loop_exit
    _

// kernel: stem_block_forward.6
$region0: #{stem_block_forward.6}
  #allocation0 [shape = 'u32[]', space=smem, size = 0x4, offset = 0x4, fixed_abs, tag = 'smem constant byte address 0x4 - core index']
  #allocation1 [shape = 'u32[144,128]{1,0:T(1,128)}', space=vmem, size = 0x12000, scoped, tag = 'internal scratch']
  %s0 = inlined_call_operand.vmem [shape: bf16[128,128], index: 0, kind: input, shape index: {}]
  %s1 = inlined_call_operand.vmem [shape: bf16[128,128], index: 1, kind: input, shape index: {}]
  %s2 = inlined_call_operand.vmem [shape: f32[128,128], index: 2, kind: output, shape index: {0}]
  %s3 = inlined_call_operand.vmem [shape: f32[2,2,128], index: 3, kind: output, shape index: {1}]
  %4 = xla_tuple %s2, %s3
  %s5 = sld [smem:[#allocation0]]
  $region49: #{stem_block_forward.6} parent=0
    _
  %s7 = ssub.s32 1, %s5
  %s8 = scalar_select 0, %s7, %s5
  loop: start=0, step=1, limit=4
  $region2: #{stem_block_forward.6} parent=0 // loop_pre_header
    _
  $region3: #{stem_block_forward.6} parent=0 // loop_header
    %s10 = sphi 0, %s14
    %p11 = scmp.ge.s32.totalorder %s10, 4
    %s20 = sphi 0, %s22
    %s23 = sphi 0, %s20
    %s24 = sphi 0, %s23
    %s40 = sphi 0, %s24
    %s44 = sphi 0, %s44
    %s46 = sphi 0, %s44
    %s47 = sphi 0, %s46
    %s61 = sphi 0, %s47
    %s67 = sphi 0, %s69
    %s70 = sphi 0, %s67
    %s71 = sphi 0, %s70
    %s87 = sphi 0, %s71
    %s93 = sphi 0, %s95
    %s96 = sphi 0, %s93
    %s97 = sphi 0, %s96
    %s113 = sphi 0, %s97
  $region4: #{stem_block_forward.6} parent=0 // loop_header_branch
    %13 = sbr.rel (%p11) target = $region8
  $region5: #{stem_block_forward.6} parent=0 // loop_body
    %s15 = ssub.s32 %s10, 1
    %s16 = ssub.s32 %s10, 2
    %s17 = sadd.s32 %s10, 1
    %s18 = ssub.s32 %s10, %s17
    %p19 = scmp.eq.s32.totalorder %s18, 0
    %s21 = sadd.s32 %s20, 1
    %s22 = scalar_select %p19, %s20, %s21
    %p25 = pneg %p19
    %p26 = scmp.eq.s32.totalorder %s10, 1
    %p27 = por %p25, %p26
    %p28 = scmp.ne.s32.totalorder %s20, %s23
    %p29 = scmp.eq.s32.totalorder %s10, 0
    %p30 = por %p28, %p29
    %p31 = scmp.ne.s32.totalorder %s20, %s23
    %p32 = scmp.eq.s32.totalorder %s15, 1
    %p33 = por %p31, %p32
    %p34 = scmp.ne.s32.totalorder %s23, %s24
    %p35 = scmp.eq.s32.totalorder %s15, 0
    %p36 = por %p34, %p35
    %p37 = scmp.ne.s32.totalorder %s23, %s24
    %p38 = scmp.eq.s32.totalorder %s16, 1
    %p39 = por %p37, %p38
    %p41 = scmp.ne.s32.totalorder %s24, %s40
    %p42 = scmp.eq.s32.totalorder %s16, 0
    %p43 = por %p41, %p42
    %s45 = sadd.s32 %s44, 1
    %p48 = scmp.eq.s32.totalorder %s10, 1
    %p49 = scmp.ne.s32.totalorder %s44, %s46
    %p50 = scmp.eq.s32.totalorder %s10, 0
    %p51 = por %p49, %p50
    %p52 = scmp.ne.s32.totalorder %s44, %s46
    %p53 = scmp.eq.s32.totalorder %s15, 1
    %p54 = por %p52, %p53
    %p55 = scmp.ne.s32.totalorder %s46, %s47
    %p56 = scmp.eq.s32.totalorder %s15, 0
    %p57 = por %p55, %p56
    %p58 = scmp.ne.s32.totalorder %s46, %s47
    %p59 = scmp.eq.s32.totalorder %s16, 1
    %p60 = por %p58, %p59
    %p62 = scmp.ne.s32.totalorder %s47, %s61
    %p63 = scmp.eq.s32.totalorder %s16, 0
    %p64 = por %p62, %p63
    %s65 = ssub.s32 %s10, %s17
    %p66 = scmp.eq.s32.totalorder %s65, 0
    %s68 = sadd.s32 %s67, 1
    %s69 = scalar_select %p66, %s67, %s68
    %p72 = pneg %p66
    %p73 = scmp.eq.s32.totalorder %s10, 1
    %p74 = por %p72, %p73
    %p75 = scmp.ne.s32.totalorder %s67, %s70
    %p76 = scmp.eq.s32.totalorder %s10, 0
    %p77 = por %p75, %p76
    %p78 = scmp.ne.s32.totalorder %s67, %s70
    %p79 = scmp.eq.s32.totalorder %s15, 1
    %p80 = por %p78, %p79
    %p81 = scmp.ne.s32.totalorder %s70, %s71
    %p82 = scmp.eq.s32.totalorder %s15, 0
    %p83 = por %p81, %p82
    %p84 = scmp.ne.s32.totalorder %s70, %s71
    %p85 = scmp.eq.s32.totalorder %s16, 1
    %p86 = por %p84, %p85
    %p88 = scmp.ne.s32.totalorder %s71, %s87
    %p89 = scmp.eq.s32.totalorder %s16, 0
    %p90 = por %p88, %p89
    %s91 = ssub.s32 %s10, %s17
    %p92 = scmp.eq.s32.totalorder %s91, 0
    %s94 = sadd.s32 %s93, 1
    %s95 = scalar_select %p92, %s93, %s94
    %p98 = pneg %p92
    %p99 = scmp.eq.s32.totalorder %s10, 1
    %p100 = por %p98, %p99
    %p101 = scmp.ne.s32.totalorder %s93, %s96
    %p102 = scmp.eq.s32.totalorder %s10, 0
    %p103 = por %p101, %p102
    %p104 = scmp.ne.s32.totalorder %s93, %s96
    %p105 = scmp.eq.s32.totalorder %s15, 1
    %p106 = por %p104, %p105
    %p107 = scmp.ne.s32.totalorder %s96, %s97
    %p108 = scmp.eq.s32.totalorder %s15, 0
    %p109 = por %p107, %p108
    %p110 = scmp.ne.s32.totalorder %s96, %s97
    %p111 = scmp.eq.s32.totalorder %s16, 1
    %p112 = por %p110, %p111
    %p114 = scmp.ne.s32.totalorder %s97, %s113
    %p115 = scmp.eq.s32.totalorder %s16, 0
    %p116 = por %p114, %p115
    %p117 = scmp.le.s32.totalorder 1, %s10
    %p118 = scmp.lt.s32.totalorder %s10, 3
    %p119 = pnand %p117, %p118
    %p120 = pneg %p119
    // Predicated region
    $region9: #{stem_block_forward.6} parent=5 // pred_check
      _
    $region10: #{stem_block_forward.6} parent=5 // pred_check_branch
      %122 = sbr.rel (%p119) target = $region12
    $region11: #{stem_block_forward.6} parent=5 // pred_region
      %s123 = ssub.s32 %s10, 1
      // Predicated region
      $region13: #{stem_block_forward.6} parent=11 // pred_check
        %p124 = pneg %p57
      $region14: #{stem_block_forward.6} parent=11 // pred_check_branch
        %126 = sbr.rel (%p124) target = $region16
      $region15: #{stem_block_forward.6} parent=11 // pred_region
        _
      $region16: #{stem_block_forward.6} parent=11 // pred_fallthru
        _
    $region12: #{stem_block_forward.6} parent=5 // pred_fallthru
      _
    %p127 = scmp.lt.s32.totalorder %s10, 2
    // Predicated region
    $region17: #{stem_block_forward.6} parent=5 // pred_check
      %p128 = pneg %p127
    $region18: #{stem_block_forward.6} parent=5 // pred_check_branch
      %130 = sbr.rel (%p128) target = $region20
    $region19: #{stem_block_forward.6} parent=5 // pred_region
      // Predicated region
      $region21: #{stem_block_forward.6} parent=19 // pred_check
        %p131 = pneg %p30
      $region22: #{stem_block_forward.6} parent=19 // pred_check_branch
        %133 = sbr.rel (%p131) target = $region24
      $region23: #{stem_block_forward.6} parent=19 // pred_region
        %s134 = smul.u32 8, %s10
        %p135 = scmp.lt.s32.totalorder %s134, 15
        %s136 = scalar_select %p135, %s134, 15
        %s137 = smul.addr %s136, 4
        %s138 = scalar_lea.vmem %s0, %s137
        %s139 = smul.u32 8, %s10
      $region24: #{stem_block_forward.6} parent=19 // pred_fallthru
        _
    $region20: #{stem_block_forward.6} parent=5 // pred_fallthru
      _
    %p140 = scmp.le.s32.totalorder 1, %s10
    %p141 = scmp.lt.s32.totalorder %s10, 3
    %p142 = pnand %p140, %p141
    %p143 = pneg %p142
    // Predicated region
    $region25: #{stem_block_forward.6} parent=5 // pred_check
      _
    $region26: #{stem_block_forward.6} parent=5 // pred_check_branch
      %145 = sbr.rel (%p142) target = $region28
    $region27: #{stem_block_forward.6} parent=5 // pred_region
      %s146 = ssub.s32 %s10, 1
      %s147 = smul.u32 8, %s15
      %p148 = scmp.lt.s32.totalorder %s147, 15
      %s149 = scalar_select %p148, %s147, 15
      %s150 = smul.addr %s149, 4
      %s151 = scalar_lea.vmem %s0, %s150
      %p152 = pneg %p36
      %p153 = pneg %p33
      %p154 = pneg %p57
      %p155 = pneg %p54
      %p156 = pneg %p83
      %p157 = pneg %p80
      %s158 = smul.u32 8, %s15
      %p159 = scmp.lt.s32.totalorder %s158, 15
      %s160 = scalar_select %p159, %s158, 15
      %s161 = smul.addr %s160, 8
      %s162 = scalar_lea.vmem %s2, %s161
      %p163 = pneg %p109
      %p164 = pneg %p106
      %p165 = scmp.lt.s32.totalorder %s15, 1
      %s166 = scalar_select %p165, %s15, 1
      %s167 = smul.addr %s166, 2
      %s168 = scalar_lea.vmem %s3, %s167
      %s169 = smul.u32 8, %s15
      %p170 = scmp.lt.s32.totalorder %s169, 15
      %s171 = scalar_select %p170, %s169, 15
      %s172 = smul.addr %s171, 4
      %s173 = scalar_lea.vmem %s0, %s172
      %s174 = smul.u32 8, %s15
      %s175 = smul.u32 8, %s15
      %p176 = scmp.lt.s32.totalorder %s175, 15
      %s177 = scalar_select %p176, %s175, 15
      %s178 = smul.addr %s177, 8
      %s179 = scalar_lea.vmem %s2, %s178
      %s180 = smul.u32 8, %s15
      %p181 = scmp.lt.s32.totalorder %s15, 1
      %s182 = scalar_select %p181, %s15, 1
      %s183 = smul.addr %s182, 2
      %s184 = scalar_lea.vmem %s3, %s183
      %v186 = vld [vmem:[%s173] sm:$0xf]
      %v187 = vld [vmem:[%s173 + $0x4] sm:$0xf]
      %v188 = vld [vmem:[%s173 + $0x8] sm:$0xf]
      %v189 = vld [vmem:[%s173 + $0xc] sm:$0xf]
      %v190 = vld [vmem:[%s173 + $0x10] sm:$0xf]
      %v191 = vld [vmem:[%s173 + $0x14] sm:$0xf]
      %v192 = vld [vmem:[%s173 + $0x18] sm:$0xf]
      %v193 = vld [vmem:[%s173 + $0x1c] sm:$0xf]
      %v194 = vld [vmem:[%s1] sm:$0xf]
      %v195 = vld [vmem:[%s1 + $0x4] sm:$0xf]
      %v196 = vld [vmem:[%s1 + $0x8] sm:$0xf]
      %v197 = vld [vmem:[%s1 + $0xc] sm:$0xf]
      %v198 = vld [vmem:[%s1 + $0x10] sm:$0xf]
      %v199 = vld [vmem:[%s1 + $0x14] sm:$0xf]
      %v200 = vld [vmem:[%s1 + $0x18] sm:$0xf]
      %v201 = vld [vmem:[%s1 + $0x1c] sm:$0xf]
      %v202 = vld [vmem:[%s1 + $0x20] sm:$0xf]
      %v203 = vld [vmem:[%s1 + $0x24] sm:$0xf]
      %v204 = vld [vmem:[%s1 + $0x28] sm:$0xf]
      %v205 = vld [vmem:[%s1 + $0x2c] sm:$0xf]
      %v206 = vld [vmem:[%s1 + $0x30] sm:$0xf]
      %v207 = vld [vmem:[%s1 + $0x34] sm:$0xf]
      %v208 = vld [vmem:[%s1 + $0x38] sm:$0xf]
      %v209 = vld [vmem:[%s1 + $0x3c] sm:$0xf]
      %v218 = vunpack.c.l.b16 %v186
      %v219 = vunpack.c.l.b16 %v187
      %v220 = vunpack.c.l.b16 %v188
      %v221 = vunpack.c.l.b16 %v189
      %v222 = vunpack.c.l.b16 %v190
      %v223 = vunpack.c.l.b16 %v191
      %v224 = vunpack.c.l.b16 %v192
      %v225 = vunpack.c.l.b16 %v193
      %v226 = vpack.c.b16 %v219, %v218
      %v227 = vpack.c.b16 %v221, %v220
      %v228 = vpack.c.b16 %v223, %v222
      %v229 = vpack.c.b16 %v225, %v224
      %v250 = vunpack.c.l.b16 %v194
      %v251 = vunpack.c.l.b16 %v195
      %v252 = vunpack.c.l.b16 %v196
      %v253 = vunpack.c.l.b16 %v197
      %v254 = vunpack.c.l.b16 %v198
      %v255 = vunpack.c.l.b16 %v199
      %v256 = vunpack.c.l.b16 %v200
      %v257 = vunpack.c.l.b16 %v201
      %v258 = vunpack.c.l.b16 %v202
      %v259 = vunpack.c.l.b16 %v203
      %v260 = vunpack.c.l.b16 %v204
      %v261 = vunpack.c.l.b16 %v205
      %v262 = vunpack.c.l.b16 %v206
      %v263 = vunpack.c.l.b16 %v207
      %v264 = vunpack.c.l.b16 %v208
      %v265 = vunpack.c.l.b16 %v209
      %v266 = vpack.c.b16 %v251, %v250
      %v267 = vpack.c.b16 %v253, %v252
      %v268 = vpack.c.b16 %v255, %v254
      %v269 = vpack.c.b16 %v257, %v256
      %v270 = vpack.c.b16 %v259, %v258
      %v271 = vpack.c.b16 %v261, %v260
      %v272 = vpack.c.b16 %v263, %v262
      %v273 = vpack.c.b16 %v265, %v264
      %282 = vmatprep.subr.bf16.mxu0 0
      %283 = vmatpush1.bf16.msra.mxu0 %v266
      %284 = vmatprep.subr.bf16.mxu0 0
      %285 = vmatpush1.bf16.msra.mxu0 %v267
      %286 = vmatprep.subr.bf16.mxu0 0
      %287 = vmatpush1.bf16.msra.mxu0 %v268
      %288 = vmatprep.subr.bf16.mxu0 0
      %289 = vmatpush1.bf16.msra.mxu0 %v269
      %290 = vmatprep.subr.bf16.mxu0 0
      %291 = vmatpush1.bf16.msra.mxu0 %v270
      %292 = vmatprep.subr.bf16.mxu0 0
      %293 = vmatpush1.bf16.msra.mxu0 %v271
      %294 = vmatprep.subr.bf16.mxu0 0
      %295 = vmatpush1.bf16.msra.mxu0 %v272
      %296 = vmatprep.subr.bf16.mxu0 0
      %297 = vmatpush1.bf16.msra.mxu0 %v273
      %298 = vmatprep.subr.bf16.mxu0 0
      %299 = vmatpush1.bf16.msra.mxu0 0
      %300 = vmatprep.subr.bf16.mxu0 0
      %301 = vmatpush1.bf16.msra.mxu0 0
      %302 = vmatprep.subr.bf16.mxu0 0
      %303 = vmatpush1.bf16.msra.mxu0 0
      %304 = vmatprep.subr.bf16.mxu0 0
      %305 = vmatpush1.bf16.msra.mxu0 0
      %306 = vmatprep.subr.bf16.mxu0 0
      %307 = vmatpush1.bf16.msra.mxu0 0
      %308 = vmatprep.subr.bf16.mxu0 0
      %309 = vmatpush1.bf16.msra.mxu0 0
      %310 = vmatprep.subr.bf16.mxu0 0
      %311 = vmatpush1.bf16.msra.mxu0 0
      %312 = vmatprep.subr.bf16.mxu0 0
      %313 = vmatpush1.bf16.msra.mxu0 0
      %314 = vmatprep.mubr.bf16.mxu0 0
      %315 = vmatmul.mubr.bf16.gmra.mrb[0].mxu0 %v226
      %v316 = vpop.f32.mrb[0].mxu0
      %v317 = vadd.f32 0.0, %v316
      %v318 = vpop.f32.mrb[0].mxu0
      %v319 = vpop.f32.mrb[0].mxu0
      %v320 = vadd.f32 0.0, %v319
      %v321 = vpop.f32.mrb[0].mxu0
      %322 = vmatprep.mubr.bf16.mxu0 0
      %323 = vmatmul.mubr.bf16.gmra.mrb[0].mxu0 %v227
      %v324 = vpop.f32.mrb[0].mxu0
      %v325 = vadd.f32 0.0, %v324
      %v326 = vpop.f32.mrb[0].mxu0
      %v327 = vpop.f32.mrb[0].mxu0
      %v328 = vadd.f32 0.0, %v327
      %v329 = vpop.f32.mrb[0].mxu0
      %330 = vmatprep.mubr.bf16.mxu0 0
      %331 = vmatmul.mubr.bf16.gmra.mrb[0].mxu0 %v228
      %v332 = vpop.f32.mrb[0].mxu0
      %v333 = vadd.f32 0.0, %v332
      %v334 = vpop.f32.mrb[0].mxu0
      %v335 = vpop.f32.mrb[0].mxu0
      %v336 = vadd.f32 0.0, %v335
      %v337 = vpop.f32.mrb[0].mxu0
      %338 = vmatprep.mubr.bf16.mxu0 0
      %339 = vmatmul.mubr.bf16.gmra.mrb[0].mxu0 %v229
      %v340 = vpop.f32.mrb[0].mxu0
      %v341 = vadd.f32 0.0, %v340
      %v342 = vpop.f32.mrb[0].mxu0
      %v343 = vpop.f32.mrb[0].mxu0
      %v344 = vadd.f32 0.0, %v343
      %v345 = vpop.f32.mrb[0].mxu0
      %346 = vdwg.mxu0
      %347 = vst [vmem:[%s179] sm:$0xff] %v317
      %348 = vst [vmem:[%s179 + $0x8] sm:$0xff] %v320
      %349 = vst [vmem:[%s179 + $0x10] sm:$0xff] %v325
      %350 = vst [vmem:[%s179 + $0x18] sm:$0xff] %v328
      %351 = vst [vmem:[%s179 + $0x20] sm:$0xff] %v333
      %352 = vst [vmem:[%s179 + $0x28] sm:$0xff] %v336
      %353 = vst [vmem:[%s179 + $0x30] sm:$0xff] %v341
      %354 = vst [vmem:[%s179 + $0x38] sm:$0xff] %v344
      %vm355 = vcmask 523264
      %v357 = vsel %vm355, 1.0, 0
      %359 = vmatprep.subr.mxu0 0.0
      %360 = vmatpush1.msra.mxu0 %v317
      %361 = vmatprep.subr.mxu0 0.0
      %362 = vmatpush1.msra.mxu0 %v320
      %363 = vmatprep.subr.mxu0 0.0
      %364 = vmatpush1.msra.mxu0 %v325
      %365 = vmatprep.subr.mxu0 0.0
      %366 = vmatpush1.msra.mxu0 %v328
      %367 = vmatprep.subr.mxu0 0.0
      %368 = vmatpush1.msra.mxu0 %v333
      %369 = vmatprep.subr.mxu0 0.0
      %370 = vmatpush1.msra.mxu0 %v336
      %371 = vmatprep.subr.mxu0 0.0
      %372 = vmatpush1.msra.mxu0 %v341
      %373 = vmatprep.subr.mxu0 0.0
      %374 = vmatpush1.msra.mxu0 %v344
      %375 = vmatprep.subr.mxu0 0.0
      %376 = vmatpush1.msra.mxu0 0.0
      %377 = vmatprep.subr.mxu0 0.0
      %378 = vmatpush1.msra.mxu0 0.0
      %379 = vmatprep.subr.mxu0 0.0
      %380 = vmatpush1.msra.mxu0 0.0
      %381 = vmatprep.subr.mxu0 0.0
      %382 = vmatpush1.msra.mxu0 0.0
      %383 = vmatprep.subr.mxu0 0.0
      %384 = vmatpush1.msra.mxu0 0.0
      %385 = vmatprep.subr.mxu0 0.0
      %386 = vmatpush1.msra.mxu0 0.0
      %387 = vmatprep.subr.mxu0 0.0
      %388 = vmatpush1.msra.mxu0 0.0
      %389 = vmatprep.subr.mxu0 0.0
      %390 = vmatpush1.msra.mxu0 0.0
      %391 = vmatprep.subr.mxu0 0.0
      %392 = vmatpush1.msra.mxu0 0.0
      %393 = vmatprep.subr.mxu0 0.0
      %394 = vmatpush1.msra.mxu0 0.0
      %395 = vmatprep.subr.mxu0 0.0
      %396 = vmatpush1.msra.mxu0 0.0
      %397 = vmatprep.subr.mxu0 0.0
      %398 = vmatpush1.msra.mxu0 0.0
      %399 = vmatprep.subr.mxu0 0.0
      %400 = vmatpush1.msra.mxu0 0.0
      %401 = vmatprep.subr.mxu0 0.0
      %402 = vmatpush1.msra.mxu0 0.0
      %403 = vmatprep.subr.mxu0 0.0
      %404 = vmatpush1.msra.mxu0 0.0
      %405 = vmatprep.subr.mxu0 0.0
      %406 = vmatpush1.msra.mxu0 0.0
      %407 = vmatprep.subr.mxu0 0.0
      %408 = vmatpush1.msra.mxu0 0.0
      %409 = vmatprep.subr.mxu0 0.0
      %410 = vmatpush1.msra.mxu0 0.0
      %411 = vmatprep.subr.mxu0 0.0
      %412 = vmatpush1.msra.mxu0 0.0
      %413 = vmatprep.subr.mxu0 0.0
      %414 = vmatpush1.msra.mxu0 0.0
      %415 = vmatprep.subr.mxu0 0.0
      %416 = vmatpush1.msra.mxu0 0.0
      %417 = vmatprep.subr.mxu0 0.0
      %418 = vmatpush1.msra.mxu0 0.0
      %419 = vmatprep.subr.mxu0 0.0
      %420 = vmatpush1.msra.mxu0 0.0
      %421 = vmatprep.subr.mxu0 0.0
      %422 = vmatpush1.msra.mxu0 0.0
      %423 = vmatprep.mubr.f32.mxu0 0.0
      %424 = vmatmul.mubr.f32.gmra.mrb[0].mxu0 %v357
      %v425 = vpop.f32.mrb[0].mxu0
      %v426 = vadd.f32 0.0, %v425
      %v427 = vpop.f32.mrb[0].mxu0
      %428 = vdwg.mxu0
      %v429 = vmul.f32 %v317, %v317
      %v430 = vmul.f32 %v320, %v320
      %v431 = vmul.f32 %v325, %v325
      %v432 = vmul.f32 %v328, %v328
      %v433 = vmul.f32 %v333, %v333
      %v434 = vmul.f32 %v336, %v336
      %v435 = vmul.f32 %v341, %v341
      %v436 = vmul.f32 %v344, %v344
      %437 = vmatprep.subr.mxu0 0.0
      %438 = vmatpush1.msra.mxu0 %v429
      %439 = vmatprep.subr.mxu0 0.0
      %440 = vmatpush1.msra.mxu0 %v430
      %441 = vmatprep.subr.mxu0 0.0
      %442 = vmatpush1.msra.mxu0 %v431
      %443 = vmatprep.subr.mxu0 0.0
      %444 = vmatpush1.msra.mxu0 %v432
      %445 = vmatprep.subr.mxu0 0.0
      %446 = vmatpush1.msra.mxu0 %v433
      %447 = vmatprep.subr.mxu0 0.0
      %448 = vmatpush1.msra.mxu0 %v434
      %449 = vmatprep.subr.mxu0 0.0
      %450 = vmatpush1.msra.mxu0 %v435
      %451 = vmatprep.subr.mxu0 0.0
      %452 = vmatpush1.msra.mxu0 %v436
      %453 = vmatprep.subr.mxu0 0.0
      %454 = vmatpush1.msra.mxu0 0.0
      %455 = vmatprep.subr.mxu0 0.0
      %456 = vmatpush1.msra.mxu0 0.0
      %457 = vmatprep.subr.mxu0 0.0
      %458 = vmatpush1.msra.mxu0 0.0
      %459 = vmatprep.subr.mxu0 0.0
      %460 = vmatpush1.msra.mxu0 0.0
      %461 = vmatprep.subr.mxu0 0.0
      %462 = vmatpush1.msra.mxu0 0.0
      %463 = vmatprep.subr.mxu0 0.0
      %464 = vmatpush1.msra.mxu0 0.0
      %465 = vmatprep.subr.mxu0 0.0
      %466 = vmatpush1.msra.mxu0 0.0
      %467 = vmatprep.subr.mxu0 0.0
      %468 = vmatpush1.msra.mxu0 0.0
      %469 = vmatprep.subr.mxu0 0.0
      %470 = vmatpush1.msra.mxu0 0.0
      %471 = vmatprep.subr.mxu0 0.0
      %472 = vmatpush1.msra.mxu0 0.0
      %473 = vmatprep.subr.mxu0 0.0
      %474 = vmatpush1.msra.mxu0 0.0
      %475 = vmatprep.subr.mxu0 0.0
      %476 = vmatpush1.msra.mxu0 0.0
      %477 = vmatprep.subr.mxu0 0.0
      %478 = vmatpush1.msra.mxu0 0.0
      %479 = vmatprep.subr.mxu0 0.0
      %480 = vmatpush1.msra.mxu0 0.0
      %481 = vmatprep.subr.mxu0 0.0
      %482 = vmatpush1.msra.mxu0 0.0
      %483 = vmatprep.subr.mxu0 0.0
      %484 = vmatpush1.msra.mxu0 0.0
      %485 = vmatprep.subr.mxu0 0.0
      %486 = vmatpush1.msra.mxu0 0.0
      %487 = vmatprep.subr.mxu0 0.0
      %488 = vmatpush1.msra.mxu0 0.0
      %489 = vmatprep.subr.mxu0 0.0
      %490 = vmatpush1.msra.mxu0 0.0
      %491 = vmatprep.subr.mxu0 0.0
      %492 = vmatpush1.msra.mxu0 0.0
      %493 = vmatprep.subr.mxu0 0.0
      %494 = vmatpush1.msra.mxu0 0.0
      %495 = vmatprep.subr.mxu0 0.0
      %496 = vmatpush1.msra.mxu0 0.0
      %497 = vmatprep.subr.mxu0 0.0
      %498 = vmatpush1.msra.mxu0 0.0
      %499 = vmatprep.subr.mxu0 0.0
      %500 = vmatpush1.msra.mxu0 0.0
      %501 = vmatprep.mubr.f32.mxu0 0.0
      %502 = vmatmul.mubr.f32.gmra.mrb[0].mxu0 %v357
      %v503 = vpop.f32.mrb[0].mxu0
      %v504 = vadd.f32 0.0, %v503
      %v505 = vpop.f32.mrb[0].mxu0
      %506 = vdwg.mxu0
      %v508 = vrot.slane %v504, 7
      %vm510 = vcmask 1040384
      %v511 = vsel %vm510, %v426, %v508
      %512 = vst [vmem:[%s184] sm:$0x3] %v511
      %s513 = smul.u32 8, %s15
      %p514 = scmp.lt.s32.totalorder %s513, 15
      %s515 = scalar_select %p514, %s513, 15
      %s516 = smul.addr %s515, 8
      %s517 = scalar_lea.vmem %s2, %s516
      %p518 = scmp.lt.s32.totalorder %s15, 1
      %s519 = scalar_select %p518, %s15, 1
      %s520 = smul.addr %s519, 2
      %s521 = scalar_lea.vmem %s3, %s520
      // Predicated region
      $region29: #{stem_block_forward.6} parent=27 // pred_check
        %p522 = pneg %p80
      $region30: #{stem_block_forward.6} parent=27 // pred_check_branch
        %524 = sbr.rel (%p522) target = $region32
      $region31: #{stem_block_forward.6} parent=27 // pred_region
        %s525 = smul.u32 8, %s15
      $region32: #{stem_block_forward.6} parent=27 // pred_fallthru
        _
      // Predicated region
      $region33: #{stem_block_forward.6} parent=27 // pred_check
        %p526 = pneg %p106
      $region34: #{stem_block_forward.6} parent=27 // pred_check_branch
        %528 = sbr.rel (%p526) target = $region36
      $region35: #{stem_block_forward.6} parent=27 // pred_region
        _
      $region36: #{stem_block_forward.6} parent=27 // pred_fallthru
        _
    $region28: #{stem_block_forward.6} parent=5 // pred_fallthru
      _
    %p529 = scmp.le.s32.totalorder 2, %s10
    // Predicated region
    $region37: #{stem_block_forward.6} parent=5 // pred_check
      %p530 = pneg %p529
    $region38: #{stem_block_forward.6} parent=5 // pred_check_branch
      %532 = sbr.rel (%p530) target = $region40
    $region39: #{stem_block_forward.6} parent=5 // pred_region
      %s533 = ssub.s32 %s10, 2
      // Predicated region
      $region41: #{stem_block_forward.6} parent=39 // pred_check
        %p534 = pneg %p86
      $region42: #{stem_block_forward.6} parent=39 // pred_check_branch
        %536 = sbr.rel (%p534) target = $region44
      $region43: #{stem_block_forward.6} parent=39 // pred_region
        %s537 = smul.u32 8, %s16
        %p538 = scmp.lt.s32.totalorder %s537, 15
        %s539 = scalar_select %p538, %s537, 15
        %s540 = smul.addr %s539, 8
        %s541 = scalar_lea.vmem %s2, %s540
      $region44: #{stem_block_forward.6} parent=39 // pred_fallthru
        _
      // Predicated region
      $region45: #{stem_block_forward.6} parent=39 // pred_check
        %p542 = pneg %p112
      $region46: #{stem_block_forward.6} parent=39 // pred_check_branch
        %544 = sbr.rel (%p542) target = $region48
      $region47: #{stem_block_forward.6} parent=39 // pred_region
        %p545 = scmp.lt.s32.totalorder %s16, 1
        %s546 = scalar_select %p545, %s16, 1
        %s547 = smul.addr %s546, 2
        %s548 = scalar_lea.vmem %s3, %s547
      $region48: #{stem_block_forward.6} parent=39 // pred_fallthru
        _
    $region40: #{stem_block_forward.6} parent=5 // pred_fallthru
      _
  $region6: #{stem_block_forward.6} parent=0 // loop_footer
    %s14 = sadd.s32 1, %s10
  $region7: #{stem_block_forward.6} parent=0 // loop_footer_branch
    %9 = sbr.rel target = $region3
  $region8: #{stem_block_forward.6} parent=0 // loop_exit
    _

// kernel: stem_block_forward.7
$region0: #{stem_block_forward.7}
  #allocation0 [shape = 'u32[]', space=smem, size = 0x4, offset = 0x4, fixed_abs, tag = 'smem constant byte address 0x4 - core index']
  #allocation1 [shape = 'u32[144,128]{1,0:T(1,128)}', space=vmem, size = 0x12000, scoped, tag = 'internal scratch']
  %s0 = inlined_call_operand.vmem [shape: f32[128,128], index: 0, kind: input, shape index: {}]
  %s1 = inlined_call_operand.vmem [shape: f32[1,128], index: 1, kind: input, shape index: {}]
  %s2 = inlined_call_operand.vmem [shape: f32[1,128], index: 2, kind: input, shape index: {}]
  %s3 = inlined_call_operand.vmem [shape: bf16[128,128], index: 3, kind: input, shape index: {}]
  %s4 = inlined_call_operand.vmem [shape: bf16[128,128], index: 4, kind: output, shape index: {0}]
  %s5 = inlined_call_operand.vmem [shape: f32[128,128], index: 5, kind: output, shape index: {1}]
  %s6 = inlined_call_operand.vmem [shape: f32[2,2,128], index: 6, kind: output, shape index: {2}]
  %7 = xla_tuple %s4, %s5, %s6
  %s8 = sld [smem:[#allocation0]]
  $region65: #{stem_block_forward.7} parent=0
    _
  %s10 = ssub.s32 1, %s8
  %s11 = scalar_select 0, %s10, %s8
  loop: start=0, step=1, limit=4
  $region2: #{stem_block_forward.7} parent=0 // loop_pre_header
    _
  $region3: #{stem_block_forward.7} parent=0 // loop_header
    %s13 = sphi 0, %s17
    %p14 = scmp.ge.s32.totalorder %s13, 4
    %s23 = sphi 0, %s25
    %s26 = sphi 0, %s23
    %s27 = sphi 0, %s26
    %s43 = sphi 0, %s27
    %s47 = sphi 0, %s47
    %s49 = sphi 0, %s47
    %s50 = sphi 0, %s49
    %s64 = sphi 0, %s50
    %s68 = sphi 0, %s68
    %s70 = sphi 0, %s68
    %s71 = sphi 0, %s70
    %s85 = sphi 0, %s71
    %s89 = sphi 0, %s89
    %s91 = sphi 0, %s89
    %s92 = sphi 0, %s91
    %s106 = sphi 0, %s92
    %s112 = sphi 0, %s114
    %s115 = sphi 0, %s112
    %s116 = sphi 0, %s115
    %s132 = sphi 0, %s116
    %s138 = sphi 0, %s140
    %s141 = sphi 0, %s138
    %s142 = sphi 0, %s141
    %s158 = sphi 0, %s142
    %s164 = sphi 0, %s166
    %s167 = sphi 0, %s164
    %s168 = sphi 0, %s167
    %s184 = sphi 0, %s168
  $region4: #{stem_block_forward.7} parent=0 // loop_header_branch
    %16 = sbr.rel (%p14) target = $region8
  $region5: #{stem_block_forward.7} parent=0 // loop_body
    %s18 = ssub.s32 %s13, 1
    %s19 = ssub.s32 %s13, 2
    %s20 = sadd.s32 %s13, 1
    %s21 = ssub.s32 %s13, %s20
    %p22 = scmp.eq.s32.totalorder %s21, 0
    %s24 = sadd.s32 %s23, 1
    %s25 = scalar_select %p22, %s23, %s24
    %p28 = pneg %p22
    %p29 = scmp.eq.s32.totalorder %s13, 1
    %p30 = por %p28, %p29
    %p31 = scmp.ne.s32.totalorder %s23, %s26
    %p32 = scmp.eq.s32.totalorder %s13, 0
    %p33 = por %p31, %p32
    %p34 = scmp.ne.s32.totalorder %s23, %s26
    %p35 = scmp.eq.s32.totalorder %s18, 1
    %p36 = por %p34, %p35
    %p37 = scmp.ne.s32.totalorder %s26, %s27
    %p38 = scmp.eq.s32.totalorder %s18, 0
    %p39 = por %p37, %p38
    %p40 = scmp.ne.s32.totalorder %s26, %s27
    %p41 = scmp.eq.s32.totalorder %s19, 1
    %p42 = por %p40, %p41
    %p44 = scmp.ne.s32.totalorder %s27, %s43
    %p45 = scmp.eq.s32.totalorder %s19, 0
    %p46 = por %p44, %p45
    %s48 = sadd.s32 %s47, 1
    %p51 = scmp.eq.s32.totalorder %s13, 1
    %p52 = scmp.ne.s32.totalorder %s47, %s49
    %p53 = scmp.eq.s32.totalorder %s13, 0
    %p54 = por %p52, %p53
    %p55 = scmp.ne.s32.totalorder %s47, %s49
    %p56 = scmp.eq.s32.totalorder %s18, 1
    %p57 = por %p55, %p56
    %p58 = scmp.ne.s32.totalorder %s49, %s50
    %p59 = scmp.eq.s32.totalorder %s18, 0
    %p60 = por %p58, %p59
    %p61 = scmp.ne.s32.totalorder %s49, %s50
    %p62 = scmp.eq.s32.totalorder %s19, 1
    %p63 = por %p61, %p62
    %p65 = scmp.ne.s32.totalorder %s50, %s64
    %p66 = scmp.eq.s32.totalorder %s19, 0
    %p67 = por %p65, %p66
    %s69 = sadd.s32 %s68, 1
    %p72 = scmp.eq.s32.totalorder %s13, 1
    %p73 = scmp.ne.s32.totalorder %s68, %s70
    %p74 = scmp.eq.s32.totalorder %s13, 0
    %p75 = por %p73, %p74
    %p76 = scmp.ne.s32.totalorder %s68, %s70
    %p77 = scmp.eq.s32.totalorder %s18, 1
    %p78 = por %p76, %p77
    %p79 = scmp.ne.s32.totalorder %s70, %s71
    %p80 = scmp.eq.s32.totalorder %s18, 0
    %p81 = por %p79, %p80
    %p82 = scmp.ne.s32.totalorder %s70, %s71
    %p83 = scmp.eq.s32.totalorder %s19, 1
    %p84 = por %p82, %p83
    %p86 = scmp.ne.s32.totalorder %s71, %s85
    %p87 = scmp.eq.s32.totalorder %s19, 0
    %p88 = por %p86, %p87
    %s90 = sadd.s32 %s89, 1
    %p93 = scmp.eq.s32.totalorder %s13, 1
    %p94 = scmp.ne.s32.totalorder %s89, %s91
    %p95 = scmp.eq.s32.totalorder %s13, 0
    %p96 = por %p94, %p95
    %p97 = scmp.ne.s32.totalorder %s89, %s91
    %p98 = scmp.eq.s32.totalorder %s18, 1
    %p99 = por %p97, %p98
    %p100 = scmp.ne.s32.totalorder %s91, %s92
    %p101 = scmp.eq.s32.totalorder %s18, 0
    %p102 = por %p100, %p101
    %p103 = scmp.ne.s32.totalorder %s91, %s92
    %p104 = scmp.eq.s32.totalorder %s19, 1
    %p105 = por %p103, %p104
    %p107 = scmp.ne.s32.totalorder %s92, %s106
    %p108 = scmp.eq.s32.totalorder %s19, 0
    %p109 = por %p107, %p108
    %s110 = ssub.s32 %s13, %s20
    %p111 = scmp.eq.s32.totalorder %s110, 0
    %s113 = sadd.s32 %s112, 1
    %s114 = scalar_select %p111, %s112, %s113
    %p117 = pneg %p111
    %p118 = scmp.eq.s32.totalorder %s13, 1
    %p119 = por %p117, %p118
    %p120 = scmp.ne.s32.totalorder %s112, %s115
    %p121 = scmp.eq.s32.totalorder %s13, 0
    %p122 = por %p120, %p121
    %p123 = scmp.ne.s32.totalorder %s112, %s115
    %p124 = scmp.eq.s32.totalorder %s18, 1
    %p125 = por %p123, %p124
    %p126 = scmp.ne.s32.totalorder %s115, %s116
    %p127 = scmp.eq.s32.totalorder %s18, 0
    %p128 = por %p126, %p127
    %p129 = scmp.ne.s32.totalorder %s115, %s116
    %p130 = scmp.eq.s32.totalorder %s19, 1
    %p131 = por %p129, %p130
    %p133 = scmp.ne.s32.totalorder %s116, %s132
    %p134 = scmp.eq.s32.totalorder %s19, 0
    %p135 = por %p133, %p134
    %s136 = ssub.s32 %s13, %s20
    %p137 = scmp.eq.s32.totalorder %s136, 0
    %s139 = sadd.s32 %s138, 1
    %s140 = scalar_select %p137, %s138, %s139
    %p143 = pneg %p137
    %p144 = scmp.eq.s32.totalorder %s13, 1
    %p145 = por %p143, %p144
    %p146 = scmp.ne.s32.totalorder %s138, %s141
    %p147 = scmp.eq.s32.totalorder %s13, 0
    %p148 = por %p146, %p147
    %p149 = scmp.ne.s32.totalorder %s138, %s141
    %p150 = scmp.eq.s32.totalorder %s18, 1
    %p151 = por %p149, %p150
    %p152 = scmp.ne.s32.totalorder %s141, %s142
    %p153 = scmp.eq.s32.totalorder %s18, 0
    %p154 = por %p152, %p153
    %p155 = scmp.ne.s32.totalorder %s141, %s142
    %p156 = scmp.eq.s32.totalorder %s19, 1
    %p157 = por %p155, %p156
    %p159 = scmp.ne.s32.totalorder %s142, %s158
    %p160 = scmp.eq.s32.totalorder %s19, 0
    %p161 = por %p159, %p160
    %s162 = ssub.s32 %s13, %s20
    %p163 = scmp.eq.s32.totalorder %s162, 0
    %s165 = sadd.s32 %s164, 1
    %s166 = scalar_select %p163, %s164, %s165
    %p169 = pneg %p163
    %p170 = scmp.eq.s32.totalorder %s13, 1
    %p171 = por %p169, %p170
    %p172 = scmp.ne.s32.totalorder %s164, %s167
    %p173 = scmp.eq.s32.totalorder %s13, 0
    %p174 = por %p172, %p173
    %p175 = scmp.ne.s32.totalorder %s164, %s167
    %p176 = scmp.eq.s32.totalorder %s18, 1
    %p177 = por %p175, %p176
    %p178 = scmp.ne.s32.totalorder %s167, %s168
    %p179 = scmp.eq.s32.totalorder %s18, 0
    %p180 = por %p178, %p179
    %p181 = scmp.ne.s32.totalorder %s167, %s168
    %p182 = scmp.eq.s32.totalorder %s19, 1
    %p183 = por %p181, %p182
    %p185 = scmp.ne.s32.totalorder %s168, %s184
    %p186 = scmp.eq.s32.totalorder %s19, 0
    %p187 = por %p185, %p186
    %p188 = scmp.le.s32.totalorder 1, %s13
    %p189 = scmp.lt.s32.totalorder %s13, 3
    %p190 = pnand %p188, %p189
    %p191 = pneg %p190
    // Predicated region
    $region9: #{stem_block_forward.7} parent=5 // pred_check
      _
    $region10: #{stem_block_forward.7} parent=5 // pred_check_branch
      %193 = sbr.rel (%p190) target = $region12
    $region11: #{stem_block_forward.7} parent=5 // pred_region
      %s194 = ssub.s32 %s13, 1
      // Predicated region
      $region13: #{stem_block_forward.7} parent=11 // pred_check
        %p195 = pneg %p60
      $region14: #{stem_block_forward.7} parent=11 // pred_check_branch
        %197 = sbr.rel (%p195) target = $region16
      $region15: #{stem_block_forward.7} parent=11 // pred_region
        _
      $region16: #{stem_block_forward.7} parent=11 // pred_fallthru
        _
      // Predicated region
      $region17: #{stem_block_forward.7} parent=11 // pred_check
        %p198 = pneg %p81
      $region18: #{stem_block_forward.7} parent=11 // pred_check_branch
        %200 = sbr.rel (%p198) target = $region20
      $region19: #{stem_block_forward.7} parent=11 // pred_region
        _
      $region20: #{stem_block_forward.7} parent=11 // pred_fallthru
        _
      // Predicated region
      $region21: #{stem_block_forward.7} parent=11 // pred_check
        %p201 = pneg %p102
      $region22: #{stem_block_forward.7} parent=11 // pred_check_branch
        %203 = sbr.rel (%p201) target = $region24
      $region23: #{stem_block_forward.7} parent=11 // pred_region
        _
      $region24: #{stem_block_forward.7} parent=11 // pred_fallthru
        _
    $region12: #{stem_block_forward.7} parent=5 // pred_fallthru
      _
    %p204 = scmp.lt.s32.totalorder %s13, 2
    // Predicated region
    $region25: #{stem_block_forward.7} parent=5 // pred_check
      %p205 = pneg %p204
    $region26: #{stem_block_forward.7} parent=5 // pred_check_branch
      %207 = sbr.rel (%p205) target = $region28
    $region27: #{stem_block_forward.7} parent=5 // pred_region
      // Predicated region
      $region29: #{stem_block_forward.7} parent=27 // pred_check
        %p208 = pneg %p33
      $region30: #{stem_block_forward.7} parent=27 // pred_check_branch
        %210 = sbr.rel (%p208) target = $region32
      $region31: #{stem_block_forward.7} parent=27 // pred_region
        %s211 = smul.u32 8, %s13
        %p212 = scmp.lt.s32.totalorder %s211, 15
        %s213 = scalar_select %p212, %s211, 15
        %s214 = smul.addr %s213, 8
        %s215 = scalar_lea.vmem %s0, %s214
        %s216 = smul.u32 8, %s13
      $region32: #{stem_block_forward.7} parent=27 // pred_fallthru
        _
    $region28: #{stem_block_forward.7} parent=5 // pred_fallthru
      _
    %p217 = scmp.le.s32.totalorder 1, %s13
    %p218 = scmp.lt.s32.totalorder %s13, 3
    %p219 = pnand %p217, %p218
    %p220 = pneg %p219
    // Predicated region
    $region33: #{stem_block_forward.7} parent=5 // pred_check
      _
    $region34: #{stem_block_forward.7} parent=5 // pred_check_branch
      %222 = sbr.rel (%p219) target = $region36
    $region35: #{stem_block_forward.7} parent=5 // pred_region
      %s223 = ssub.s32 %s13, 1
      %s224 = smul.u32 8, %s18
      %p225 = scmp.lt.s32.totalorder %s224, 15
      %s226 = scalar_select %p225, %s224, 15
      %s227 = smul.addr %s226, 8
      %s228 = scalar_lea.vmem %s0, %s227
      %p229 = pneg %p39
      %p230 = pneg %p36
      %p231 = pneg %p60
      %p232 = pneg %p57
      %p233 = pneg %p81
      %p234 = pneg %p78
      %p235 = pneg %p102
      %p236 = pneg %p99
      %p237 = pneg %p128
      %p238 = pneg %p125
      %s239 = smul.u32 8, %s18
      %p240 = scmp.lt.s32.totalorder %s239, 15
      %s241 = scalar_select %p240, %s239, 15
      %s242 = smul.addr %s241, 4
      %s243 = scalar_lea.vmem %s4, %s242
      %p244 = pneg %p154
      %p245 = pneg %p151
      %s246 = smul.u32 8, %s18
      %p247 = scmp.lt.s32.totalorder %s246, 15
      %s248 = scalar_select %p247, %s246, 15
      %s249 = smul.addr %s248, 8
      %s250 = scalar_lea.vmem %s5, %s249
      %p251 = pneg %p180
      %p252 = pneg %p177
      %p253 = scmp.lt.s32.totalorder %s18, 1
      %s254 = scalar_select %p253, %s18, 1
      %s255 = smul.addr %s254, 2
      %s256 = scalar_lea.vmem %s6, %s255
      %s257 = smul.u32 8, %s18
      %p258 = scmp.lt.s32.totalorder %s257, 15
      %s259 = scalar_select %p258, %s257, 15
      %s260 = smul.addr %s259, 8
      %s261 = scalar_lea.vmem %s0, %s260
      %s262 = smul.u32 8, %s18
      %s263 = smul.u32 8, %s18
      %p264 = scmp.lt.s32.totalorder %s263, 15
      %s265 = scalar_select %p264, %s263, 15
      %s266 = smul.addr %s265, 4
      %s267 = scalar_lea.vmem %s4, %s266
      %s268 = smul.u32 8, %s18
      %s269 = smul.u32 8, %s18
      %p270 = scmp.lt.s32.totalorder %s269, 15
      %s271 = scalar_select %p270, %s269, 15
      %s272 = smul.addr %s271, 8
      %s273 = scalar_lea.vmem %s5, %s272
      %s274 = smul.u32 8, %s18
      %p275 = scmp.lt.s32.totalorder %s18, 1
      %s276 = scalar_select %p275, %s18, 1
      %s277 = smul.addr %s276, 2
      %s278 = scalar_lea.vmem %s6, %s277
      %v280 = vld [vmem:[%s261] sm:$0xff]
      %v281 = vld [vmem:[%s261 + $0x8] sm:$0xff]
      %v282 = vld [vmem:[%s261 + $0x10] sm:$0xff]
      %v283 = vld [vmem:[%s261 + $0x18] sm:$0xff]
      %v284 = vld [vmem:[%s261 + $0x20] sm:$0xff]
      %v285 = vld [vmem:[%s261 + $0x28] sm:$0xff]
      %v286 = vld [vmem:[%s261 + $0x30] sm:$0xff]
      %v287 = vld [vmem:[%s261 + $0x38] sm:$0xff]
      %v288 = vld [vmem:[%s1] sm:$0x1]
      %v290 = vlaneseq
      %v291 = vshrl.u32 %v290, 7
      %v292 = vsub.s32 0, %v291
      %v293 = vrot.slane %v288, %v292
      %v295 = vmul.f32 %v280, %v293
      %v296 = vmul.f32 %v281, %v293
      %v297 = vmul.f32 %v282, %v293
      %v298 = vmul.f32 %v283, %v293
      %v299 = vmul.f32 %v284, %v293
      %v300 = vmul.f32 %v285, %v293
      %v301 = vmul.f32 %v286, %v293
      %v302 = vmul.f32 %v287, %v293
      %v303 = vld [vmem:[%s2] sm:$0x1]
      %v305 = vlaneseq
      %v306 = vshrl.u32 %v305, 7
      %v307 = vsub.s32 0, %v306
      %v308 = vrot.slane %v303, %v307
      %v310 = vadd.f32 %v295, %v308
      %v311 = vadd.f32 %v296, %v308
      %v312 = vadd.f32 %v297, %v308
      %v313 = vadd.f32 %v298, %v308
      %v314 = vadd.f32 %v299, %v308
      %v315 = vadd.f32 %v300, %v308
      %v316 = vadd.f32 %v301, %v308
      %v317 = vadd.f32 %v302, %v308
      %v318 = vmax.f32 %v310, 0.0
      %v319 = vmax.f32 %v311, 0.0
      %v320 = vmax.f32 %v312, 0.0
      %v321 = vmax.f32 %v313, 0.0
      %v322 = vmax.f32 %v314, 0.0
      %v323 = vmax.f32 %v315, 0.0
      %v324 = vmax.f32 %v316, 0.0
      %v325 = vmax.f32 %v317, 0.0
      %v326 = vpack.c.bf16 %v319, %v318
      %v327 = vpack.c.bf16 %v321, %v320
      %v328 = vpack.c.bf16 %v323, %v322
      %v329 = vpack.c.bf16 %v325, %v324
      %v334 = vunpack.c.l.b16 %v326
      %v335 = vunpack.c.h.b16 %v326
      %v336 = vunpack.c.l.b16 %v327
      %v337 = vunpack.c.h.b16 %v327
      %v338 = vunpack.c.l.b16 %v328
      %v339 = vunpack.c.h.b16 %v328
      %v340 = vunpack.c.l.b16 %v329
      %v341 = vunpack.c.h.b16 %v329
      %v342 = vpack.c.b16 %v334, %v334
      %v343 = vpack.c.b16 %v335, %v335
      %v344 = vpack.c.b16 %v336, %v336
      %v345 = vpack.c.b16 %v337, %v337
      %v346 = vpack.c.b16 %v338, %v338
      %v347 = vpack.c.b16 %v339, %v339
      %v348 = vpack.c.b16 %v340, %v340
      %v349 = vpack.c.b16 %v341, %v341
      %358 = vst [vmem:[%s267] sm:$0xf] %v342
      %359 = vst [vmem:[%s267 + $0x4] sm:$0xf] %v343
      %360 = vst [vmem:[%s267 + $0x8] sm:$0xf] %v344
      %361 = vst [vmem:[%s267 + $0xc] sm:$0xf] %v345
      %362 = vst [vmem:[%s267 + $0x10] sm:$0xf] %v346
      %363 = vst [vmem:[%s267 + $0x14] sm:$0xf] %v347
      %364 = vst [vmem:[%s267 + $0x18] sm:$0xf] %v348
      %365 = vst [vmem:[%s267 + $0x1c] sm:$0xf] %v349
      %v366 = vld [vmem:[%s3] sm:$0xf]
      %v367 = vld [vmem:[%s3 + $0x4] sm:$0xf]
      %v368 = vld [vmem:[%s3 + $0x8] sm:$0xf]
      %v369 = vld [vmem:[%s3 + $0xc] sm:$0xf]
      %v370 = vld [vmem:[%s3 + $0x10] sm:$0xf]
      %v371 = vld [vmem:[%s3 + $0x14] sm:$0xf]
      %v372 = vld [vmem:[%s3 + $0x18] sm:$0xf]
      %v373 = vld [vmem:[%s3 + $0x1c] sm:$0xf]
      %v374 = vld [vmem:[%s3 + $0x20] sm:$0xf]
      %v375 = vld [vmem:[%s3 + $0x24] sm:$0xf]
      %v376 = vld [vmem:[%s3 + $0x28] sm:$0xf]
      %v377 = vld [vmem:[%s3 + $0x2c] sm:$0xf]
      %v378 = vld [vmem:[%s3 + $0x30] sm:$0xf]
      %v379 = vld [vmem:[%s3 + $0x34] sm:$0xf]
      %v380 = vld [vmem:[%s3 + $0x38] sm:$0xf]
      %v381 = vld [vmem:[%s3 + $0x3c] sm:$0xf]
      %v398 = vunpack.c.l.b16 %v366
      %v399 = vunpack.c.l.b16 %v367
      %v400 = vunpack.c.l.b16 %v368
      %v401 = vunpack.c.l.b16 %v369
      %v402 = vunpack.c.l.b16 %v370
      %v403 = vunpack.c.l.b16 %v371
      %v404 = vunpack.c.l.b16 %v372
      %v405 = vunpack.c.l.b16 %v373
      %v406 = vunpack.c.l.b16 %v374
      %v407 = vunpack.c.l.b16 %v375
      %v408 = vunpack.c.l.b16 %v376
      %v409 = vunpack.c.l.b16 %v377
      %v410 = vunpack.c.l.b16 %v378
      %v411 = vunpack.c.l.b16 %v379
      %v412 = vunpack.c.l.b16 %v380
      %v413 = vunpack.c.l.b16 %v381
      %v414 = vpack.c.b16 %v399, %v398
      %v415 = vpack.c.b16 %v401, %v400
      %v416 = vpack.c.b16 %v403, %v402
      %v417 = vpack.c.b16 %v405, %v404
      %v418 = vpack.c.b16 %v407, %v406
      %v419 = vpack.c.b16 %v409, %v408
      %v420 = vpack.c.b16 %v411, %v410
      %v421 = vpack.c.b16 %v413, %v412
      %430 = vmatprep.subr.bf16.mxu0 0
      %431 = vmatpush1.bf16.msra.mxu0 %v414
      %432 = vmatprep.subr.bf16.mxu0 0
      %433 = vmatpush1.bf16.msra.mxu0 %v415
      %434 = vmatprep.subr.bf16.mxu0 0
      %435 = vmatpush1.bf16.msra.mxu0 %v416
      %436 = vmatprep.subr.bf16.mxu0 0
      %437 = vmatpush1.bf16.msra.mxu0 %v417
      %438 = vmatprep.subr.bf16.mxu0 0
      %439 = vmatpush1.bf16.msra.mxu0 %v418
      %440 = vmatprep.subr.bf16.mxu0 0
      %441 = vmatpush1.bf16.msra.mxu0 %v419
      %442 = vmatprep.subr.bf16.mxu0 0
      %443 = vmatpush1.bf16.msra.mxu0 %v420
      %444 = vmatprep.subr.bf16.mxu0 0
      %445 = vmatpush1.bf16.msra.mxu0 %v421
      %446 = vmatprep.subr.bf16.mxu0 0
      %447 = vmatpush1.bf16.msra.mxu0 0
      %448 = vmatprep.subr.bf16.mxu0 0
      %449 = vmatpush1.bf16.msra.mxu0 0
      %450 = vmatprep.subr.bf16.mxu0 0
      %451 = vmatpush1.bf16.msra.mxu0 0
      %452 = vmatprep.subr.bf16.mxu0 0
      %453 = vmatpush1.bf16.msra.mxu0 0
      %454 = vmatprep.subr.bf16.mxu0 0
      %455 = vmatpush1.bf16.msra.mxu0 0
      %456 = vmatprep.subr.bf16.mxu0 0
      %457 = vmatpush1.bf16.msra.mxu0 0
      %458 = vmatprep.subr.bf16.mxu0 0
      %459 = vmatpush1.bf16.msra.mxu0 0
      %460 = vmatprep.subr.bf16.mxu0 0
      %461 = vmatpush1.bf16.msra.mxu0 0
      %462 = vmatprep.mubr.bf16.mxu0 0
      %463 = vmatmul.mubr.bf16.gmra.mrb[0].mxu0 %v326
      %v464 = vpop.f32.mrb[0].mxu0
      %v465 = vadd.f32 0.0, %v464
      %v466 = vpop.f32.mrb[0].mxu0
      %v467 = vpop.f32.mrb[0].mxu0
      %v468 = vadd.f32 0.0, %v467
      %v469 = vpop.f32.mrb[0].mxu0
      %470 = vmatprep.mubr.bf16.mxu0 0
      %471 = vmatmul.mubr.bf16.gmra.mrb[0].mxu0 %v327
      %v472 = vpop.f32.mrb[0].mxu0
      %v473 = vadd.f32 0.0, %v472
      %v474 = vpop.f32.mrb[0].mxu0
      %v475 = vpop.f32.mrb[0].mxu0
      %v476 = vadd.f32 0.0, %v475
      %v477 = vpop.f32.mrb[0].mxu0
      %478 = vmatprep.mubr.bf16.mxu0 0
      %479 = vmatmul.mubr.bf16.gmra.mrb[0].mxu0 %v328
      %v480 = vpop.f32.mrb[0].mxu0
      %v481 = vadd.f32 0.0, %v480
      %v482 = vpop.f32.mrb[0].mxu0
      %v483 = vpop.f32.mrb[0].mxu0
      %v484 = vadd.f32 0.0, %v483
      %v485 = vpop.f32.mrb[0].mxu0
      %486 = vmatprep.mubr.bf16.mxu0 0
      %487 = vmatmul.mubr.bf16.gmra.mrb[0].mxu0 %v329
      %v488 = vpop.f32.mrb[0].mxu0
      %v489 = vadd.f32 0.0, %v488
      %v490 = vpop.f32.mrb[0].mxu0
      %v491 = vpop.f32.mrb[0].mxu0
      %v492 = vadd.f32 0.0, %v491
      %v493 = vpop.f32.mrb[0].mxu0
      %494 = vdwg.mxu0
      %495 = vst [vmem:[%s273] sm:$0xff] %v465
      %496 = vst [vmem:[%s273 + $0x8] sm:$0xff] %v468
      %497 = vst [vmem:[%s273 + $0x10] sm:$0xff] %v473
      %498 = vst [vmem:[%s273 + $0x18] sm:$0xff] %v476
      %499 = vst [vmem:[%s273 + $0x20] sm:$0xff] %v481
      %500 = vst [vmem:[%s273 + $0x28] sm:$0xff] %v484
      %501 = vst [vmem:[%s273 + $0x30] sm:$0xff] %v489
      %502 = vst [vmem:[%s273 + $0x38] sm:$0xff] %v492
      %vm503 = vcmask 523264
      %v505 = vsel %vm503, 1.0, 0
      %507 = vmatprep.subr.mxu0 0.0
      %508 = vmatpush1.msra.mxu0 %v465
      %509 = vmatprep.subr.mxu0 0.0
      %510 = vmatpush1.msra.mxu0 %v468
      %511 = vmatprep.subr.mxu0 0.0
      %512 = vmatpush1.msra.mxu0 %v473
      %513 = vmatprep.subr.mxu0 0.0
      %514 = vmatpush1.msra.mxu0 %v476
      %515 = vmatprep.subr.mxu0 0.0
      %516 = vmatpush1.msra.mxu0 %v481
      %517 = vmatprep.subr.mxu0 0.0
      %518 = vmatpush1.msra.mxu0 %v484
      %519 = vmatprep.subr.mxu0 0.0
      %520 = vmatpush1.msra.mxu0 %v489
      %521 = vmatprep.subr.mxu0 0.0
      %522 = vmatpush1.msra.mxu0 %v492
      %523 = vmatprep.subr.mxu0 0.0
      %524 = vmatpush1.msra.mxu0 0.0
      %525 = vmatprep.subr.mxu0 0.0
      %526 = vmatpush1.msra.mxu0 0.0
      %527 = vmatprep.subr.mxu0 0.0
      %528 = vmatpush1.msra.mxu0 0.0
      %529 = vmatprep.subr.mxu0 0.0
      %530 = vmatpush1.msra.mxu0 0.0
      %531 = vmatprep.subr.mxu0 0.0
      %532 = vmatpush1.msra.mxu0 0.0
      %533 = vmatprep.subr.mxu0 0.0
      %534 = vmatpush1.msra.mxu0 0.0
      %535 = vmatprep.subr.mxu0 0.0
      %536 = vmatpush1.msra.mxu0 0.0
      %537 = vmatprep.subr.mxu0 0.0
      %538 = vmatpush1.msra.mxu0 0.0
      %539 = vmatprep.subr.mxu0 0.0
      %540 = vmatpush1.msra.mxu0 0.0
      %541 = vmatprep.subr.mxu0 0.0
      %542 = vmatpush1.msra.mxu0 0.0
      %543 = vmatprep.subr.mxu0 0.0
      %544 = vmatpush1.msra.mxu0 0.0
      %545 = vmatprep.subr.mxu0 0.0
      %546 = vmatpush1.msra.mxu0 0.0
      %547 = vmatprep.subr.mxu0 0.0
      %548 = vmatpush1.msra.mxu0 0.0
      %549 = vmatprep.subr.mxu0 0.0
      %550 = vmatpush1.msra.mxu0 0.0
      %551 = vmatprep.subr.mxu0 0.0
      %552 = vmatpush1.msra.mxu0 0.0
      %553 = vmatprep.subr.mxu0 0.0
      %554 = vmatpush1.msra.mxu0 0.0
      %555 = vmatprep.subr.mxu0 0.0
      %556 = vmatpush1.msra.mxu0 0.0
      %557 = vmatprep.subr.mxu0 0.0
      %558 = vmatpush1.msra.mxu0 0.0
      %559 = vmatprep.subr.mxu0 0.0
      %560 = vmatpush1.msra.mxu0 0.0
      %561 = vmatprep.subr.mxu0 0.0
      %562 = vmatpush1.msra.mxu0 0.0
      %563 = vmatprep.subr.mxu0 0.0
      %564 = vmatpush1.msra.mxu0 0.0
      %565 = vmatprep.subr.mxu0 0.0
      %566 = vmatpush1.msra.mxu0 0.0
      %567 = vmatprep.subr.mxu0 0.0
      %568 = vmatpush1.msra.mxu0 0.0
      %569 = vmatprep.subr.mxu0 0.0
      %570 = vmatpush1.msra.mxu0 0.0
      %571 = vmatprep.mubr.f32.mxu0 0.0
      %572 = vmatmul.mubr.f32.gmra.mrb[0].mxu0 %v505
      %v573 = vpop.f32.mrb[0].mxu0
      %v574 = vadd.f32 0.0, %v573
      %v575 = vpop.f32.mrb[0].mxu0
      %576 = vdwg.mxu0
      %v577 = vmul.f32 %v465, %v465
      %v578 = vmul.f32 %v468, %v468
      %v579 = vmul.f32 %v473, %v473
      %v580 = vmul.f32 %v476, %v476
      %v581 = vmul.f32 %v481, %v481
      %v582 = vmul.f32 %v484, %v484
      %v583 = vmul.f32 %v489, %v489
      %v584 = vmul.f32 %v492, %v492
      %585 = vmatprep.subr.mxu0 0.0
      %586 = vmatpush1.msra.mxu0 %v577
      %587 = vmatprep.subr.mxu0 0.0
      %588 = vmatpush1.msra.mxu0 %v578
      %589 = vmatprep.subr.mxu0 0.0
      %590 = vmatpush1.msra.mxu0 %v579
      %591 = vmatprep.subr.mxu0 0.0
      %592 = vmatpush1.msra.mxu0 %v580
      %593 = vmatprep.subr.mxu0 0.0
      %594 = vmatpush1.msra.mxu0 %v581
      %595 = vmatprep.subr.mxu0 0.0
      %596 = vmatpush1.msra.mxu0 %v582
      %597 = vmatprep.subr.mxu0 0.0
      %598 = vmatpush1.msra.mxu0 %v583
      %599 = vmatprep.subr.mxu0 0.0
      %600 = vmatpush1.msra.mxu0 %v584
      %601 = vmatprep.subr.mxu0 0.0
      %602 = vmatpush1.msra.mxu0 0.0
      %603 = vmatprep.subr.mxu0 0.0
      %604 = vmatpush1.msra.mxu0 0.0
      %605 = vmatprep.subr.mxu0 0.0
      %606 = vmatpush1.msra.mxu0 0.0
      %607 = vmatprep.subr.mxu0 0.0
      %608 = vmatpush1.msra.mxu0 0.0
      %609 = vmatprep.subr.mxu0 0.0
      %610 = vmatpush1.msra.mxu0 0.0
      %611 = vmatprep.subr.mxu0 0.0
      %612 = vmatpush1.msra.mxu0 0.0
      %613 = vmatprep.subr.mxu0 0.0
      %614 = vmatpush1.msra.mxu0 0.0
      %615 = vmatprep.subr.mxu0 0.0
      %616 = vmatpush1.msra.mxu0 0.0
      %617 = vmatprep.subr.mxu0 0.0
      %618 = vmatpush1.msra.mxu0 0.0
      %619 = vmatprep.subr.mxu0 0.0
      %620 = vmatpush1.msra.mxu0 0.0
      %621 = vmatprep.subr.mxu0 0.0
      %622 = vmatpush1.msra.mxu0 0.0
      %623 = vmatprep.subr.mxu0 0.0
      %624 = vmatpush1.msra.mxu0 0.0
      %625 = vmatprep.subr.mxu0 0.0
      %626 = vmatpush1.msra.mxu0 0.0
      %627 = vmatprep.subr.mxu0 0.0
      %628 = vmatpush1.msra.mxu0 0.0
      %629 = vmatprep.subr.mxu0 0.0
      %630 = vmatpush1.msra.mxu0 0.0
      %631 = vmatprep.subr.mxu0 0.0
      %632 = vmatpush1.msra.mxu0 0.0
      %633 = vmatprep.subr.mxu0 0.0
      %634 = vmatpush1.msra.mxu0 0.0
      %635 = vmatprep.subr.mxu0 0.0
      %636 = vmatpush1.msra.mxu0 0.0
      %637 = vmatprep.subr.mxu0 0.0
      %638 = vmatpush1.msra.mxu0 0.0
      %639 = vmatprep.subr.mxu0 0.0
      %640 = vmatpush1.msra.mxu0 0.0
      %641 = vmatprep.subr.mxu0 0.0
      %642 = vmatpush1.msra.mxu0 0.0
      %643 = vmatprep.subr.mxu0 0.0
      %644 = vmatpush1.msra.mxu0 0.0
      %645 = vmatprep.subr.mxu0 0.0
      %646 = vmatpush1.msra.mxu0 0.0
      %647 = vmatprep.subr.mxu0 0.0
      %648 = vmatpush1.msra.mxu0 0.0
      %649 = vmatprep.mubr.f32.mxu0 0.0
      %650 = vmatmul.mubr.f32.gmra.mrb[0].mxu0 %v505
      %v651 = vpop.f32.mrb[0].mxu0
      %v652 = vadd.f32 0.0, %v651
      %v653 = vpop.f32.mrb[0].mxu0
      %654 = vdwg.mxu0
      %v656 = vrot.slane %v652, 7
      %vm658 = vcmask 1040384
      %v659 = vsel %vm658, %v574, %v656
      %660 = vst [vmem:[%s278] sm:$0x3] %v659
      %s661 = smul.u32 8, %s18
      %p662 = scmp.lt.s32.totalorder %s661, 15
      %s663 = scalar_select %p662, %s661, 15
      %s664 = smul.addr %s663, 4
      %s665 = scalar_lea.vmem %s4, %s664
      %s666 = smul.u32 8, %s18
      %p667 = scmp.lt.s32.totalorder %s666, 15
      %s668 = scalar_select %p667, %s666, 15
      %s669 = smul.addr %s668, 8
      %s670 = scalar_lea.vmem %s5, %s669
      %p671 = scmp.lt.s32.totalorder %s18, 1
      %s672 = scalar_select %p671, %s18, 1
      %s673 = smul.addr %s672, 2
      %s674 = scalar_lea.vmem %s6, %s673
      // Predicated region
      $region37: #{stem_block_forward.7} parent=35 // pred_check
        %p675 = pneg %p125
      $region38: #{stem_block_forward.7} parent=35 // pred_check_branch
        %677 = sbr.rel (%p675) target = $region40
      $region39: #{stem_block_forward.7} parent=35 // pred_region
        %s678 = smul.u32 8, %s18
      $region40: #{stem_block_forward.7} parent=35 // pred_fallthru
        _
      // Predicated region
      $region41: #{stem_block_forward.7} parent=35 // pred_check
        %p679 = pneg %p151
      $region42: #{stem_block_forward.7} parent=35 // pred_check_branch
        %681 = sbr.rel (%p679) target = $region44
      $region43: #{stem_block_forward.7} parent=35 // pred_region
        %s682 = smul.u32 8, %s18
      $region44: #{stem_block_forward.7} parent=35 // pred_fallthru
        _
      // Predicated region
      $region45: #{stem_block_forward.7} parent=35 // pred_check
        %p683 = pneg %p177
      $region46: #{stem_block_forward.7} parent=35 // pred_check_branch
        %685 = sbr.rel (%p683) target = $region48
      $region47: #{stem_block_forward.7} parent=35 // pred_region
        _
      $region48: #{stem_block_forward.7} parent=35 // pred_fallthru
        _
    $region36: #{stem_block_forward.7} parent=5 // pred_fallthru
      _
    %p686 = scmp.le.s32.totalorder 2, %s13
    // Predicated region
    $region49: #{stem_block_forward.7} parent=5 // pred_check
      %p687 = pneg %p686
    $region50: #{stem_block_forward.7} parent=5 // pred_check_branch
      %689 = sbr.rel (%p687) target = $region52
    $region51: #{stem_block_forward.7} parent=5 // pred_region
      %s690 = ssub.s32 %s13, 2
      // Predicated region
      $region53: #{stem_block_forward.7} parent=51 // pred_check
        %p691 = pneg %p131
      $region54: #{stem_block_forward.7} parent=51 // pred_check_branch
        %693 = sbr.rel (%p691) target = $region56
      $region55: #{stem_block_forward.7} parent=51 // pred_region
        %s694 = smul.u32 8, %s19
        %p695 = scmp.lt.s32.totalorder %s694, 15
        %s696 = scalar_select %p695, %s694, 15
        %s697 = smul.addr %s696, 4
        %s698 = scalar_lea.vmem %s4, %s697
      $region56: #{stem_block_forward.7} parent=51 // pred_fallthru
        _
      // Predicated region
      $region57: #{stem_block_forward.7} parent=51 // pred_check
        %p699 = pneg %p157
      $region58: #{stem_block_forward.7} parent=51 // pred_check_branch
        %701 = sbr.rel (%p699) target = $region60
      $region59: #{stem_block_forward.7} parent=51 // pred_region
        %s702 = smul.u32 8, %s19
        %p703 = scmp.lt.s32.totalorder %s702, 15
        %s704 = scalar_select %p703, %s702, 15
        %s705 = smul.addr %s704, 8
        %s706 = scalar_lea.vmem %s5, %s705
      $region60: #{stem_block_forward.7} parent=51 // pred_fallthru
        _
      // Predicated region
      $region61: #{stem_block_forward.7} parent=51 // pred_check
        %p707 = pneg %p183
      $region62: #{stem_block_forward.7} parent=51 // pred_check_branch
        %709 = sbr.rel (%p707) target = $region64
      $region63: #{stem_block_forward.7} parent=51 // pred_region
        %p710 = scmp.lt.s32.totalorder %s19, 1
        %s711 = scalar_select %p710, %s19, 1
        %s712 = smul.addr %s711, 2
        %s713 = scalar_lea.vmem %s6, %s712
      $region64: #{stem_block_forward.7} parent=51 // pred_fallthru
        _
    $region52: #{stem_block_forward.7} parent=5 // pred_fallthru
      _
  $region6: #{stem_block_forward.7} parent=0 // loop_footer
    %s17 = sadd.s32 1, %s13
  $region7: #{stem_block_forward.7} parent=0 // loop_footer_branch
    %12 = sbr.rel target = $region3
  $region8: #{stem_block_forward.7} parent=0 // loop_exit
    _

// kernel: stem_block_forward.9
$region0: #{stem_block_forward.9}
  #allocation0 [shape = 'u32[]', space=smem, size = 0x4, offset = 0x4, fixed_abs, tag = 'smem constant byte address 0x4 - core index']
  #allocation1 [shape = 'u32[144,128]{1,0:T(1,128)}', space=vmem, size = 0x12000, scoped, tag = 'internal scratch']
  %s0 = inlined_call_operand.vmem [shape: bf16[32,256], index: 0, kind: input, shape index: {}]
  %s1 = inlined_call_operand.vmem [shape: bf16[256,128], index: 1, kind: input, shape index: {}]
  %s2 = inlined_call_operand.vmem [shape: f32[32,128], index: 2, kind: output, shape index: {0}]
  %s3 = inlined_call_operand.vmem [shape: f32[2,2,128], index: 3, kind: output, shape index: {1}]
  %4 = xla_tuple %s2, %s3
  %s5 = sld [smem:[#allocation0]]
  $region49: #{stem_block_forward.9} parent=0
    _
  %s7 = ssub.s32 1, %s5
  %s8 = scalar_select 0, %s7, %s5
  loop: start=0, step=1, limit=4
  $region2: #{stem_block_forward.9} parent=0 // loop_pre_header
    _
  $region3: #{stem_block_forward.9} parent=0 // loop_header
    %s10 = sphi 0, %s14
    %p11 = scmp.ge.s32.totalorder %s10, 4
    %s20 = sphi 0, %s22
    %s23 = sphi 0, %s20
    %s24 = sphi 0, %s23
    %s40 = sphi 0, %s24
    %s44 = sphi 0, %s44
    %s46 = sphi 0, %s44
    %s47 = sphi 0, %s46
    %s61 = sphi 0, %s47
    %s67 = sphi 0, %s69
    %s70 = sphi 0, %s67
    %s71 = sphi 0, %s70
    %s87 = sphi 0, %s71
    %s93 = sphi 0, %s95
    %s96 = sphi 0, %s93
    %s97 = sphi 0, %s96
    %s113 = sphi 0, %s97
  $region4: #{stem_block_forward.9} parent=0 // loop_header_branch
    %13 = sbr.rel (%p11) target = $region8
  $region5: #{stem_block_forward.9} parent=0 // loop_body
    %s15 = ssub.s32 %s10, 1
    %s16 = ssub.s32 %s10, 2
    %s17 = sadd.s32 %s10, 1
    %s18 = ssub.s32 %s10, %s17
    %p19 = scmp.eq.s32.totalorder %s18, 0
    %s21 = sadd.s32 %s20, 1
    %s22 = scalar_select %p19, %s20, %s21
    %p25 = pneg %p19
    %p26 = scmp.eq.s32.totalorder %s10, 1
    %p27 = por %p25, %p26
    %p28 = scmp.ne.s32.totalorder %s20, %s23
    %p29 = scmp.eq.s32.totalorder %s10, 0
    %p30 = por %p28, %p29
    %p31 = scmp.ne.s32.totalorder %s20, %s23
    %p32 = scmp.eq.s32.totalorder %s15, 1
    %p33 = por %p31, %p32
    %p34 = scmp.ne.s32.totalorder %s23, %s24
    %p35 = scmp.eq.s32.totalorder %s15, 0
    %p36 = por %p34, %p35
    %p37 = scmp.ne.s32.totalorder %s23, %s24
    %p38 = scmp.eq.s32.totalorder %s16, 1
    %p39 = por %p37, %p38
    %p41 = scmp.ne.s32.totalorder %s24, %s40
    %p42 = scmp.eq.s32.totalorder %s16, 0
    %p43 = por %p41, %p42
    %s45 = sadd.s32 %s44, 1
    %p48 = scmp.eq.s32.totalorder %s10, 1
    %p49 = scmp.ne.s32.totalorder %s44, %s46
    %p50 = scmp.eq.s32.totalorder %s10, 0
    %p51 = por %p49, %p50
    %p52 = scmp.ne.s32.totalorder %s44, %s46
    %p53 = scmp.eq.s32.totalorder %s15, 1
    %p54 = por %p52, %p53
    %p55 = scmp.ne.s32.totalorder %s46, %s47
    %p56 = scmp.eq.s32.totalorder %s15, 0
    %p57 = por %p55, %p56
    %p58 = scmp.ne.s32.totalorder %s46, %s47
    %p59 = scmp.eq.s32.totalorder %s16, 1
    %p60 = por %p58, %p59
    %p62 = scmp.ne.s32.totalorder %s47, %s61
    %p63 = scmp.eq.s32.totalorder %s16, 0
    %p64 = por %p62, %p63
    %s65 = ssub.s32 %s10, %s17
    %p66 = scmp.eq.s32.totalorder %s65, 0
    %s68 = sadd.s32 %s67, 1
    %s69 = scalar_select %p66, %s67, %s68
    %p72 = pneg %p66
    %p73 = scmp.eq.s32.totalorder %s10, 1
    %p74 = por %p72, %p73
    %p75 = scmp.ne.s32.totalorder %s67, %s70
    %p76 = scmp.eq.s32.totalorder %s10, 0
    %p77 = por %p75, %p76
    %p78 = scmp.ne.s32.totalorder %s67, %s70
    %p79 = scmp.eq.s32.totalorder %s15, 1
    %p80 = por %p78, %p79
    %p81 = scmp.ne.s32.totalorder %s70, %s71
    %p82 = scmp.eq.s32.totalorder %s15, 0
    %p83 = por %p81, %p82
    %p84 = scmp.ne.s32.totalorder %s70, %s71
    %p85 = scmp.eq.s32.totalorder %s16, 1
    %p86 = por %p84, %p85
    %p88 = scmp.ne.s32.totalorder %s71, %s87
    %p89 = scmp.eq.s32.totalorder %s16, 0
    %p90 = por %p88, %p89
    %s91 = ssub.s32 %s10, %s17
    %p92 = scmp.eq.s32.totalorder %s91, 0
    %s94 = sadd.s32 %s93, 1
    %s95 = scalar_select %p92, %s93, %s94
    %p98 = pneg %p92
    %p99 = scmp.eq.s32.totalorder %s10, 1
    %p100 = por %p98, %p99
    %p101 = scmp.ne.s32.totalorder %s93, %s96
    %p102 = scmp.eq.s32.totalorder %s10, 0
    %p103 = por %p101, %p102
    %p104 = scmp.ne.s32.totalorder %s93, %s96
    %p105 = scmp.eq.s32.totalorder %s15, 1
    %p106 = por %p104, %p105
    %p107 = scmp.ne.s32.totalorder %s96, %s97
    %p108 = scmp.eq.s32.totalorder %s15, 0
    %p109 = por %p107, %p108
    %p110 = scmp.ne.s32.totalorder %s96, %s97
    %p111 = scmp.eq.s32.totalorder %s16, 1
    %p112 = por %p110, %p111
    %p114 = scmp.ne.s32.totalorder %s97, %s113
    %p115 = scmp.eq.s32.totalorder %s16, 0
    %p116 = por %p114, %p115
    %p117 = scmp.le.s32.totalorder 1, %s10
    %p118 = scmp.lt.s32.totalorder %s10, 3
    %p119 = pnand %p117, %p118
    %p120 = pneg %p119
    // Predicated region
    $region9: #{stem_block_forward.9} parent=5 // pred_check
      _
    $region10: #{stem_block_forward.9} parent=5 // pred_check_branch
      %122 = sbr.rel (%p119) target = $region12
    $region11: #{stem_block_forward.9} parent=5 // pred_region
      %s123 = ssub.s32 %s10, 1
      // Predicated region
      $region13: #{stem_block_forward.9} parent=11 // pred_check
        %p124 = pneg %p57
      $region14: #{stem_block_forward.9} parent=11 // pred_check_branch
        %126 = sbr.rel (%p124) target = $region16
      $region15: #{stem_block_forward.9} parent=11 // pred_region
        _
      $region16: #{stem_block_forward.9} parent=11 // pred_fallthru
        _
    $region12: #{stem_block_forward.9} parent=5 // pred_fallthru
      _
    %p127 = scmp.lt.s32.totalorder %s10, 2
    // Predicated region
    $region17: #{stem_block_forward.9} parent=5 // pred_check
      %p128 = pneg %p127
    $region18: #{stem_block_forward.9} parent=5 // pred_check_branch
      %130 = sbr.rel (%p128) target = $region20
    $region19: #{stem_block_forward.9} parent=5 // pred_region
      // Predicated region
      $region21: #{stem_block_forward.9} parent=19 // pred_check
        %p131 = pneg %p30
      $region22: #{stem_block_forward.9} parent=19 // pred_check_branch
        %133 = sbr.rel (%p131) target = $region24
      $region23: #{stem_block_forward.9} parent=19 // pred_region
        %s134 = smul.u32 2, %s10
        %p135 = scmp.lt.s32.totalorder %s134, 3
        %s136 = scalar_select %p135, %s134, 3
        %s137 = smul.addr %s136, 2
        %s138 = smul.addr %s137, 4
        %s139 = scalar_lea.vmem %s0, %s138
        %s140 = smul.u32 2, %s10
      $region24: #{stem_block_forward.9} parent=19 // pred_fallthru
        _
    $region20: #{stem_block_forward.9} parent=5 // pred_fallthru
      _
    %p141 = scmp.le.s32.totalorder 1, %s10
    %p142 = scmp.lt.s32.totalorder %s10, 3
    %p143 = pnand %p141, %p142
    %p144 = pneg %p143
    // Predicated region
    $region25: #{stem_block_forward.9} parent=5 // pred_check
      _
    $region26: #{stem_block_forward.9} parent=5 // pred_check_branch
      %146 = sbr.rel (%p143) target = $region28
    $region27: #{stem_block_forward.9} parent=5 // pred_region
      %s147 = ssub.s32 %s10, 1
      %s148 = smul.u32 2, %s15
      %p149 = scmp.lt.s32.totalorder %s148, 3
      %s150 = scalar_select %p149, %s148, 3
      %s151 = smul.addr %s150, 2
      %s152 = smul.addr %s151, 4
      %s153 = scalar_lea.vmem %s0, %s152
      %p154 = pneg %p36
      %p155 = pneg %p33
      %p156 = pneg %p57
      %p157 = pneg %p54
      %p158 = pneg %p83
      %p159 = pneg %p80
      %s160 = smul.u32 2, %s15
      %p161 = scmp.lt.s32.totalorder %s160, 3
      %s162 = scalar_select %p161, %s160, 3
      %s163 = smul.addr %s162, 8
      %s164 = scalar_lea.vmem %s2, %s163
      %p165 = pneg %p109
      %p166 = pneg %p106
      %p167 = scmp.lt.s32.totalorder %s15, 1
      %s168 = scalar_select %p167, %s15, 1
      %s169 = smul.addr %s168, 2
      %s170 = scalar_lea.vmem %s3, %s169
      %s171 = smul.u32 2, %s15
      %p172 = scmp.lt.s32.totalorder %s171, 3
      %s173 = scalar_select %p172, %s171, 3
      %s174 = smul.addr %s173, 2
      %s175 = smul.addr %s174, 4
      %s176 = scalar_lea.vmem %s0, %s175
      %s177 = smul.u32 2, %s15
      %s178 = smul.u32 2, %s15
      %p179 = scmp.lt.s32.totalorder %s178, 3
      %s180 = scalar_select %p179, %s178, 3
      %s181 = smul.addr %s180, 8
      %s182 = scalar_lea.vmem %s2, %s181
      %s183 = smul.u32 2, %s15
      %p184 = scmp.lt.s32.totalorder %s15, 1
      %s185 = scalar_select %p184, %s15, 1
      %s186 = smul.addr %s185, 2
      %s187 = scalar_lea.vmem %s3, %s186
      %v189 = vld [vmem:[%s176] sm:$0xff]
      %v190 = vld [vmem:[%s176 + $0x8] sm:$0xff]
      %v191 = vld [vmem:[%s1] sm:$0xf]
      %v192 = vld [vmem:[%s1 + $0x4] sm:$0xf]
      %v193 = vld [vmem:[%s1 + $0x8] sm:$0xf]
      %v194 = vld [vmem:[%s1 + $0xc] sm:$0xf]
      %v195 = vld [vmem:[%s1 + $0x10] sm:$0xf]
      %v196 = vld [vmem:[%s1 + $0x14] sm:$0xf]
      %v197 = vld [vmem:[%s1 + $0x18] sm:$0xf]
      %v198 = vld [vmem:[%s1 + $0x1c] sm:$0xf]
      %v199 = vld [vmem:[%s1 + $0x20] sm:$0xf]
      %v200 = vld [vmem:[%s1 + $0x24] sm:$0xf]
      %v201 = vld [vmem:[%s1 + $0x28] sm:$0xf]
      %v202 = vld [vmem:[%s1 + $0x2c] sm:$0xf]
      %v203 = vld [vmem:[%s1 + $0x30] sm:$0xf]
      %v204 = vld [vmem:[%s1 + $0x34] sm:$0xf]
      %v205 = vld [vmem:[%s1 + $0x38] sm:$0xf]
      %v206 = vld [vmem:[%s1 + $0x3c] sm:$0xf]
      %v207 = vld [vmem:[%s1 + $0x40] sm:$0xf]
      %v208 = vld [vmem:[%s1 + $0x44] sm:$0xf]
      %v209 = vld [vmem:[%s1 + $0x48] sm:$0xf]
      %v210 = vld [vmem:[%s1 + $0x4c] sm:$0xf]
      %v211 = vld [vmem:[%s1 + $0x50] sm:$0xf]
      %v212 = vld [vmem:[%s1 + $0x54] sm:$0xf]
      %v213 = vld [vmem:[%s1 + $0x58] sm:$0xf]
      %v214 = vld [vmem:[%s1 + $0x5c] sm:$0xf]
      %v215 = vld [vmem:[%s1 + $0x60] sm:$0xf]
      %v216 = vld [vmem:[%s1 + $0x64] sm:$0xf]
      %v217 = vld [vmem:[%s1 + $0x68] sm:$0xf]
      %v218 = vld [vmem:[%s1 + $0x6c] sm:$0xf]
      %v219 = vld [vmem:[%s1 + $0x70] sm:$0xf]
      %v220 = vld [vmem:[%s1 + $0x74] sm:$0xf]
      %v221 = vld [vmem:[%s1 + $0x78] sm:$0xf]
      %v222 = vld [vmem:[%s1 + $0x7c] sm:$0xf]
      %v225 = vunpack.c.l.b16 %v189
      %v226 = vunpack.c.h.b16 %v189
      %v227 = vunpack.c.l.b16 %v190
      %v228 = vunpack.c.h.b16 %v190
      %v229 = vpack.c.b16 %v227, %v225
      %v230 = vpack.c.b16 %v228, %v226
      %v265 = vunpack.c.l.b16 %v191
      %v266 = vunpack.c.l.b16 %v192
      %v267 = vunpack.c.l.b16 %v193
      %v268 = vunpack.c.l.b16 %v194
      %v269 = vunpack.c.l.b16 %v195
      %v270 = vunpack.c.l.b16 %v196
      %v271 = vunpack.c.l.b16 %v197
      %v272 = vunpack.c.l.b16 %v198
      %v273 = vunpack.c.l.b16 %v199
      %v274 = vunpack.c.l.b16 %v200
      %v275 = vunpack.c.l.b16 %v201
      %v276 = vunpack.c.l.b16 %v202
      %v277 = vunpack.c.l.b16 %v203
      %v278 = vunpack.c.l.b16 %v204
      %v279 = vunpack.c.l.b16 %v205
      %v280 = vunpack.c.l.b16 %v206
      %v281 = vunpack.c.l.b16 %v207
      %v282 = vunpack.c.l.b16 %v208
      %v283 = vunpack.c.l.b16 %v209
      %v284 = vunpack.c.l.b16 %v210
      %v285 = vunpack.c.l.b16 %v211
      %v286 = vunpack.c.l.b16 %v212
      %v287 = vunpack.c.l.b16 %v213
      %v288 = vunpack.c.l.b16 %v214
      %v289 = vunpack.c.l.b16 %v215
      %v290 = vunpack.c.l.b16 %v216
      %v291 = vunpack.c.l.b16 %v217
      %v292 = vunpack.c.l.b16 %v218
      %v293 = vunpack.c.l.b16 %v219
      %v294 = vunpack.c.l.b16 %v220
      %v295 = vunpack.c.l.b16 %v221
      %v296 = vunpack.c.l.b16 %v222
      %v297 = vpack.c.b16 %v266, %v265
      %v298 = vpack.c.b16 %v268, %v267
      %v299 = vpack.c.b16 %v270, %v269
      %v300 = vpack.c.b16 %v272, %v271
      %v301 = vpack.c.b16 %v274, %v273
      %v302 = vpack.c.b16 %v276, %v275
      %v303 = vpack.c.b16 %v278, %v277
      %v304 = vpack.c.b16 %v280, %v279
      %v305 = vpack.c.b16 %v282, %v281
      %v306 = vpack.c.b16 %v284, %v283
      %v307 = vpack.c.b16 %v286, %v285
      %v308 = vpack.c.b16 %v288, %v287
      %v309 = vpack.c.b16 %v290, %v289
      %v310 = vpack.c.b16 %v292, %v291
      %v311 = vpack.c.b16 %v294, %v293
      %v312 = vpack.c.b16 %v296, %v295
      %329 = vmatprep.subr.bf16.mxu0 0
      %330 = vmatpush1.bf16.msra.mxu0 %v297
      %331 = vmatprep.subr.bf16.mxu0 0
      %332 = vmatpush1.bf16.msra.mxu0 %v298
      %333 = vmatprep.subr.bf16.mxu0 0
      %334 = vmatpush1.bf16.msra.mxu0 %v299
      %335 = vmatprep.subr.bf16.mxu0 0
      %336 = vmatpush1.bf16.msra.mxu0 %v300
      %337 = vmatprep.subr.bf16.mxu0 0
      %338 = vmatpush1.bf16.msra.mxu0 %v301
      %339 = vmatprep.subr.bf16.mxu0 0
      %340 = vmatpush1.bf16.msra.mxu0 %v302
      %341 = vmatprep.subr.bf16.mxu0 0
      %342 = vmatpush1.bf16.msra.mxu0 %v303
      %343 = vmatprep.subr.bf16.mxu0 0
      %344 = vmatpush1.bf16.msra.mxu0 %v304
      %345 = vmatprep.subr.bf16.mxu0 0
      %346 = vmatpush1.bf16.msra.mxu0 %v305
      %347 = vmatprep.subr.bf16.mxu0 0
      %348 = vmatpush1.bf16.msra.mxu0 %v306
      %349 = vmatprep.subr.bf16.mxu0 0
      %350 = vmatpush1.bf16.msra.mxu0 %v307
      %351 = vmatprep.subr.bf16.mxu0 0
      %352 = vmatpush1.bf16.msra.mxu0 %v308
      %353 = vmatprep.subr.bf16.mxu0 0
      %354 = vmatpush1.bf16.msra.mxu0 %v309
      %355 = vmatprep.subr.bf16.mxu0 0
      %356 = vmatpush1.bf16.msra.mxu0 %v310
      %357 = vmatprep.subr.bf16.mxu0 0
      %358 = vmatpush1.bf16.msra.mxu0 %v311
      %359 = vmatprep.subr.bf16.mxu0 0
      %360 = vmatpush1.bf16.msra.mxu0 %v312
      %361 = vmatprep.mubr.bf16.mxu0 %v230
      %362 = vmatmul.mubr.bf16.gmra.mrb[0].mxu0 %v229
      %v363 = vpop.f32.mrb[0].mxu0
      %v364 = vadd.f32 0.0, %v363
      %v365 = vpop.f32.mrb[0].mxu0
      %v366 = vpop.f32.mrb[0].mxu0
      %v367 = vadd.f32 0.0, %v366
      %v368 = vpop.f32.mrb[0].mxu0
      %369 = vdwg.mxu0
      %370 = vst [vmem:[%s182] sm:$0xff] %v364
      %371 = vst [vmem:[%s182 + $0x8] sm:$0xff] %v367
      %vm372 = vcmask 130048
      %v374 = vsel %vm372, 1.0, 0
      %376 = vmatprep.subr.mxu0 0.0
      %377 = vmatpush1.msra.mxu0 %v364
      %378 = vmatprep.subr.mxu0 0.0
      %379 = vmatpush1.msra.mxu0 %v367
      %380 = vmatprep.subr.mxu0 0.0
      %381 = vmatpush1.msra.mxu0 0.0
      %382 = vmatprep.subr.mxu0 0.0
      %383 = vmatpush1.msra.mxu0 0.0
      %384 = vmatprep.subr.mxu0 0.0
      %385 = vmatpush1.msra.mxu0 0.0
      %386 = vmatprep.subr.mxu0 0.0
      %387 = vmatpush1.msra.mxu0 0.0
      %388 = vmatprep.subr.mxu0 0.0
      %389 = vmatpush1.msra.mxu0 0.0
      %390 = vmatprep.subr.mxu0 0.0
      %391 = vmatpush1.msra.mxu0 0.0
      %392 = vmatprep.subr.mxu0 0.0
      %393 = vmatpush1.msra.mxu0 0.0
      %394 = vmatprep.subr.mxu0 0.0
      %395 = vmatpush1.msra.mxu0 0.0
      %396 = vmatprep.subr.mxu0 0.0
      %397 = vmatpush1.msra.mxu0 0.0
      %398 = vmatprep.subr.mxu0 0.0
      %399 = vmatpush1.msra.mxu0 0.0
      %400 = vmatprep.subr.mxu0 0.0
      %401 = vmatpush1.msra.mxu0 0.0
      %402 = vmatprep.subr.mxu0 0.0
      %403 = vmatpush1.msra.mxu0 0.0
      %404 = vmatprep.subr.mxu0 0.0
      %405 = vmatpush1.msra.mxu0 0.0
      %406 = vmatprep.subr.mxu0 0.0
      %407 = vmatpush1.msra.mxu0 0.0
      %408 = vmatprep.subr.mxu0 0.0
      %409 = vmatpush1.msra.mxu0 0.0
      %410 = vmatprep.subr.mxu0 0.0
      %411 = vmatpush1.msra.mxu0 0.0
      %412 = vmatprep.subr.mxu0 0.0
      %413 = vmatpush1.msra.mxu0 0.0
      %414 = vmatprep.subr.mxu0 0.0
      %415 = vmatpush1.msra.mxu0 0.0
      %416 = vmatprep.subr.mxu0 0.0
      %417 = vmatpush1.msra.mxu0 0.0
      %418 = vmatprep.subr.mxu0 0.0
      %419 = vmatpush1.msra.mxu0 0.0
      %420 = vmatprep.subr.mxu0 0.0
      %421 = vmatpush1.msra.mxu0 0.0
      %422 = vmatprep.subr.mxu0 0.0
      %423 = vmatpush1.msra.mxu0 0.0
      %424 = vmatprep.subr.mxu0 0.0
      %425 = vmatpush1.msra.mxu0 0.0
      %426 = vmatprep.subr.mxu0 0.0
      %427 = vmatpush1.msra.mxu0 0.0
      %428 = vmatprep.subr.mxu0 0.0
      %429 = vmatpush1.msra.mxu0 0.0
      %430 = vmatprep.subr.mxu0 0.0
      %431 = vmatpush1.msra.mxu0 0.0
      %432 = vmatprep.subr.mxu0 0.0
      %433 = vmatpush1.msra.mxu0 0.0
      %434 = vmatprep.subr.mxu0 0.0
      %435 = vmatpush1.msra.mxu0 0.0
      %436 = vmatprep.subr.mxu0 0.0
      %437 = vmatpush1.msra.mxu0 0.0
      %438 = vmatprep.subr.mxu0 0.0
      %439 = vmatpush1.msra.mxu0 0.0
      %440 = vmatprep.mubr.f32.mxu0 0.0
      %441 = vmatmul.mubr.f32.gmra.mrb[0].mxu0 %v374
      %v442 = vpop.f32.mrb[0].mxu0
      %v443 = vadd.f32 0.0, %v442
      %v444 = vpop.f32.mrb[0].mxu0
      %445 = vdwg.mxu0
      %v446 = vmul.f32 %v364, %v364
      %v447 = vmul.f32 %v367, %v367
      %448 = vmatprep.subr.mxu0 0.0
      %449 = vmatpush1.msra.mxu0 %v446
      %450 = vmatprep.subr.mxu0 0.0
      %451 = vmatpush1.msra.mxu0 %v447
      %452 = vmatprep.subr.mxu0 0.0
      %453 = vmatpush1.msra.mxu0 0.0
      %454 = vmatprep.subr.mxu0 0.0
      %455 = vmatpush1.msra.mxu0 0.0
      %456 = vmatprep.subr.mxu0 0.0
      %457 = vmatpush1.msra.mxu0 0.0
      %458 = vmatprep.subr.mxu0 0.0
      %459 = vmatpush1.msra.mxu0 0.0
      %460 = vmatprep.subr.mxu0 0.0
      %461 = vmatpush1.msra.mxu0 0.0
      %462 = vmatprep.subr.mxu0 0.0
      %463 = vmatpush1.msra.mxu0 0.0
      %464 = vmatprep.subr.mxu0 0.0
      %465 = vmatpush1.msra.mxu0 0.0
      %466 = vmatprep.subr.mxu0 0.0
      %467 = vmatpush1.msra.mxu0 0.0
      %468 = vmatprep.subr.mxu0 0.0
      %469 = vmatpush1.msra.mxu0 0.0
      %470 = vmatprep.subr.mxu0 0.0
      %471 = vmatpush1.msra.mxu0 0.0
      %472 = vmatprep.subr.mxu0 0.0
      %473 = vmatpush1.msra.mxu0 0.0
      %474 = vmatprep.subr.mxu0 0.0
      %475 = vmatpush1.msra.mxu0 0.0
      %476 = vmatprep.subr.mxu0 0.0
      %477 = vmatpush1.msra.mxu0 0.0
      %478 = vmatprep.subr.mxu0 0.0
      %479 = vmatpush1.msra.mxu0 0.0
      %480 = vmatprep.subr.mxu0 0.0
      %481 = vmatpush1.msra.mxu0 0.0
      %482 = vmatprep.subr.mxu0 0.0
      %483 = vmatpush1.msra.mxu0 0.0
      %484 = vmatprep.subr.mxu0 0.0
      %485 = vmatpush1.msra.mxu0 0.0
      %486 = vmatprep.subr.mxu0 0.0
      %487 = vmatpush1.msra.mxu0 0.0
      %488 = vmatprep.subr.mxu0 0.0
      %489 = vmatpush1.msra.mxu0 0.0
      %490 = vmatprep.subr.mxu0 0.0
      %491 = vmatpush1.msra.mxu0 0.0
      %492 = vmatprep.subr.mxu0 0.0
      %493 = vmatpush1.msra.mxu0 0.0
      %494 = vmatprep.subr.mxu0 0.0
      %495 = vmatpush1.msra.mxu0 0.0
      %496 = vmatprep.subr.mxu0 0.0
      %497 = vmatpush1.msra.mxu0 0.0
      %498 = vmatprep.subr.mxu0 0.0
      %499 = vmatpush1.msra.mxu0 0.0
      %500 = vmatprep.subr.mxu0 0.0
      %501 = vmatpush1.msra.mxu0 0.0
      %502 = vmatprep.subr.mxu0 0.0
      %503 = vmatpush1.msra.mxu0 0.0
      %504 = vmatprep.subr.mxu0 0.0
      %505 = vmatpush1.msra.mxu0 0.0
      %506 = vmatprep.subr.mxu0 0.0
      %507 = vmatpush1.msra.mxu0 0.0
      %508 = vmatprep.subr.mxu0 0.0
      %509 = vmatpush1.msra.mxu0 0.0
      %510 = vmatprep.subr.mxu0 0.0
      %511 = vmatpush1.msra.mxu0 0.0
      %512 = vmatprep.mubr.f32.mxu0 0.0
      %513 = vmatmul.mubr.f32.gmra.mrb[0].mxu0 %v374
      %v514 = vpop.f32.mrb[0].mxu0
      %v515 = vadd.f32 0.0, %v514
      %v516 = vpop.f32.mrb[0].mxu0
      %517 = vdwg.mxu0
      %v519 = vrot.slane %v515, 7
      %vm521 = vcmask 1040384
      %v522 = vsel %vm521, %v443, %v519
      %523 = vst [vmem:[%s187] sm:$0x3] %v522
      %s524 = smul.u32 2, %s15
      %p525 = scmp.lt.s32.totalorder %s524, 3
      %s526 = scalar_select %p525, %s524, 3
      %s527 = smul.addr %s526, 8
      %s528 = scalar_lea.vmem %s2, %s527
      %p529 = scmp.lt.s32.totalorder %s15, 1
      %s530 = scalar_select %p529, %s15, 1
      %s531 = smul.addr %s530, 2
      %s532 = scalar_lea.vmem %s3, %s531
      // Predicated region
      $region29: #{stem_block_forward.9} parent=27 // pred_check
        %p533 = pneg %p80
      $region30: #{stem_block_forward.9} parent=27 // pred_check_branch
        %535 = sbr.rel (%p533) target = $region32
      $region31: #{stem_block_forward.9} parent=27 // pred_region
        %s536 = smul.u32 2, %s15
      $region32: #{stem_block_forward.9} parent=27 // pred_fallthru
        _
      // Predicated region
      $region33: #{stem_block_forward.9} parent=27 // pred_check
        %p537 = pneg %p106
      $region34: #{stem_block_forward.9} parent=27 // pred_check_branch
        %539 = sbr.rel (%p537) target = $region36
      $region35: #{stem_block_forward.9} parent=27 // pred_region
        _
      $region36: #{stem_block_forward.9} parent=27 // pred_fallthru
        _
    $region28: #{stem_block_forward.9} parent=5 // pred_fallthru
      _
    %p540 = scmp.le.s32.totalorder 2, %s10
    // Predicated region
    $region37: #{stem_block_forward.9} parent=5 // pred_check
      %p541 = pneg %p540
    $region38: #{stem_block_forward.9} parent=5 // pred_check_branch
      %543 = sbr.rel (%p541) target = $region40
    $region39: #{stem_block_forward.9} parent=5 // pred_region
      %s544 = ssub.s32 %s10, 2
      // Predicated region
      $region41: #{stem_block_forward.9} parent=39 // pred_check
        %p545 = pneg %p86
      $region42: #{stem_block_forward.9} parent=39 // pred_check_branch
        %547 = sbr.rel (%p545) target = $region44
      $region43: #{stem_block_forward.9} parent=39 // pred_region
        %s548 = smul.u32 2, %s16
        %p549 = scmp.lt.s32.totalorder %s548, 3
        %s550 = scalar_select %p549, %s548, 3
        %s551 = smul.addr %s550, 8
        %s552 = scalar_lea.vmem %s2, %s551
      $region44: #{stem_block_forward.9} parent=39 // pred_fallthru
        _
      // Predicated region
      $region45: #{stem_block_forward.9} parent=39 // pred_check
        %p553 = pneg %p112
      $region46: #{stem_block_forward.9} parent=39 // pred_check_branch
        %555 = sbr.rel (%p553) target = $region48
      $region47: #{stem_block_forward.9} parent=39 // pred_region
        %p556 = scmp.lt.s32.totalorder %s16, 1
        %s557 = scalar_select %p556, %s16, 1
        %s558 = smul.addr %s557, 2
        %s559 = scalar_lea.vmem %s3, %s558
      $region48: #{stem_block_forward.9} parent=39 // pred_fallthru
        _
    $region40: #{stem_block_forward.9} parent=5 // pred_fallthru
      _
  $region6: #{stem_block_forward.9} parent=0 // loop_footer
    %s14 = sadd.s32 1, %s10
  $region7: #{stem_block_forward.9} parent=0 // loop_footer_branch
    %9 = sbr.rel target = $region3
  $region8: #{stem_block_forward.9} parent=0 // loop_exit
    _

// kernel: stem_block_forward.11
$region0: #{stem_block_forward.11}
  #allocation0 [shape = 'u32[]', space=smem, size = 0x4, offset = 0x4, fixed_abs, tag = 'smem constant byte address 0x4 - core index']
  #allocation1 [shape = 'u32[144,128]{1,0:T(1,128)}', space=vmem, size = 0x12000, scoped, tag = 'internal scratch']
  %s0 = inlined_call_operand.vmem [shape: f32[32,128], index: 0, kind: input, shape index: {}]
  %s1 = inlined_call_operand.vmem [shape: f32[1,128], index: 1, kind: input, shape index: {}]
  %s2 = inlined_call_operand.vmem [shape: f32[1,128], index: 2, kind: input, shape index: {}]
  %s3 = inlined_call_operand.hbm [shape: f32[32,128], index: 3, kind: output, shape index: {}]
  %s4 = sld [smem:[#allocation0]]
  $region45: #{stem_block_forward.11} parent=0
    _
  %s6 = ssub.s32 1, %s4
  %s7 = scalar_select 0, %s6, %s4
  $region1: #{stem_block_forward.11} parent=0
    #allocation2 [shape = 'u8[16384]{0}', space=vmem, size = 0x4000, scoped, tag = 'output window, operand 0']
    #allocation3 [shape = 's32[2]{0}', space=sflag, size = 0x8, scoped, tag = 'scoped memory for stem_block_forward.11']
    %8 = vsyncpa [#allocation3], 0
    %s9 = scalar_lea.sflag [#allocation3], 1
    %10 = vsyncpa %s9, 0
    loop: start=0, step=1, limit=4
    $region2: #{stem_block_forward.11} parent=1 // loop_pre_header
      _
    $region3: #{stem_block_forward.11} parent=1 // loop_header
      %s12 = sphi 0, %s16
      %p13 = scmp.ge.s32.totalorder %s12, 4
      %s22 = sphi 0, %s24
      %s25 = sphi 0, %s22
      %s26 = sphi 0, %s25
      %s42 = sphi 0, %s26
      %s46 = sphi 0, %s46
      %s48 = sphi 0, %s46
      %s49 = sphi 0, %s48
      %s63 = sphi 0, %s49
      %s67 = sphi 0, %s67
      %s69 = sphi 0, %s67
      %s70 = sphi 0, %s69
      %s84 = sphi 0, %s70
      %s90 = sphi 0, %s92
      %s93 = sphi 0, %s90
      %s94 = sphi 0, %s93
      %s110 = sphi 0, %s94
    $region4: #{stem_block_forward.11} parent=1 // loop_header_branch
      %15 = sbr.rel (%p13) target = $region8
    $region5: #{stem_block_forward.11} parent=1 // loop_body
      %s17 = ssub.s32 %s12, 1
      %s18 = ssub.s32 %s12, 2
      %s19 = sadd.s32 %s12, 1
      %s20 = ssub.s32 %s12, %s19
      %p21 = scmp.eq.s32.totalorder %s20, 0
      %s23 = sadd.s32 %s22, 1
      %s24 = scalar_select %p21, %s22, %s23
      %p27 = pneg %p21
      %p28 = scmp.eq.s32.totalorder %s12, 1
      %p29 = por %p27, %p28
      %p30 = scmp.ne.s32.totalorder %s22, %s25
      %p31 = scmp.eq.s32.totalorder %s12, 0
      %p32 = por %p30, %p31
      %p33 = scmp.ne.s32.totalorder %s22, %s25
      %p34 = scmp.eq.s32.totalorder %s17, 1
      %p35 = por %p33, %p34
      %p36 = scmp.ne.s32.totalorder %s25, %s26
      %p37 = scmp.eq.s32.totalorder %s17, 0
      %p38 = por %p36, %p37
      %p39 = scmp.ne.s32.totalorder %s25, %s26
      %p40 = scmp.eq.s32.totalorder %s18, 1
      %p41 = por %p39, %p40
      %p43 = scmp.ne.s32.totalorder %s26, %s42
      %p44 = scmp.eq.s32.totalorder %s18, 0
      %p45 = por %p43, %p44
      %s47 = sadd.s32 %s46, 1
      %p50 = scmp.eq.s32.totalorder %s12, 1
      %p51 = scmp.ne.s32.totalorder %s46, %s48
      %p52 = scmp.eq.s32.totalorder %s12, 0
      %p53 = por %p51, %p52
      %p54 = scmp.ne.s32.totalorder %s46, %s48
      %p55 = scmp.eq.s32.totalorder %s17, 1
      %p56 = por %p54, %p55
      %p57 = scmp.ne.s32.totalorder %s48, %s49
      %p58 = scmp.eq.s32.totalorder %s17, 0
      %p59 = por %p57, %p58
      %p60 = scmp.ne.s32.totalorder %s48, %s49
      %p61 = scmp.eq.s32.totalorder %s18, 1
      %p62 = por %p60, %p61
      %p64 = scmp.ne.s32.totalorder %s49, %s63
      %p65 = scmp.eq.s32.totalorder %s18, 0
      %p66 = por %p64, %p65
      %s68 = sadd.s32 %s67, 1
      %p71 = scmp.eq.s32.totalorder %s12, 1
      %p72 = scmp.ne.s32.totalorder %s67, %s69
      %p73 = scmp.eq.s32.totalorder %s12, 0
      %p74 = por %p72, %p73
      %p75 = scmp.ne.s32.totalorder %s67, %s69
      %p76 = scmp.eq.s32.totalorder %s17, 1
      %p77 = por %p75, %p76
      %p78 = scmp.ne.s32.totalorder %s69, %s70
      %p79 = scmp.eq.s32.totalorder %s17, 0
      %p80 = por %p78, %p79
      %p81 = scmp.ne.s32.totalorder %s69, %s70
      %p82 = scmp.eq.s32.totalorder %s18, 1
      %p83 = por %p81, %p82
      %p85 = scmp.ne.s32.totalorder %s70, %s84
      %p86 = scmp.eq.s32.totalorder %s18, 0
      %p87 = por %p85, %p86
      %s88 = ssub.s32 %s12, %s19
      %p89 = scmp.eq.s32.totalorder %s88, 0
      %s91 = sadd.s32 %s90, 1
      %s92 = scalar_select %p89, %s90, %s91
      %p95 = pneg %p89
      %p96 = scmp.eq.s32.totalorder %s12, 1
      %p97 = por %p95, %p96
      %p98 = scmp.ne.s32.totalorder %s90, %s93
      %p99 = scmp.eq.s32.totalorder %s12, 0
      %p100 = por %p98, %p99
      %p101 = scmp.ne.s32.totalorder %s90, %s93
      %p102 = scmp.eq.s32.totalorder %s17, 1
      %p103 = por %p101, %p102
      %p104 = scmp.ne.s32.totalorder %s93, %s94
      %p105 = scmp.eq.s32.totalorder %s17, 0
      %p106 = por %p104, %p105
      %p107 = scmp.ne.s32.totalorder %s93, %s94
      %p108 = scmp.eq.s32.totalorder %s18, 1
      %p109 = por %p107, %p108
      %p111 = scmp.ne.s32.totalorder %s94, %s110
      %p112 = scmp.eq.s32.totalorder %s18, 0
      %p113 = por %p111, %p112
      %p114 = scmp.le.s32.totalorder 1, %s12
      %p115 = scmp.lt.s32.totalorder %s12, 3
      %p116 = pnand %p114, %p115
      %p117 = pneg %p116
      // Predicated region
      $region9: #{stem_block_forward.11} parent=5 // pred_check
        _
      $region10: #{stem_block_forward.11} parent=5 // pred_check_branch
        %119 = sbr.rel (%p116) target = $region12
      $region11: #{stem_block_forward.11} parent=5 // pred_region
        %s120 = ssub.s32 %s12, 1
        // Predicated region
        $region13: #{stem_block_forward.11} parent=11 // pred_check
          %p121 = pneg %p59
        $region14: #{stem_block_forward.11} parent=11 // pred_check_branch
          %123 = sbr.rel (%p121) target = $region16
        $region15: #{stem_block_forward.11} parent=11 // pred_region
          _
        $region16: #{stem_block_forward.11} parent=11 // pred_fallthru
          _
        // Predicated region
        $region17: #{stem_block_forward.11} parent=11 // pred_check
          %p124 = pneg %p80
        $region18: #{stem_block_forward.11} parent=11 // pred_check_branch
          %126 = sbr.rel (%p124) target = $region20
        $region19: #{stem_block_forward.11} parent=11 // pred_region
          _
        $region20: #{stem_block_forward.11} parent=11 // pred_fallthru
          _
      $region12: #{stem_block_forward.11} parent=5 // pred_fallthru
        _
      %p127 = scmp.lt.s32.totalorder %s12, 2
      // Predicated region
      $region21: #{stem_block_forward.11} parent=5 // pred_check
        %p128 = pneg %p127
      $region22: #{stem_block_forward.11} parent=5 // pred_check_branch
        %130 = sbr.rel (%p128) target = $region24
      $region23: #{stem_block_forward.11} parent=5 // pred_region
        // Predicated region
        $region25: #{stem_block_forward.11} parent=23 // pred_check
          %p131 = pneg %p32
        $region26: #{stem_block_forward.11} parent=23 // pred_check_branch
          %133 = sbr.rel (%p131) target = $region28
        $region27: #{stem_block_forward.11} parent=23 // pred_region
          %s134 = smul.u32 2, %s12
          %p135 = scmp.lt.s32.totalorder %s134, 3
          %s136 = scalar_select %p135, %s134, 3
          %s137 = smul.addr %s136, 8
          %s138 = scalar_lea.vmem %s0, %s137
          %s139 = smul.u32 2, %s12
        $region28: #{stem_block_forward.11} parent=23 // pred_fallthru
          _
      $region24: #{stem_block_forward.11} parent=5 // pred_fallthru
        _
      %p140 = scmp.le.s32.totalorder 1, %s12
      %p141 = scmp.lt.s32.totalorder %s12, 3
      %p142 = pnand %p140, %p141
      %p143 = pneg %p142
      // Predicated region
      $region29: #{stem_block_forward.11} parent=5 // pred_check
        _
      $region30: #{stem_block_forward.11} parent=5 // pred_check_branch
        %145 = sbr.rel (%p142) target = $region32
      $region31: #{stem_block_forward.11} parent=5 // pred_region
        %s146 = ssub.s32 %s12, 1
        %s147 = smul.u32 2, %s17
        %p148 = scmp.lt.s32.totalorder %s147, 3
        %s149 = scalar_select %p148, %s147, 3
        %s150 = smul.addr %s149, 8
        %s151 = scalar_lea.vmem %s0, %s150
        %p152 = pneg %p38
        %p153 = pneg %p35
        %p154 = pneg %p59
        %p155 = pneg %p56
        %p156 = pneg %p80
        %p157 = pneg %p77
        %p158 = pneg %p106
        %p159 = pneg %p103
        %s160 = sand.u32 %s93, 1
        %s161 = scalar_lea.sflag [#allocation3], %s160
        %s162 = sand.u32 %s93, 1
        %s163 = smul.addr %s162, 16
        %s164 = scalar_lea.vmem [#allocation2], %s163
        %s165 = smul.u32 2, %s17
        %p166 = scmp.lt.s32.totalorder %s165, 3
        %s167 = scalar_select %p166, %s165, 3
        %s168 = smul.addr %s167, 8
        %s169 = scalar_lea.vmem %s0, %s168
        %s170 = smul.u32 2, %s17
        %s171 = smul.u32 2, %s17
        %v172 = vld [vmem:[%s169] sm:$0xff]
        %v173 = vld [vmem:[%s169 + $0x8] sm:$0xff]
        %v174 = vld [vmem:[%s1] sm:$0x1]
        %v176 = vlaneseq
        %v177 = vshrl.u32 %v176, 7
        %v178 = vsub.s32 0, %v177
        %v179 = vrot.slane %v174, %v178
        %v181 = vmul.f32 %v172, %v179
        %v182 = vmul.f32 %v173, %v179
        %v183 = vld [vmem:[%s2] sm:$0x1]
        %v185 = vlaneseq
        %v186 = vshrl.u32 %v185, 7
        %v187 = vsub.s32 0, %v186
        %v188 = vrot.slane %v183, %v187
        %v190 = vadd.f32 %v181, %v188
        %v191 = vadd.f32 %v182, %v188
        %v192 = vmax.f32 %v190, 0.0
        %v193 = vmax.f32 %v191, 0.0
        %194 = vst [vmem:[%s164] sm:$0xff] %v192
        %195 = vst [vmem:[%s164 + $0x8] sm:$0xff] %v193
        %s196 = sand.u32 %s93, 1
        %s197 = scalar_lea.sflag [#allocation3], %s196
        %s198 = sand.u32 %s93, 1
        %s199 = smul.addr %s198, 16
        %s200 = scalar_lea.vmem [#allocation2], %s199
        // Predicated region
        $region33: #{stem_block_forward.11} parent=31 // pred_check
          %p201 = pneg %p103
        $region34: #{stem_block_forward.11} parent=31 // pred_check_branch
          %203 = sbr.rel (%p201) target = $region36
        $region35: #{stem_block_forward.11} parent=31 // pred_region
          %s204 = smul.u32 2, %s17
          %s206 = ssub.s32 256, 256
          %207 = vsyncadd %s197, %s206
          %s208 = smul.addr %s204, 128
          %s209 = scalar_lea.hbm %s3, %s208
          %s210 = sshll.u32 %s200, 4
          %s211 = int_to_ptr.vmem [resolvable:$true] %s210
          %216 = dma.vmem_to_hbm [thread:$0]  %s211, 256, %s209, %s197, 128, 128, 8
        $region36: #{stem_block_forward.11} parent=31 // pred_fallthru
          _
      $region32: #{stem_block_forward.11} parent=5 // pred_fallthru
        _
      %p217 = scmp.le.s32.totalorder 2, %s12
      // Predicated region
      $region37: #{stem_block_forward.11} parent=5 // pred_check
        %p218 = pneg %p217
      $region38: #{stem_block_forward.11} parent=5 // pred_check_branch
        %220 = sbr.rel (%p218) target = $region40
      $region39: #{stem_block_forward.11} parent=5 // pred_region
        %s221 = ssub.s32 %s12, 2
        // Predicated region
        $region41: #{stem_block_forward.11} parent=39 // pred_check
          %p222 = pneg %p109
        $region42: #{stem_block_forward.11} parent=39 // pred_check_branch
          %224 = sbr.rel (%p222) target = $region44
        $region43: #{stem_block_forward.11} parent=39 // pred_region
          %s225 = sand.u32 %s94, 1
          %s226 = scalar_lea.sflag [#allocation3], %s225
          %s227 = sand.u32 %s94, 1
          %s228 = smul.addr %s227, 16
          %s229 = scalar_lea.vmem [#allocation2], %s228
          %230 = dma.done %s226, 256
        $region44: #{stem_block_forward.11} parent=39 // pred_fallthru
          _
      $region40: #{stem_block_forward.11} parent=5 // pred_fallthru
        _
    $region6: #{stem_block_forward.11} parent=1 // loop_footer
      %s16 = sadd.s32 1, %s12
    $region7: #{stem_block_forward.11} parent=1 // loop_footer_branch
      %11 = sbr.rel target = $region3
    $region8: #{stem_block_forward.11} parent=1 // loop_exit
      _
    %231 = vsyncpa [#allocation3], 1
    %s232 = scalar_lea.sflag [#allocation3], 1
    %233 = vsyncpa %s232, 1

// kernel: stem_block_forward.10
$region0: #{stem_block_forward.10}
  #allocation0 [shape = 'u32[]', space=smem, size = 0x4, offset = 0x4, fixed_abs, tag = 'smem constant byte address 0x4 - core index']
  #allocation1 [shape = 'u32[144,128]{1,0:T(1,128)}', space=vmem, size = 0x12000, scoped, tag = 'internal scratch']
  %s0 = inlined_call_operand.vmem [shape: bf16[8,2,8,128], index: 0, kind: input, shape index: {}]
  %s1 = inlined_call_operand.vmem [shape: f32[8,4,128], index: 1, kind: input, shape index: {}]
  %s2 = inlined_call_operand.vmem [shape: f32[1,128], index: 2, kind: input, shape index: {}]
  %s3 = inlined_call_operand.vmem [shape: f32[1,128], index: 3, kind: input, shape index: {}]
  %s4 = inlined_call_operand.vmem [shape: bf16[256,128], index: 4, kind: input, shape index: {}]
  %s5 = inlined_call_operand.vmem [shape: f32[8,4,128], index: 5, kind: output, shape index: {0}]
  %s6 = inlined_call_operand.vmem [shape: f32[2,2,128], index: 6, kind: output, shape index: {1}]
  %7 = xla_tuple %s5, %s6
  %s8 = sld [smem:[#allocation0]]
  $region61: #{stem_block_forward.10} parent=0
    _
  %s10 = ssub.s32 1, %s8
  %s11 = scalar_select 0, %s10, %s8
  loop: start=0, step=1, limit=4
  $region2: #{stem_block_forward.10} parent=0 // loop_pre_header
    _
  $region3: #{stem_block_forward.10} parent=0 // loop_header
    %s13 = sphi 0, %s17
    %p14 = scmp.ge.s32.totalorder %s13, 4
    %s23 = sphi 0, %s25
    %s26 = sphi 0, %s23
    %s27 = sphi 0, %s26
    %s43 = sphi 0, %s27
    %s49 = sphi 0, %s51
    %s52 = sphi 0, %s49
    %s53 = sphi 0, %s52
    %s69 = sphi 0, %s53
    %s73 = sphi 0, %s73
    %s75 = sphi 0, %s73
    %s76 = sphi 0, %s75
    %s90 = sphi 0, %s76
    %s94 = sphi 0, %s94
    %s96 = sphi 0, %s94
    %s97 = sphi 0, %s96
    %s111 = sphi 0, %s97
    %s115 = sphi 0, %s115
    %s117 = sphi 0, %s115
    %s118 = sphi 0, %s117
    %s132 = sphi 0, %s118
    %s138 = sphi 0, %s140
    %s141 = sphi 0, %s138
    %s142 = sphi 0, %s141
    %s158 = sphi 0, %s142
    %s164 = sphi 0, %s166
    %s167 = sphi 0, %s164
    %s168 = sphi 0, %s167
    %s184 = sphi 0, %s168
  $region4: #{stem_block_forward.10} parent=0 // loop_header_branch
    %16 = sbr.rel (%p14) target = $region8
  $region5: #{stem_block_forward.10} parent=0 // loop_body
    %s18 = ssub.s32 %s13, 1
    %s19 = ssub.s32 %s13, 2
    %s20 = sadd.s32 %s13, 1
    %s21 = ssub.s32 %s13, %s20
    %p22 = scmp.eq.s32.totalorder %s21, 0
    %s24 = sadd.s32 %s23, 1
    %s25 = scalar_select %p22, %s23, %s24
    %p28 = pneg %p22
    %p29 = scmp.eq.s32.totalorder %s13, 1
    %p30 = por %p28, %p29
    %p31 = scmp.ne.s32.totalorder %s23, %s26
    %p32 = scmp.eq.s32.totalorder %s13, 0
    %p33 = por %p31, %p32
    %p34 = scmp.ne.s32.totalorder %s23, %s26
    %p35 = scmp.eq.s32.totalorder %s18, 1
    %p36 = por %p34, %p35
    %p37 = scmp.ne.s32.totalorder %s26, %s27
    %p38 = scmp.eq.s32.totalorder %s18, 0
    %p39 = por %p37, %p38
    %p40 = scmp.ne.s32.totalorder %s26, %s27
    %p41 = scmp.eq.s32.totalorder %s19, 1
    %p42 = por %p40, %p41
    %p44 = scmp.ne.s32.totalorder %s27, %s43
    %p45 = scmp.eq.s32.totalorder %s19, 0
    %p46 = por %p44, %p45
    %s47 = ssub.s32 %s13, %s20
    %p48 = scmp.eq.s32.totalorder %s47, 0
    %s50 = sadd.s32 %s49, 1
    %s51 = scalar_select %p48, %s49, %s50
    %p54 = pneg %p48
    %p55 = scmp.eq.s32.totalorder %s13, 1
    %p56 = por %p54, %p55
    %p57 = scmp.ne.s32.totalorder %s49, %s52
    %p58 = scmp.eq.s32.totalorder %s13, 0
    %p59 = por %p57, %p58
    %p60 = scmp.ne.s32.totalorder %s49, %s52
    %p61 = scmp.eq.s32.totalorder %s18, 1
    %p62 = por %p60, %p61
    %p63 = scmp.ne.s32.totalorder %s52, %s53
    %p64 = scmp.eq.s32.totalorder %s18, 0
    %p65 = por %p63, %p64
    %p66 = scmp.ne.s32.totalorder %s52, %s53
    %p67 = scmp.eq.s32.totalorder %s19, 1
    %p68 = por %p66, %p67
    %p70 = scmp.ne.s32.totalorder %s53, %s69
    %p71 = scmp.eq.s32.totalorder %s19, 0
    %p72 = por %p70, %p71
    %s74 = sadd.s32 %s73, 1
    %p77 = scmp.eq.s32.totalorder %s13, 1
    %p78 = scmp.ne.s32.totalorder %s73, %s75
    %p79 = scmp.eq.s32.totalorder %s13, 0
    %p80 = por %p78, %p79
    %p81 = scmp.ne.s32.totalorder %s73, %s75
    %p82 = scmp.eq.s32.totalorder %s18, 1
    %p83 = por %p81, %p82
    %p84 = scmp.ne.s32.totalorder %s75, %s76
    %p85 = scmp.eq.s32.totalorder %s18, 0
    %p86 = por %p84, %p85
    %p87 = scmp.ne.s32.totalorder %s75, %s76
    %p88 = scmp.eq.s32.totalorder %s19, 1
    %p89 = por %p87, %p88
    %p91 = scmp.ne.s32.totalorder %s76, %s90
    %p92 = scmp.eq.s32.totalorder %s19, 0
    %p93 = por %p91, %p92
    %s95 = sadd.s32 %s94, 1
    %p98 = scmp.eq.s32.totalorder %s13, 1
    %p99 = scmp.ne.s32.totalorder %s94, %s96
    %p100 = scmp.eq.s32.totalorder %s13, 0
    %p101 = por %p99, %p100
    %p102 = scmp.ne.s32.totalorder %s94, %s96
    %p103 = scmp.eq.s32.totalorder %s18, 1
    %p104 = por %p102, %p103
    %p105 = scmp.ne.s32.totalorder %s96, %s97
    %p106 = scmp.eq.s32.totalorder %s18, 0
    %p107 = por %p105, %p106
    %p108 = scmp.ne.s32.totalorder %s96, %s97
    %p109 = scmp.eq.s32.totalorder %s19, 1
    %p110 = por %p108, %p109
    %p112 = scmp.ne.s32.totalorder %s97, %s111
    %p113 = scmp.eq.s32.totalorder %s19, 0
    %p114 = por %p112, %p113
    %s116 = sadd.s32 %s115, 1
    %p119 = scmp.eq.s32.totalorder %s13, 1
    %p120 = scmp.ne.s32.totalorder %s115, %s117
    %p121 = scmp.eq.s32.totalorder %s13, 0
    %p122 = por %p120, %p121
    %p123 = scmp.ne.s32.totalorder %s115, %s117
    %p124 = scmp.eq.s32.totalorder %s18, 1
    %p125 = por %p123, %p124
    %p126 = scmp.ne.s32.totalorder %s117, %s118
    %p127 = scmp.eq.s32.totalorder %s18, 0
    %p128 = por %p126, %p127
    %p129 = scmp.ne.s32.totalorder %s117, %s118
    %p130 = scmp.eq.s32.totalorder %s19, 1
    %p131 = por %p129, %p130
    %p133 = scmp.ne.s32.totalorder %s118, %s132
    %p134 = scmp.eq.s32.totalorder %s19, 0
    %p135 = por %p133, %p134
    %s136 = ssub.s32 %s13, %s20
    %p137 = scmp.eq.s32.totalorder %s136, 0
    %s139 = sadd.s32 %s138, 1
    %s140 = scalar_select %p137, %s138, %s139
    %p143 = pneg %p137
    %p144 = scmp.eq.s32.totalorder %s13, 1
    %p145 = por %p143, %p144
    %p146 = scmp.ne.s32.totalorder %s138, %s141
    %p147 = scmp.eq.s32.totalorder %s13, 0
    %p148 = por %p146, %p147
    %p149 = scmp.ne.s32.totalorder %s138, %s141
    %p150 = scmp.eq.s32.totalorder %s18, 1
    %p151 = por %p149, %p150
    %p152 = scmp.ne.s32.totalorder %s141, %s142
    %p153 = scmp.eq.s32.totalorder %s18, 0
    %p154 = por %p152, %p153
    %p155 = scmp.ne.s32.totalorder %s141, %s142
    %p156 = scmp.eq.s32.totalorder %s19, 1
    %p157 = por %p155, %p156
    %p159 = scmp.ne.s32.totalorder %s142, %s158
    %p160 = scmp.eq.s32.totalorder %s19, 0
    %p161 = por %p159, %p160
    %s162 = ssub.s32 %s13, %s20
    %p163 = scmp.eq.s32.totalorder %s162, 0
    %s165 = sadd.s32 %s164, 1
    %s166 = scalar_select %p163, %s164, %s165
    %p169 = pneg %p163
    %p170 = scmp.eq.s32.totalorder %s13, 1
    %p171 = por %p169, %p170
    %p172 = scmp.ne.s32.totalorder %s164, %s167
    %p173 = scmp.eq.s32.totalorder %s13, 0
    %p174 = por %p172, %p173
    %p175 = scmp.ne.s32.totalorder %s164, %s167
    %p176 = scmp.eq.s32.totalorder %s18, 1
    %p177 = por %p175, %p176
    %p178 = scmp.ne.s32.totalorder %s167, %s168
    %p179 = scmp.eq.s32.totalorder %s18, 0
    %p180 = por %p178, %p179
    %p181 = scmp.ne.s32.totalorder %s167, %s168
    %p182 = scmp.eq.s32.totalorder %s19, 1
    %p183 = por %p181, %p182
    %p185 = scmp.ne.s32.totalorder %s168, %s184
    %p186 = scmp.eq.s32.totalorder %s19, 0
    %p187 = por %p185, %p186
    %p188 = scmp.le.s32.totalorder 1, %s13
    %p189 = scmp.lt.s32.totalorder %s13, 3
    %p190 = pnand %p188, %p189
    %p191 = pneg %p190
    // Predicated region
    $region9: #{stem_block_forward.10} parent=5 // pred_check
      _
    $region10: #{stem_block_forward.10} parent=5 // pred_check_branch
      %193 = sbr.rel (%p190) target = $region12
    $region11: #{stem_block_forward.10} parent=5 // pred_region
      %s194 = ssub.s32 %s13, 1
      // Predicated region
      $region13: #{stem_block_forward.10} parent=11 // pred_check
        %p195 = pneg %p86
      $region14: #{stem_block_forward.10} parent=11 // pred_check_branch
        %197 = sbr.rel (%p195) target = $region16
      $region15: #{stem_block_forward.10} parent=11 // pred_region
        _
      $region16: #{stem_block_forward.10} parent=11 // pred_fallthru
        _
      // Predicated region
      $region17: #{stem_block_forward.10} parent=11 // pred_check
        %p198 = pneg %p107
      $region18: #{stem_block_forward.10} parent=11 // pred_check_branch
        %200 = sbr.rel (%p198) target = $region20
      $region19: #{stem_block_forward.10} parent=11 // pred_region
        _
      $region20: #{stem_block_forward.10} parent=11 // pred_fallthru
        _
      // Predicated region
      $region21: #{stem_block_forward.10} parent=11 // pred_check
        %p201 = pneg %p128
      $region22: #{stem_block_forward.10} parent=11 // pred_check_branch
        %203 = sbr.rel (%p201) target = $region24
      $region23: #{stem_block_forward.10} parent=11 // pred_region
        _
      $region24: #{stem_block_forward.10} parent=11 // pred_fallthru
        _
    $region12: #{stem_block_forward.10} parent=5 // pred_fallthru
      _
    %p204 = scmp.lt.s32.totalorder %s13, 2
    // Predicated region
    $region25: #{stem_block_forward.10} parent=5 // pred_check
      %p205 = pneg %p204
    $region26: #{stem_block_forward.10} parent=5 // pred_check_branch
      %207 = sbr.rel (%p205) target = $region28
    $region27: #{stem_block_forward.10} parent=5 // pred_region
      // Predicated region
      $region29: #{stem_block_forward.10} parent=27 // pred_check
        %p208 = pneg %p33
      $region30: #{stem_block_forward.10} parent=27 // pred_check_branch
        %210 = sbr.rel (%p208) target = $region32
      $region31: #{stem_block_forward.10} parent=27 // pred_region
        %s211 = smul.u32 4, %s13
        %p212 = scmp.lt.s32.totalorder %s211, 7
        %s213 = scalar_select %p212, %s211, 7
        %s214 = smul.addr %s213, 2
        %s215 = smul.addr %s214, 4
        %s216 = scalar_lea.vmem %s0, %s215
        %s217 = smul.u32 4, %s13
      $region32: #{stem_block_forward.10} parent=27 // pred_fallthru
        _
      // Predicated region
      $region33: #{stem_block_forward.10} parent=27 // pred_check
        %p218 = pneg %p59
      $region34: #{stem_block_forward.10} parent=27 // pred_check_branch
        %220 = sbr.rel (%p218) target = $region36
      $region35: #{stem_block_forward.10} parent=27 // pred_region
        %s221 = smul.u32 4, %s13
        %p222 = scmp.lt.s32.totalorder %s221, 7
        %s223 = scalar_select %p222, %s221, 7
        %s224 = smul.addr %s223, 4
        %s225 = scalar_lea.vmem %s1, %s224
        %s226 = smul.u32 4, %s13
      $region36: #{stem_block_forward.10} parent=27 // pred_fallthru
        _
    $region28: #{stem_block_forward.10} parent=5 // pred_fallthru
      _
    %p227 = scmp.le.s32.totalorder 1, %s13
    %p228 = scmp.lt.s32.totalorder %s13, 3
    %p229 = pnand %p227, %p228
    %p230 = pneg %p229
    // Predicated region
    $region37: #{stem_block_forward.10} parent=5 // pred_check
      _
    $region38: #{stem_block_forward.10} parent=5 // pred_check_branch
      %232 = sbr.rel (%p229) target = $region40
    $region39: #{stem_block_forward.10} parent=5 // pred_region
      %s233 = ssub.s32 %s13, 1
      %s234 = smul.u32 4, %s18
      %p235 = scmp.lt.s32.totalorder %s234, 7
      %s236 = scalar_select %p235, %s234, 7
      %s237 = smul.addr %s236, 2
      %s238 = smul.addr %s237, 4
      %s239 = scalar_lea.vmem %s0, %s238
      %p240 = pneg %p39
      %p241 = pneg %p36
      %s242 = smul.u32 4, %s18
      %p243 = scmp.lt.s32.totalorder %s242, 7
      %s244 = scalar_select %p243, %s242, 7
      %s245 = smul.addr %s244, 4
      %s246 = scalar_lea.vmem %s1, %s245
      %p247 = pneg %p65
      %p248 = pneg %p62
      %p249 = pneg %p86
      %p250 = pneg %p83
      %p251 = pneg %p107
      %p252 = pneg %p104
      %p253 = pneg %p128
      %p254 = pneg %p125
      %p255 = pneg %p154
      %p256 = pneg %p151
      %s257 = smul.u32 4, %s18
      %p258 = scmp.lt.s32.totalorder %s257, 7
      %s259 = scalar_select %p258, %s257, 7
      %s260 = smul.addr %s259, 4
      %s261 = scalar_lea.vmem %s5, %s260
      %p262 = pneg %p180
      %p263 = pneg %p177
      %p264 = scmp.lt.s32.totalorder %s18, 1
      %s265 = scalar_select %p264, %s18, 1
      %s266 = smul.addr %s265, 2
      %s267 = scalar_lea.vmem %s6, %s266
      %s268 = smul.u32 4, %s18
      %p269 = scmp.lt.s32.totalorder %s268, 7
      %s270 = scalar_select %p269, %s268, 7
      %s271 = smul.addr %s270, 2
      %s272 = smul.addr %s271, 4
      %s273 = scalar_lea.vmem %s0, %s272
      %s274 = smul.u32 4, %s18
      %s275 = smul.u32 4, %s18
      %p276 = scmp.lt.s32.totalorder %s275, 7
      %s277 = scalar_select %p276, %s275, 7
      %s278 = smul.addr %s277, 4
      %s279 = scalar_lea.vmem %s1, %s278
      %s280 = smul.u32 4, %s18
      %s281 = smul.u32 4, %s18
      %p282 = scmp.lt.s32.totalorder %s281, 7
      %s283 = scalar_select %p282, %s281, 7
      %s284 = smul.addr %s283, 4
      %s285 = scalar_lea.vmem %s5, %s284
      %s286 = smul.u32 4, %s18
      %p287 = scmp.lt.s32.totalorder %s18, 1
      %s288 = scalar_select %p287, %s18, 1
      %s289 = smul.addr %s288, 2
      %s290 = scalar_lea.vmem %s6, %s289
      %v292 = vld [vmem:[%s273] sm:$0xf]
      %v293 = vld [vmem:[%s273 + $0x4] sm:$0xf]
      %v294 = vld [vmem:[%s273 + $0x8] sm:$0xf]
      %v295 = vld [vmem:[%s273 + $0xc] sm:$0xf]
      %v296 = vld [vmem:[%s273 + $0x10] sm:$0xf]
      %v297 = vld [vmem:[%s273 + $0x14] sm:$0xf]
      %v298 = vld [vmem:[%s273 + $0x18] sm:$0xf]
      %v299 = vld [vmem:[%s273 + $0x1c] sm:$0xf]
      %v300 = vmax.bf16 %v292, %v293
      %v301 = vmax.bf16 %v294, %v295
      %v302 = vmax.bf16 %v296, %v297
      %v303 = vmax.bf16 %v298, %v299
      %v304 = vunpack.c.l.bf16 %v300
      %v305 = vunpack.c.l.bf16 %v301
      %v306 = vunpack.c.l.bf16 %v302
      %v307 = vunpack.c.l.bf16 %v303
      %v312 = vcombine.high %v304, %v304
      %v314 = vunpack.c.l.s4 1983009808
      %v315 = vunpack.c.0.s8 %v314
      %v316 = vlaneseq
      %v317 = vshrl.u32 %v316, 7
      %v318 = vsub.s32 %v315, %v317
      %v319 = vrot.slane %v304, %v318
      %v321 = vunpack.c.l.s4 1983009808
      %v322 = vunpack.c.0.s8 %v321
      %v323 = vlaneseq
      %v324 = vshrl.u32 %v323, 7
      %v325 = vsub.s32 %v322, %v324
      %v326 = vrot.slane %v312, %v325
      %v327 = vcombine.high %v319, %v319
      %v328 = vcombine.high %v326, %v326
      %v329 = vcombine.high %v305, %v305
      %v331 = vunpack.c.l.s4 1983009808
      %v332 = vunpack.c.0.s8 %v331
      %v333 = vlaneseq
      %v334 = vshrl.u32 %v333, 7
      %v335 = vsub.s32 %v332, %v334
      %v336 = vrot.slane %v305, %v335
      %v338 = vunpack.c.l.s4 1983009808
      %v339 = vunpack.c.0.s8 %v338
      %v340 = vlaneseq
      %v341 = vshrl.u32 %v340, 7
      %v342 = vsub.s32 %v339, %v341
      %v343 = vrot.slane %v329, %v342
      %v344 = vcombine.high %v336, %v336
      %v345 = vcombine.high %v343, %v343
      %v346 = vcombine.high %v306, %v306
      %v348 = vunpack.c.l.s4 1983009808
      %v349 = vunpack.c.0.s8 %v348
      %v350 = vlaneseq
      %v351 = vshrl.u32 %v350, 7
      %v352 = vsub.s32 %v349, %v351
      %v353 = vrot.slane %v306, %v352
      %v355 = vunpack.c.l.s4 1983009808
      %v356 = vunpack.c.0.s8 %v355
      %v357 = vlaneseq
      %v358 = vshrl.u32 %v357, 7
      %v359 = vsub.s32 %v356, %v358
      %v360 = vrot.slane %v346, %v359
      %v361 = vcombine.high %v353, %v353
      %v362 = vcombine.high %v360, %v360
      %v363 = vcombine.high %v307, %v307
      %v365 = vunpack.c.l.s4 1983009808
      %v366 = vunpack.c.0.s8 %v365
      %v367 = vlaneseq
      %v368 = vshrl.u32 %v367, 7
      %v369 = vsub.s32 %v366, %v368
      %v370 = vrot.slane %v307, %v369
      %v372 = vunpack.c.l.s4 1983009808
      %v373 = vunpack.c.0.s8 %v372
      %v374 = vlaneseq
      %v375 = vshrl.u32 %v374, 7
      %v376 = vsub.s32 %v373, %v375
      %v377 = vrot.slane %v363, %v376
      %v378 = vcombine.high %v370, %v370
      %v379 = vcombine.high %v377, %v377
      %v396 = vrot.slane %v319, 7
      %v397 = vrot.slane %v396, 2
      %v398 = vrot.slane %v327, 7
      %v399 = vrot.slane %v398, 2
      %v400 = vrot.slane %v326, 7
      %v401 = vrot.slane %v400, 2
      %v402 = vrot.slane %v328, 7
      %v403 = vrot.slane %v402, 2
      %v404 = vrot.slane %v336, 7
      %v405 = vrot.slane %v404, 2
      %v406 = vrot.slane %v344, 7
      %v407 = vrot.slane %v406, 2
      %v408 = vrot.slane %v343, 7
      %v409 = vrot.slane %v408, 2
      %v410 = vrot.slane %v345, 7
      %v411 = vrot.slane %v410, 2
      %v412 = vrot.slane %v353, 7
      %v413 = vrot.slane %v412, 2
      %v414 = vrot.slane %v361, 7
      %v415 = vrot.slane %v414, 2
      %v416 = vrot.slane %v360, 7
      %v417 = vrot.slane %v416, 2
      %v418 = vrot.slane %v362, 7
      %v419 = vrot.slane %v418, 2
      %v420 = vrot.slane %v370, 7
      %v421 = vrot.slane %v420, 2
      %v422 = vrot.slane %v378, 7
      %v423 = vrot.slane %v422, 2
      %v424 = vrot.slane %v377, 7
      %v425 = vrot.slane %v424, 2
      %v426 = vrot.slane %v379, 7
      %v427 = vrot.slane %v426, 2
      %v444 = vmax.f32 %v319, %v397
      %v445 = vmax.f32 %v327, %v399
      %v446 = vmax.f32 %v326, %v401
      %v447 = vmax.f32 %v328, %v403
      %v448 = vmax.f32 %v336, %v405
      %v449 = vmax.f32 %v344, %v407
      %v450 = vmax.f32 %v343, %v409
      %v451 = vmax.f32 %v345, %v411
      %v452 = vmax.f32 %v353, %v413
      %v453 = vmax.f32 %v361, %v415
      %v454 = vmax.f32 %v360, %v417
      %v455 = vmax.f32 %v362, %v419
      %v456 = vmax.f32 %v370, %v421
      %v457 = vmax.f32 %v378, %v423
      %v458 = vmax.f32 %v377, %v425
      %v459 = vmax.f32 %v379, %v427
      %v460 = vld [vmem:[%s279] sm:$0xf]
      %v461 = vld [vmem:[%s279 + $0x4] sm:$0xf]
      %v462 = vld [vmem:[%s279 + $0x8] sm:$0xf]
      %v463 = vld [vmem:[%s279 + $0xc] sm:$0xf]
      %v464 = vld [vmem:[%s2] sm:$0x1]
      %v466 = vlaneseq
      %v467 = vshrl.u32 %v466, 7
      %v468 = vsub.s32 0, %v467
      %v469 = vrot.slane %v464, %v468
      %v471 = vcombine.high %v469, %v469
      %v473 = vmul.f32 %v460, %v469
      %v474 = vmul.f32 %v461, %v471
      %v475 = vmul.f32 %v462, %v469
      %v476 = vmul.f32 %v463, %v471
      %v477 = vld [vmem:[%s3] sm:$0x1]
      %v479 = vlaneseq
      %v480 = vshrl.u32 %v479, 7
      %v481 = vsub.s32 0, %v480
      %v482 = vrot.slane %v477, %v481
      %v484 = vcombine.high %v482, %v482
      %v486 = vadd.f32 %v473, %v482
      %v487 = vadd.f32 %v474, %v484
      %v488 = vadd.f32 %v475, %v482
      %v489 = vadd.f32 %v476, %v484
      %v490 = vmax.f32 %v486, 0.0
      %v491 = vmax.f32 %v487, 0.0
      %v492 = vmax.f32 %v488, 0.0
      %v493 = vmax.f32 %v489, 0.0
      %v494 = vpack.c.bf16 %v444, %v444
      %v495 = vpack.c.bf16 %v445, %v445
      %v496 = vpack.c.bf16 %v446, %v446
      %v497 = vpack.c.bf16 %v447, %v447
      %v498 = vpack.c.bf16 %v448, %v448
      %v499 = vpack.c.bf16 %v449, %v449
      %v500 = vpack.c.bf16 %v450, %v450
      %v501 = vpack.c.bf16 %v451, %v451
      %v502 = vpack.c.bf16 %v452, %v452
      %v503 = vpack.c.bf16 %v453, %v453
      %v504 = vpack.c.bf16 %v454, %v454
      %v505 = vpack.c.bf16 %v455, %v455
      %v506 = vpack.c.bf16 %v456, %v456
      %v507 = vpack.c.bf16 %v457, %v457
      %v508 = vpack.c.bf16 %v458, %v458
      %v509 = vpack.c.bf16 %v459, %v459
      %v514 = vcombine.low %v490, %v491
      %v515 = vcombine.low %v492, %v493
      %v518 = vpack.c.bf16 %v515, %v514
      %v535 = vunpack.c.l.b16 %v494
      %v536 = vunpack.c.l.b16 %v495
      %v537 = vunpack.c.l.b16 %v496
      %v538 = vunpack.c.l.b16 %v497
      %v539 = vunpack.c.l.b16 %v498
      %v540 = vunpack.c.l.b16 %v499
      %v541 = vunpack.c.l.b16 %v500
      %v542 = vunpack.c.l.b16 %v501
      %v543 = vunpack.c.l.b16 %v502
      %v544 = vunpack.c.l.b16 %v503
      %v545 = vunpack.c.l.b16 %v504
      %v546 = vunpack.c.l.b16 %v505
      %v547 = vunpack.c.l.b16 %v506
      %v548 = vunpack.c.l.b16 %v507
      %v549 = vunpack.c.l.b16 %v508
      %v550 = vunpack.c.l.b16 %v509
      %v551 = vrot.slane %v536, 7
      %vm552 = vcmask 1041409
      %v553 = vsel %vm552, %v551, %v535
      %v554 = vrot.slane %v537, 6
      %vm555 = vcmask 1042434
      %v556 = vsel %vm555, %v554, %v553
      %v557 = vrot.slane %v538, 5
      %vm558 = vcmask 1043459
      %v559 = vsel %vm558, %v557, %v556
      %v560 = vrot.slane %v539, 4
      %vm561 = vcmask 1044484
      %v562 = vsel %vm561, %v560, %v559
      %v563 = vrot.slane %v540, 3
      %vm564 = vcmask 1045509
      %v565 = vsel %vm564, %v563, %v562
      %v566 = vrot.slane %v541, 2
      %vm567 = vcmask 1046534
      %v568 = vsel %vm567, %v566, %v565
      %v569 = vrot.slane %v542, 1
      %vm570 = vcmask 1047559
      %v571 = vsel %vm570, %v569, %v568
      %v572 = vrot.slane %v544, 7
      %v573 = vsel %vm552, %v572, %v543
      %v574 = vrot.slane %v545, 6
      %v575 = vsel %vm555, %v574, %v573
      %v576 = vrot.slane %v546, 5
      %v577 = vsel %vm558, %v576, %v575
      %v578 = vrot.slane %v547, 4
      %v579 = vsel %vm561, %v578, %v577
      %v580 = vrot.slane %v548, 3
      %v581 = vsel %vm564, %v580, %v579
      %v582 = vrot.slane %v549, 2
      %v583 = vsel %vm567, %v582, %v581
      %v584 = vrot.slane %v550, 1
      %v585 = vsel %vm570, %v584, %v583
      %v586 = vpack.c.b16 %v585, %v571
      %v588 = vld [vmem:[%s4] sm:$0xf]
      %v589 = vld [vmem:[%s4 + $0x4] sm:$0xf]
      %v590 = vld [vmem:[%s4 + $0x8] sm:$0xf]
      %v591 = vld [vmem:[%s4 + $0xc] sm:$0xf]
      %v592 = vld [vmem:[%s4 + $0x10] sm:$0xf]
      %v593 = vld [vmem:[%s4 + $0x14] sm:$0xf]
      %v594 = vld [vmem:[%s4 + $0x18] sm:$0xf]
      %v595 = vld [vmem:[%s4 + $0x1c] sm:$0xf]
      %v596 = vld [vmem:[%s4 + $0x20] sm:$0xf]
      %v597 = vld [vmem:[%s4 + $0x24] sm:$0xf]
      %v598 = vld [vmem:[%s4 + $0x28] sm:$0xf]
      %v599 = vld [vmem:[%s4 + $0x2c] sm:$0xf]
      %v600 = vld [vmem:[%s4 + $0x30] sm:$0xf]
      %v601 = vld [vmem:[%s4 + $0x34] sm:$0xf]
      %v602 = vld [vmem:[%s4 + $0x38] sm:$0xf]
      %v603 = vld [vmem:[%s4 + $0x3c] sm:$0xf]
      %v604 = vld [vmem:[%s4 + $0x40] sm:$0xf]
      %v605 = vld [vmem:[%s4 + $0x44] sm:$0xf]
      %v606 = vld [vmem:[%s4 + $0x48] sm:$0xf]
      %v607 = vld [vmem:[%s4 + $0x4c] sm:$0xf]
      %v608 = vld [vmem:[%s4 + $0x50] sm:$0xf]
      %v609 = vld [vmem:[%s4 + $0x54] sm:$0xf]
      %v610 = vld [vmem:[%s4 + $0x58] sm:$0xf]
      %v611 = vld [vmem:[%s4 + $0x5c] sm:$0xf]
      %v612 = vld [vmem:[%s4 + $0x60] sm:$0xf]
      %v613 = vld [vmem:[%s4 + $0x64] sm:$0xf]
      %v614 = vld [vmem:[%s4 + $0x68] sm:$0xf]
      %v615 = vld [vmem:[%s4 + $0x6c] sm:$0xf]
      %v616 = vld [vmem:[%s4 + $0x70] sm:$0xf]
      %v617 = vld [vmem:[%s4 + $0x74] sm:$0xf]
      %v618 = vld [vmem:[%s4 + $0x78] sm:$0xf]
      %v619 = vld [vmem:[%s4 + $0x7c] sm:$0xf]
      %v652 = vunpack.c.l.b16 %v588
      %v653 = vunpack.c.l.b16 %v589
      %v654 = vunpack.c.l.b16 %v590
      %v655 = vunpack.c.l.b16 %v591
      %v656 = vunpack.c.l.b16 %v592
      %v657 = vunpack.c.l.b16 %v593
      %v658 = vunpack.c.l.b16 %v594
      %v659 = vunpack.c.l.b16 %v595
      %v660 = vunpack.c.l.b16 %v596
      %v661 = vunpack.c.l.b16 %v597
      %v662 = vunpack.c.l.b16 %v598
      %v663 = vunpack.c.l.b16 %v599
      %v664 = vunpack.c.l.b16 %v600
      %v665 = vunpack.c.l.b16 %v601
      %v666 = vunpack.c.l.b16 %v602
      %v667 = vunpack.c.l.b16 %v603
      %v668 = vunpack.c.l.b16 %v604
      %v669 = vunpack.c.l.b16 %v605
      %v670 = vunpack.c.l.b16 %v606
      %v671 = vunpack.c.l.b16 %v607
      %v672 = vunpack.c.l.b16 %v608
      %v673 = vunpack.c.l.b16 %v609
      %v674 = vunpack.c.l.b16 %v610
      %v675 = vunpack.c.l.b16 %v611
      %v676 = vunpack.c.l.b16 %v612
      %v677 = vunpack.c.l.b16 %v613
      %v678 = vunpack.c.l.b16 %v614
      %v679 = vunpack.c.l.b16 %v615
      %v680 = vunpack.c.l.b16 %v616
      %v681 = vunpack.c.l.b16 %v617
      %v682 = vunpack.c.l.b16 %v618
      %v683 = vunpack.c.l.b16 %v619
      %v684 = vpack.c.b16 %v653, %v652
      %v685 = vpack.c.b16 %v655, %v654
      %v686 = vpack.c.b16 %v657, %v656
      %v687 = vpack.c.b16 %v659, %v658
      %v688 = vpack.c.b16 %v661, %v660
      %v689 = vpack.c.b16 %v663, %v662
      %v690 = vpack.c.b16 %v665, %v664
      %v691 = vpack.c.b16 %v667, %v666
      %v692 = vpack.c.b16 %v669, %v668
      %v693 = vpack.c.b16 %v671, %v670
      %v694 = vpack.c.b16 %v673, %v672
      %v695 = vpack.c.b16 %v675, %v674
      %v696 = vpack.c.b16 %v677, %v676
      %v697 = vpack.c.b16 %v679, %v678
      %v698 = vpack.c.b16 %v681, %v680
      %v699 = vpack.c.b16 %v683, %v682
      %716 = vmatprep.subr.bf16.mxu0 0
      %717 = vmatpush1.bf16.msra.mxu0 %v684
      %718 = vmatprep.subr.bf16.mxu0 0
      %719 = vmatpush1.bf16.msra.mxu0 %v685
      %720 = vmatprep.subr.bf16.mxu0 0
      %721 = vmatpush1.bf16.msra.mxu0 %v686
      %722 = vmatprep.subr.bf16.mxu0 0
      %723 = vmatpush1.bf16.msra.mxu0 %v687
      %724 = vmatprep.subr.bf16.mxu0 0
      %725 = vmatpush1.bf16.msra.mxu0 %v688
      %726 = vmatprep.subr.bf16.mxu0 0
      %727 = vmatpush1.bf16.msra.mxu0 %v689
      %728 = vmatprep.subr.bf16.mxu0 0
      %729 = vmatpush1.bf16.msra.mxu0 %v690
      %730 = vmatprep.subr.bf16.mxu0 0
      %731 = vmatpush1.bf16.msra.mxu0 %v691
      %732 = vmatprep.subr.bf16.mxu0 0
      %733 = vmatpush1.bf16.msra.mxu0 %v692
      %734 = vmatprep.subr.bf16.mxu0 0
      %735 = vmatpush1.bf16.msra.mxu0 %v693
      %736 = vmatprep.subr.bf16.mxu0 0
      %737 = vmatpush1.bf16.msra.mxu0 %v694
      %738 = vmatprep.subr.bf16.mxu0 0
      %739 = vmatpush1.bf16.msra.mxu0 %v695
      %740 = vmatprep.subr.bf16.mxu0 0
      %741 = vmatpush1.bf16.msra.mxu0 %v696
      %742 = vmatprep.subr.bf16.mxu0 0
      %743 = vmatpush1.bf16.msra.mxu0 %v697
      %744 = vmatprep.subr.bf16.mxu0 0
      %745 = vmatpush1.bf16.msra.mxu0 %v698
      %746 = vmatprep.subr.bf16.mxu0 0
      %747 = vmatpush1.bf16.msra.mxu0 %v699
      %748 = vmatprep.mubr.bf16.mxu0 %v518
      %749 = vmatmul.mubr.bf16.gmra.mrb[0].mxu0 %v586
      %v750 = vpop.f32.mrb[0].mxu0
      %v751 = vadd.f32 0.0, %v750
      %v752 = vpop.f32.mrb[0].mxu0
      %v753 = vpop.f32.mrb[0].mxu0
      %v754 = vadd.f32 0.0, %v753
      %v755 = vpop.f32.mrb[0].mxu0
      %756 = vdwg.mxu0
      %v759 = vcombine.high %v751, %v751
      %v760 = vcombine.high %v754, %v754
      %763 = vst [vmem:[%s285] sm:$0xf] %v751
      %764 = vst [vmem:[%s285 + $0x4] sm:$0xf] %v759
      %765 = vst [vmem:[%s285 + $0x8] sm:$0xf] %v754
      %766 = vst [vmem:[%s285 + $0xc] sm:$0xf] %v760
      %vm767 = vcmask 130048
      %v769 = vsel %vm767, 1.0, 0
      %771 = vmatprep.subr.mxu0 0.0
      %772 = vmatpush1.msra.mxu0 %v751
      %773 = vmatprep.subr.mxu0 0.0
      %774 = vmatpush1.msra.mxu0 %v754
      %775 = vmatprep.subr.mxu0 0.0
      %776 = vmatpush1.msra.mxu0 0.0
      %777 = vmatprep.subr.mxu0 0.0
      %778 = vmatpush1.msra.mxu0 0.0
      %779 = vmatprep.subr.mxu0 0.0
      %780 = vmatpush1.msra.mxu0 0.0
      %781 = vmatprep.subr.mxu0 0.0
      %782 = vmatpush1.msra.mxu0 0.0
      %783 = vmatprep.subr.mxu0 0.0
      %784 = vmatpush1.msra.mxu0 0.0
      %785 = vmatprep.subr.mxu0 0.0
      %786 = vmatpush1.msra.mxu0 0.0
      %787 = vmatprep.subr.mxu0 0.0
      %788 = vmatpush1.msra.mxu0 0.0
      %789 = vmatprep.subr.mxu0 0.0
      %790 = vmatpush1.msra.mxu0 0.0
      %791 = vmatprep.subr.mxu0 0.0
      %792 = vmatpush1.msra.mxu0 0.0
      %793 = vmatprep.subr.mxu0 0.0
      %794 = vmatpush1.msra.mxu0 0.0
      %795 = vmatprep.subr.mxu0 0.0
      %796 = vmatpush1.msra.mxu0 0.0
      %797 = vmatprep.subr.mxu0 0.0
      %798 = vmatpush1.msra.mxu0 0.0
      %799 = vmatprep.subr.mxu0 0.0
      %800 = vmatpush1.msra.mxu0 0.0
      %801 = vmatprep.subr.mxu0 0.0
      %802 = vmatpush1.msra.mxu0 0.0
      %803 = vmatprep.subr.mxu0 0.0
      %804 = vmatpush1.msra.mxu0 0.0
      %805 = vmatprep.subr.mxu0 0.0
      %806 = vmatpush1.msra.mxu0 0.0
      %807 = vmatprep.subr.mxu0 0.0
      %808 = vmatpush1.msra.mxu0 0.0
      %809 = vmatprep.subr.mxu0 0.0
      %810 = vmatpush1.msra.mxu0 0.0
      %811 = vmatprep.subr.mxu0 0.0
      %812 = vmatpush1.msra.mxu0 0.0
      %813 = vmatprep.subr.mxu0 0.0
      %814 = vmatpush1.msra.mxu0 0.0
      %815 = vmatprep.subr.mxu0 0.0
      %816 = vmatpush1.msra.mxu0 0.0
      %817 = vmatprep.subr.mxu0 0.0
      %818 = vmatpush1.msra.mxu0 0.0
      %819 = vmatprep.subr.mxu0 0.0
      %820 = vmatpush1.msra.mxu0 0.0
      %821 = vmatprep.subr.mxu0 0.0
      %822 = vmatpush1.msra.mxu0 0.0
      %823 = vmatprep.subr.mxu0 0.0
      %824 = vmatpush1.msra.mxu0 0.0
      %825 = vmatprep.subr.mxu0 0.0
      %826 = vmatpush1.msra.mxu0 0.0
      %827 = vmatprep.subr.mxu0 0.0
      %828 = vmatpush1.msra.mxu0 0.0
      %829 = vmatprep.subr.mxu0 0.0
      %830 = vmatpush1.msra.mxu0 0.0
      %831 = vmatprep.subr.mxu0 0.0
      %832 = vmatpush1.msra.mxu0 0.0
      %833 = vmatprep.subr.mxu0 0.0
      %834 = vmatpush1.msra.mxu0 0.0
      %835 = vmatprep.mubr.f32.mxu0 0.0
      %836 = vmatmul.mubr.f32.gmra.mrb[0].mxu0 %v769
      %v837 = vpop.f32.mrb[0].mxu0
      %v838 = vadd.f32 0.0, %v837
      %v839 = vpop.f32.mrb[0].mxu0
      %840 = vdwg.mxu0
      %v841 = vmul.f32 %v751, %v751
      %v842 = vmul.f32 %v754, %v754
      %843 = vmatprep.subr.mxu0 0.0
      %844 = vmatpush1.msra.mxu0 %v841
      %845 = vmatprep.subr.mxu0 0.0
      %846 = vmatpush1.msra.mxu0 %v842
      %847 = vmatprep.subr.mxu0 0.0
      %848 = vmatpush1.msra.mxu0 0.0
      %849 = vmatprep.subr.mxu0 0.0
      %850 = vmatpush1.msra.mxu0 0.0
      %851 = vmatprep.subr.mxu0 0.0
      %852 = vmatpush1.msra.mxu0 0.0
      %853 = vmatprep.subr.mxu0 0.0
      %854 = vmatpush1.msra.mxu0 0.0
      %855 = vmatprep.subr.mxu0 0.0
      %856 = vmatpush1.msra.mxu0 0.0
      %857 = vmatprep.subr.mxu0 0.0
      %858 = vmatpush1.msra.mxu0 0.0
      %859 = vmatprep.subr.mxu0 0.0
      %860 = vmatpush1.msra.mxu0 0.0
      %861 = vmatprep.subr.mxu0 0.0
      %862 = vmatpush1.msra.mxu0 0.0
      %863 = vmatprep.subr.mxu0 0.0
      %864 = vmatpush1.msra.mxu0 0.0
      %865 = vmatprep.subr.mxu0 0.0
      %866 = vmatpush1.msra.mxu0 0.0
      %867 = vmatprep.subr.mxu0 0.0
      %868 = vmatpush1.msra.mxu0 0.0
      %869 = vmatprep.subr.mxu0 0.0
      %870 = vmatpush1.msra.mxu0 0.0
      %871 = vmatprep.subr.mxu0 0.0
      %872 = vmatpush1.msra.mxu0 0.0
      %873 = vmatprep.subr.mxu0 0.0
      %874 = vmatpush1.msra.mxu0 0.0
      %875 = vmatprep.subr.mxu0 0.0
      %876 = vmatpush1.msra.mxu0 0.0
      %877 = vmatprep.subr.mxu0 0.0
      %878 = vmatpush1.msra.mxu0 0.0
      %879 = vmatprep.subr.mxu0 0.0
      %880 = vmatpush1.msra.mxu0 0.0
      %881 = vmatprep.subr.mxu0 0.0
      %882 = vmatpush1.msra.mxu0 0.0
      %883 = vmatprep.subr.mxu0 0.0
      %884 = vmatpush1.msra.mxu0 0.0
      %885 = vmatprep.subr.mxu0 0.0
      %886 = vmatpush1.msra.mxu0 0.0
      %887 = vmatprep.subr.mxu0 0.0
      %888 = vmatpush1.msra.mxu0 0.0
      %889 = vmatprep.subr.mxu0 0.0
      %890 = vmatpush1.msra.mxu0 0.0
      %891 = vmatprep.subr.mxu0 0.0
      %892 = vmatpush1.msra.mxu0 0.0
      %893 = vmatprep.subr.mxu0 0.0
      %894 = vmatpush1.msra.mxu0 0.0
      %895 = vmatprep.subr.mxu0 0.0
      %896 = vmatpush1.msra.mxu0 0.0
      %897 = vmatprep.subr.mxu0 0.0
      %898 = vmatpush1.msra.mxu0 0.0
      %899 = vmatprep.subr.mxu0 0.0
      %900 = vmatpush1.msra.mxu0 0.0
      %901 = vmatprep.subr.mxu0 0.0
      %902 = vmatpush1.msra.mxu0 0.0
      %903 = vmatprep.subr.mxu0 0.0
      %904 = vmatpush1.msra.mxu0 0.0
      %905 = vmatprep.subr.mxu0 0.0
      %906 = vmatpush1.msra.mxu0 0.0
      %907 = vmatprep.mubr.f32.mxu0 0.0
      %908 = vmatmul.mubr.f32.gmra.mrb[0].mxu0 %v769
      %v909 = vpop.f32.mrb[0].mxu0
      %v910 = vadd.f32 0.0, %v909
      %v911 = vpop.f32.mrb[0].mxu0
      %912 = vdwg.mxu0
      %v914 = vrot.slane %v910, 7
      %vm916 = vcmask 1040384
      %v917 = vsel %vm916, %v838, %v914
      %918 = vst [vmem:[%s290] sm:$0x3] %v917
      %s919 = smul.u32 4, %s18
      %p920 = scmp.lt.s32.totalorder %s919, 7
      %s921 = scalar_select %p920, %s919, 7
      %s922 = smul.addr %s921, 4
      %s923 = scalar_lea.vmem %s5, %s922
      %p924 = scmp.lt.s32.totalorder %s18, 1
      %s925 = scalar_select %p924, %s18, 1
      %s926 = smul.addr %s925, 2
      %s927 = scalar_lea.vmem %s6, %s926
      // Predicated region
      $region41: #{stem_block_forward.10} parent=39 // pred_check
        %p928 = pneg %p151
      $region42: #{stem_block_forward.10} parent=39 // pred_check_branch
        %930 = sbr.rel (%p928) target = $region44
      $region43: #{stem_block_forward.10} parent=39 // pred_region
        %s931 = smul.u32 4, %s18
      $region44: #{stem_block_forward.10} parent=39 // pred_fallthru
        _
      // Predicated region
      $region45: #{stem_block_forward.10} parent=39 // pred_check
        %p932 = pneg %p177
      $region46: #{stem_block_forward.10} parent=39 // pred_check_branch
        %934 = sbr.rel (%p932) target = $region48
      $region47: #{stem_block_forward.10} parent=39 // pred_region
        _
      $region48: #{stem_block_forward.10} parent=39 // pred_fallthru
        _
    $region40: #{stem_block_forward.10} parent=5 // pred_fallthru
      _
    %p935 = scmp.le.s32.totalorder 2, %s13
    // Predicated region
    $region49: #{stem_block_forward.10} parent=5 // pred_check
      %p936 = pneg %p935
    $region50: #{stem_block_forward.10} parent=5 // pred_check_branch
      %938 = sbr.rel (%p936) target = $region52
    $region51: #{stem_block_forward.10} parent=5 // pred_region
      %s939 = ssub.s32 %s13, 2
      // Predicated region
      $region53: #{stem_block_forward.10} parent=51 // pred_check
        %p940 = pneg %p157
      $region54: #{stem_block_forward.10} parent=51 // pred_check_branch
        %942 = sbr.rel (%p940) target = $region56
      $region55: #{stem_block_forward.10} parent=51 // pred_region
        %s943 = smul.u32 4, %s19
        %p944 = scmp.lt.s32.totalorder %s943, 7
        %s945 = scalar_select %p944, %s943, 7
        %s946 = smul.addr %s945, 4
        %s947 = scalar_lea.vmem %s5, %s946
      $region56: #{stem_block_forward.10} parent=51 // pred_fallthru
        _
      // Predicated region
      $region57: #{stem_block_forward.10} parent=51 // pred_check
        %p948 = pneg %p183
      $region58: #{stem_block_forward.10} parent=51 // pred_check_branch
        %950 = sbr.rel (%p948) target = $region60
      $region59: #{stem_block_forward.10} parent=51 // pred_region
        %p951 = scmp.lt.s32.totalorder %s19, 1
        %s952 = scalar_select %p951, %s19, 1
        %s953 = smul.addr %s952, 2
        %s954 = scalar_lea.vmem %s6, %s953
      $region60: #{stem_block_forward.10} parent=51 // pred_fallthru
        _
    $region52: #{stem_block_forward.10} parent=5 // pred_fallthru
      _
  $region6: #{stem_block_forward.10} parent=0 // loop_footer
    %s17 = sadd.s32 1, %s13
  $region7: #{stem_block_forward.10} parent=0 // loop_footer_branch
    %12 = sbr.rel target = $region3
  $region8: #{stem_block_forward.10} parent=0 // loop_exit
    _

</llo_original>
